<compile_context>
chip_gen: v7x
topology: tpu7x:2x2x1
jax: 0.10.0
libtpu: 0.0.40
codegen_flags: <defaults>
</compile_context>

<pallas_src>
import jax
import jax.numpy as jnp
from jax.experimental import pallas as pl
from jax.experimental.pallas import tpu as pltpu

SUBLANE = 8    # f32 sublane count
LANE = 128     # lane count


def _round_up(n, m):
    return ((n + m - 1) // m) * m


# ---------------------------------------------------------------------------
# Fused 2-layer LSTM kernel: single invocation, in-kernel time loop.
# ---------------------------------------------------------------------------
def _lstm2_kernel(gx1_ref, w1hh_ref, wcat2_ref, b2_ref, seq_ref, hn_ref):
    """Two stacked LSTM layers over T steps (gate order [i, f, g, o]).

    gx1_ref  : (T, Bp, 4*H1p)   precomputed x_t @ W1_ih^T + b1  (time-major)
    w1hh_ref : (H1p, 4*H1p)     layer-1 recurrent weights (transposed, padded)
    wcat2_ref: (H1p+H2p, 4*H2p) layer-2 stacked [W_ih^T ; W_hh^T]
    b2_ref   : (1, 4*H2p)       layer-2 fused bias (b_ih + b_hh)
    seq_ref  : (T, Bp, H2p)     layer-2 hidden sequence (output)
    hn_ref   : (Bp, H2p)        final layer-2 hidden state (output)
    """
    T, Bp, G1 = gx1_ref.shape
    H1p = G1 // 4
    H2p = hn_ref.shape[1]

    # Loop-invariant loads / broadcasts hoisted out of the time loop.
    w1hh = w1hh_ref[...]
    wcat2 = wcat2_ref[...]
    b2 = jnp.broadcast_to(b2_ref[...], (Bp, 4 * H2p))

    def sig(z):
        # sigmoid via tanh identity: one EUP push instead of exp + reciprocal.
        return 0.5 * jnp.tanh(0.5 * z) + 0.5

    def cell(gates, c_prev, h):
        i = sig(gates[:, 0 * h:1 * h])
        f = sig(gates[:, 1 * h:2 * h])
        g = jnp.tanh(gates[:, 2 * h:3 * h])
        o = sig(gates[:, 3 * h:4 * h])
        c_new = f * c_prev + i * g
        h_new = o * jnp.tanh(c_new)
        return h_new, c_new

    def step(t, carry):
        h1, c1, h2, c2 = carry
        # Layer 1: input projection was precomputed -> one K=H1p matmul/step.
        g1 = gx1_ref[t] + jnp.dot(h1, w1hh, preferred_element_type=jnp.float32)
        h1, c1 = cell(g1, c1, H1p)
        # Layer 2: single fused matmul over concatenated [x2_t ; h2_{t-1}].
        cat = jnp.concatenate([h1, h2], axis=1)              # (Bp, H1p+H2p)
        g2 = jnp.dot(cat, wcat2, preferred_element_type=jnp.float32) + b2
        h2, c2 = cell(g2, c2, H2p)
        seq_ref[t] = h2.astype(seq_ref.dtype)                # VMEM store
        return (h1, c1, h2, c2)

    init = (jnp.zeros((Bp, H1p), jnp.float32),
            jnp.zeros((Bp, H1p), jnp.float32),
            jnp.zeros((Bp, H2p), jnp.float32),
            jnp.zeros((Bp, H2p), jnp.float32))
    _, _, h2_fin, _ = jax.lax.fori_loop(0, T, step, init, unroll=True)
    hn_ref[...] = h2_fin.astype(hn_ref.dtype)


def _vmem_spec():
    return pl.BlockSpec(memory_space=pltpu.MemorySpace.VMEM)


def lstm2_stack_forward(prep, x_btd):
    """Two stacked LSTM layers (batch_first input). Returns (h2_seq, h2_final)."""
    B, T, _ = x_btd.shape
    h1, h2, h1p, h2p = prep["dims"]
    Bp = _round_up(B, SUBLANE)

    x_tbd = jnp.transpose(x_btd, (1, 0, 2)).astype(jnp.float32)    # (T, B, Din)
    # Layer-1 input projection (+ fused bias) for ALL steps as one matmul —
    # off the serial critical path; the kernel never touches the raw input.
    gx1 = jnp.einsum("tbd,dg->tbg", x_tbd, prep["w1ih_t"]) + prep["b1"]
    gx1 = jnp.pad(gx1, ((0, 0), (0, Bp - B), (0, 0)))              # (T, Bp, 4*h1p)

    seq_p, hn_p = pl.pallas_call(
        _lstm2_kernel,
        out_shape=(jax.ShapeDtypeStruct((T, Bp, h2p), jnp.float32),
                   jax.ShapeDtypeStruct((Bp, h2p), jnp.float32)),
        in_specs=[_vmem_spec(), _vmem_spec(), _vmem_spec(), _vmem_spec()],
        out_specs=(_vmem_spec(), _vmem_spec()),
    )(gx1, prep["w1hh_t"], prep["wcat2"], prep["b2"])

    seq = jnp.transpose(seq_p[:, :B, :h2], (1, 0, 2))              # (B, T, h2)
    return seq, hn_p[:B, :h2]


# ---------------------------------------------------------------------------
# Parameters: raw (PyTorch-layout) + kernel-prepped (transposed, fused, padded)
# ---------------------------------------------------------------------------
def _init_lstm_raw(key, d_in, d_hid):
    k = 1.0 / (d_hid ** 0.5)
    ks = jax.random.split(key, 4)

    def u(kk, shape):
        return jax.random.uniform(kk, shape, jnp.float32, -k, k)

    return dict(w_ih=u(ks[0], (4 * d_hid, d_in)),
                w_hh=u(ks[1], (4 * d_hid, d_hid)),
                b_ih=u(ks[2], (4 * d_hid,)),
                b_hh=u(ks[3], (4 * d_hid,)))


def _pad_gate_cols(a, h, hp):
    """Zero-pad the gate axis (last, size 4*h) gate-wise to 4*hp."""
    lead = a.shape[:-1]
    a4 = a.reshape(lead + (4, h))
    pad = [(0, 0)] * len(lead) + [(0, 0), (0, hp - h)]
    return jnp.pad(a4, pad).reshape(lead + (4 * hp,))


def _pad_rows(a, rp):
    return jnp.pad(a, ((0, rp - a.shape[0]), (0, 0)))


def _prep_stack(raw1, raw2):
    """(8,128)-aligned, kernel-friendly parameters for a 2-layer LSTM stack."""
    h1 = raw1["w_hh"].shape[1]
    h2 = raw2["w_hh"].shape[1]
    h1p, h2p = _round_up(h1, LANE), _round_up(h2, LANE)
    # Layer 1: W_ih^T is only used by the wrapper-side projection.
    w1ih_t = _pad_gate_cols(raw1["w_ih"].T, h1, h1p)                    # (Din, 4*h1p)
    b1 = _pad_gate_cols(raw1["b_ih"] + raw1["b_hh"], h1, h1p)           # (4*h1p,)
    w1hh_t = _pad_rows(_pad_gate_cols(raw1["w_hh"].T, h1, h1p), h1p)    # (h1p, 4*h1p)
    # Layer 2: stack [W_ih^T ; W_hh^T] -> single K=(h1p+h2p) matmul per step.
    w2ih_t = _pad_rows(_pad_gate_cols(raw2["w_ih"].T, h2, h2p), h1p)    # (h1p, 4*h2p)
    w2hh_t = _pad_rows(_pad_gate_cols(raw2["w_hh"].T, h2, h2p), h2p)    # (h2p, 4*h2p)
    wcat2 = jnp.concatenate([w2ih_t, w2hh_t], axis=0)                   # (h1p+h2p, 4*h2p)
    b2 = _pad_gate_cols(raw2["b_ih"] + raw2["b_hh"], h2, h2p)[None, :]  # (1, 4*h2p)
    return dict(w1ih_t=w1ih_t, b1=b1, w1hh_t=w1hh_t, wcat2=wcat2, b2=b2,
                dims=(h1, h2, h1p, h2p))


def init_autoencoder_params(key, n_features, embedding_dim):
    e = embedding_dim
    hid = 2 * e
    k1, k2, k3, k4 = jax.random.split(key, 4)
    raw = dict(enc1=_init_lstm_raw(k1, n_features, hid),
               enc2=_init_lstm_raw(k2, hid, e),
               dec1=_init_lstm_raw(k3, e, e),
               dec2=_init_lstm_raw(k4, e, e))
    prepped = dict(enc=_prep_stack(raw["enc1"], raw["enc2"]),
                   dec=_prep_stack(raw["dec1"], raw["dec2"]),
                   embedding_dim=e)
    return raw, prepped


# ---------------------------------------------------------------------------
# RecurrentAutoencoder forward (Pallas) — matches the PyTorch module semantics
# ---------------------------------------------------------------------------
def autoencoder_forward(prepped, x):
    bs, seq_len, _ = x.shape
    e = prepped["embedding_dim"]
    # Encoder: fused 2-layer LSTM stack; only the final hidden state is used.
    _, hn = lstm2_stack_forward(prepped["enc"], x)                     # (bs, e)
    # Decoder input: torch's  x.repeat(seq_len, 1).reshape(bs, seq_len, e)
    # quirk (interleaves batch rows for bs > 1) — reproduced faithfully.
    x_rep = jnp.tile(hn, (seq_len, 1)).reshape(bs, seq_len, e)
    dec_seq, _ = lstm2_stack_forward(prepped["dec"], x_rep)            # (bs, T, e)
    return hn, dec_seq


# ---------------------------------------------------------------------------
# Pure-JAX reference (lax.scan, unpadded, exp-based sigmoid) for correctness
# ---------------------------------------------------------------------------
def _lstm_ref(x_btd, w_ih, w_hh, b_ih, b_hh):
    B, T, _ = x_btd.shape
    H = w_hh.shape[1]

    def step(carry, x_t):
        h, c = carry
        g = x_t @ w_ih.T + h @ w_hh.T + b_ih + b_hh
        i = jax.nn.sigmoid(g[:, :H])
        f = jax.nn.sigmoid(g[:, H:2 * H])
        gg = jnp.tanh(g[:, 2 * H:3 * H])
        o = jax.nn.sigmoid(g[:, 3 * H:])
        c = f * c + i * gg
        h = o * jnp.tanh(c)
        return (h, c), h

    init = (jnp.zeros((B, H), jnp.float32), jnp.zeros((B, H), jnp.float32))
    (h_fin, _), ys = jax.lax.scan(step, init, jnp.transpose(x_btd, (1, 0, 2)))
    return jnp.transpose(ys, (1, 0, 2)), h_fin


def autoencoder_ref(raw, x):
    bs, seq_len, _ = x.shape
    e = raw["enc2"]["w_hh"].shape[1]
    h1_seq, _ = _lstm_ref(x, **raw["enc1"])
    _, hn = _lstm_ref(h1_seq, **raw["enc2"])
    x_rep = jnp.tile(hn, (seq_len, 1)).reshape(bs, seq_len, e)
    d1_seq, _ = _lstm_ref(x_rep, **raw["dec1"])
    dec_seq, _ = _lstm_ref(d1_seq, **raw["dec2"])
    return hn, dec_seq


if __name__ == "__main__":
    n_features = 4
    embedding_dim = 32
    batch = 2
    seq_len = 8

    key = jax.random.PRNGKey(0)
    k_x, k_p = jax.random.split(key)
    x = jax.random.normal(k_x, (batch, seq_len, n_features), dtype=jnp.float32)
    raw, prepped = init_autoencoder_params(k_p, n_features, embedding_dim)

    hn, dec = autoencoder_forward(prepped, x)
    hn, dec = jax.block_until_ready((hn, dec))
    assert hn.shape == (batch, embedding_dim)
    assert dec.shape == (batch, seq_len, embedding_dim)

    hn_ref, dec_ref = jax.block_until_ready(autoencoder_ref(raw, x))
    assert jnp.allclose(hn, hn_ref, atol=2e-4, rtol=2e-4), "hn mismatch vs reference"
    assert jnp.allclose(dec, dec_ref, atol=2e-4, rtol=2e-4), "decoded_x mismatch vs reference"

    print("KERNEL_OK")
</pallas_src>

<mosaic_0001>
module attributes {stable_mosaic.version = 11 : i64} {
  func.func @_lstm2_kernel(%arg0: memref<8x8x512xf32, #tpu.memory_space<vmem>>, %arg1: memref<128x512xf32, #tpu.memory_space<vmem>>, %arg2: memref<256x512xf32, #tpu.memory_space<vmem>>, %arg3: memref<1x512xf32, #tpu.memory_space<vmem>>, %arg4: memref<8x8x128xf32, #tpu.memory_space<vmem>>, %arg5: memref<8x128xf32, #tpu.memory_space<vmem>>) attributes {dimension_semantics = [], scalar_prefetch = 0 : i64, scratch_operands = 0 : i64, tpu.core_type = #tpu.core_type<tc>} {
    %c0 = arith.constant 0 : index
    %c0_0 = arith.constant 0 : index
    %0 = vector.load %arg1[%c0, %c0_0] : memref<128x512xf32, #tpu.memory_space<vmem>>, vector<128x512xf32>
    %c0_1 = arith.constant 0 : index
    %c0_2 = arith.constant 0 : index
    %1 = vector.load %arg2[%c0_1, %c0_2] : memref<256x512xf32, #tpu.memory_space<vmem>>, vector<256x512xf32>
    %c0_3 = arith.constant 0 : index
    %c0_4 = arith.constant 0 : index
    %2 = vector.load %arg3[%c0_3, %c0_4] : memref<1x512xf32, #tpu.memory_space<vmem>>, vector<1x512xf32>
    %3 = vector.shape_cast %2 : vector<1x512xf32> to vector<1x512xf32>
    %4 = vector.broadcast %3 : vector<1x512xf32> to vector<8x512xf32>
    %cst = arith.constant 0.000000e+00 : f32
    %5 = vector.broadcast %cst : f32 to vector<8x128xf32>
    %cst_5 = arith.constant 0.000000e+00 : f32
    %6 = vector.broadcast %cst_5 : f32 to vector<8x128xf32>
    %cst_6 = arith.constant 0.000000e+00 : f32
    %7 = vector.broadcast %cst_6 : f32 to vector<8x128xf32>
    %cst_7 = arith.constant 0.000000e+00 : f32
    %8 = vector.broadcast %cst_7 : f32 to vector<8x128xf32>
    %c0_i32 = arith.constant 0 : i32
    %9 = arith.index_cast %c0_i32 : i32 to index
    %c0_8 = arith.constant 0 : index
    %c0_9 = arith.constant 0 : index
    %10 = vector.load %arg0[%9, %c0_8, %c0_9] : memref<8x8x512xf32, #tpu.memory_space<vmem>>, vector<1x8x512xf32>
    %11 = vector.shape_cast %10 : vector<1x8x512xf32> to vector<8x512xf32>
    %cst_10 = arith.constant dense<0.000000e+00> : vector<8x512xf32>
    %12 = tpu.matmul %5, %0, %cst_10 {dimension_numbers = #tpu.dot_dimension_numbers<[1], [0], [0], [1], [0, 0, 1, 1], [], []>} : vector<8x128xf32>, vector<128x512xf32>, vector<8x512xf32> -> vector<8x512xf32>
    %13 = arith.addf %11, %12 : vector<8x512xf32>
    %14 = vector.extract_strided_slice %13 {offsets = [0, 0], sizes = [8, 128], strides = [1, 1]} : vector<8x512xf32> to vector<8x128xf32>
    %cst_11 = arith.constant 5.000000e-01 : f32
    %15 = vector.broadcast %cst_11 : f32 to vector<8x128xf32>
    %16 = arith.mulf %15, %14 : vector<8x128xf32>
    %17 = math.tanh %16 : vector<8x128xf32>
    %cst_12 = arith.constant 5.000000e-01 : f32
    %18 = vector.broadcast %cst_12 : f32 to vector<8x128xf32>
    %19 = arith.mulf %18, %17 : vector<8x128xf32>
    %cst_13 = arith.constant 5.000000e-01 : f32
    %20 = vector.broadcast %cst_13 : f32 to vector<8x128xf32>
    %21 = arith.addf %19, %20 : vector<8x128xf32>
    %22 = vector.extract_strided_slice %13 {offsets = [0, 128], sizes = [8, 128], strides = [1, 1]} : vector<8x512xf32> to vector<8x128xf32>
    %cst_14 = arith.constant 5.000000e-01 : f32
    %23 = vector.broadcast %cst_14 : f32 to vector<8x128xf32>
    %24 = arith.mulf %23, %22 : vector<8x128xf32>
    %25 = math.tanh %24 : vector<8x128xf32>
    %cst_15 = arith.constant 5.000000e-01 : f32
    %26 = vector.broadcast %cst_15 : f32 to vector<8x128xf32>
    %27 = arith.mulf %26, %25 : vector<8x128xf32>
    %cst_16 = arith.constant 5.000000e-01 : f32
    %28 = vector.broadcast %cst_16 : f32 to vector<8x128xf32>
    %29 = arith.addf %27, %28 : vector<8x128xf32>
    %30 = vector.extract_strided_slice %13 {offsets = [0, 256], sizes = [8, 128], strides = [1, 1]} : vector<8x512xf32> to vector<8x128xf32>
    %31 = math.tanh %30 : vector<8x128xf32>
    %32 = vector.extract_strided_slice %13 {offsets = [0, 384], sizes = [8, 128], strides = [1, 1]} : vector<8x512xf32> to vector<8x128xf32>
    %cst_17 = arith.constant 5.000000e-01 : f32
    %33 = vector.broadcast %cst_17 : f32 to vector<8x128xf32>
    %34 = arith.mulf %33, %32 : vector<8x128xf32>
    %35 = math.tanh %34 : vector<8x128xf32>
    %cst_18 = arith.constant 5.000000e-01 : f32
    %36 = vector.broadcast %cst_18 : f32 to vector<8x128xf32>
    %37 = arith.mulf %36, %35 : vector<8x128xf32>
    %cst_19 = arith.constant 5.000000e-01 : f32
    %38 = vector.broadcast %cst_19 : f32 to vector<8x128xf32>
    %39 = arith.addf %37, %38 : vector<8x128xf32>
    %40 = arith.mulf %29, %6 : vector<8x128xf32>
    %41 = arith.mulf %21, %31 : vector<8x128xf32>
    %42 = arith.addf %40, %41 : vector<8x128xf32>
    %43 = math.tanh %42 : vector<8x128xf32>
    %44 = arith.mulf %39, %43 : vector<8x128xf32>
    %45 = tpu.concatenate %44, %7 in 1 : vector<8x128xf32>, vector<8x128xf32> -> vector<8x256xf32>
    %cst_20 = arith.constant dense<0.000000e+00> : vector<8x512xf32>
    %46 = tpu.matmul %45, %1, %cst_20 {dimension_numbers = #tpu.dot_dimension_numbers<[1], [0], [0], [1], [0, 0, 1, 1], [], []>} : vector<8x256xf32>, vector<256x512xf32>, vector<8x512xf32> -> vector<8x512xf32>
    %47 = arith.addf %46, %4 : vector<8x512xf32>
    %48 = vector.extract_strided_slice %47 {offsets = [0, 0], sizes = [8, 128], strides = [1, 1]} : vector<8x512xf32> to vector<8x128xf32>
    %cst_21 = arith.constant 5.000000e-01 : f32
    %49 = vector.broadcast %cst_21 : f32 to vector<8x128xf32>
    %50 = arith.mulf %49, %48 : vector<8x128xf32>
    %51 = math.tanh %50 : vector<8x128xf32>
    %cst_22 = arith.constant 5.000000e-01 : f32
    %52 = vector.broadcast %cst_22 : f32 to vector<8x128xf32>
    %53 = arith.mulf %52, %51 : vector<8x128xf32>
    %cst_23 = arith.constant 5.000000e-01 : f32
    %54 = vector.broadcast %cst_23 : f32 to vector<8x128xf32>
    %55 = arith.addf %53, %54 : vector<8x128xf32>
    %56 = vector.extract_strided_slice %47 {offsets = [0, 128], sizes = [8, 128], strides = [1, 1]} : vector<8x512xf32> to vector<8x128xf32>
    %cst_24 = arith.constant 5.000000e-01 : f32
    %57 = vector.broadcast %cst_24 : f32 to vector<8x128xf32>
    %58 = arith.mulf %57, %56 : vector<8x128xf32>
    %59 = math.tanh %58 : vector<8x128xf32>
    %cst_25 = arith.constant 5.000000e-01 : f32
    %60 = vector.broadcast %cst_25 : f32 to vector<8x128xf32>
    %61 = arith.mulf %60, %59 : vector<8x128xf32>
    %cst_26 = arith.constant 5.000000e-01 : f32
    %62 = vector.broadcast %cst_26 : f32 to vector<8x128xf32>
    %63 = arith.addf %61, %62 : vector<8x128xf32>
    %64 = vector.extract_strided_slice %47 {offsets = [0, 256], sizes = [8, 128], strides = [1, 1]} : vector<8x512xf32> to vector<8x128xf32>
    %65 = math.tanh %64 : vector<8x128xf32>
    %66 = vector.extract_strided_slice %47 {offsets = [0, 384], sizes = [8, 128], strides = [1, 1]} : vector<8x512xf32> to vector<8x128xf32>
    %cst_27 = arith.constant 5.000000e-01 : f32
    %67 = vector.broadcast %cst_27 : f32 to vector<8x128xf32>
    %68 = arith.mulf %67, %66 : vector<8x128xf32>
    %69 = math.tanh %68 : vector<8x128xf32>
    %cst_28 = arith.constant 5.000000e-01 : f32
    %70 = vector.broadcast %cst_28 : f32 to vector<8x128xf32>
    %71 = arith.mulf %70, %69 : vector<8x128xf32>
    %cst_29 = arith.constant 5.000000e-01 : f32
    %72 = vector.broadcast %cst_29 : f32 to vector<8x128xf32>
    %73 = arith.addf %71, %72 : vector<8x128xf32>
    %74 = arith.mulf %63, %8 : vector<8x128xf32>
    %75 = arith.mulf %55, %65 : vector<8x128xf32>
    %76 = arith.addf %74, %75 : vector<8x128xf32>
    %77 = math.tanh %76 : vector<8x128xf32>
    %78 = arith.mulf %73, %77 : vector<8x128xf32>
    %79 = arith.index_cast %c0_i32 : i32 to index
    %c0_30 = arith.constant 0 : index
    %c0_31 = arith.constant 0 : index
    %80 = vector.load %arg4[%79, %c0_30, %c0_31] : memref<8x8x128xf32, #tpu.memory_space<vmem>>, vector<1x8x128xf32>
    %81 = vector.shape_cast %80 : vector<1x8x128xf32> to vector<8x128xf32>
    %82 = vector.shape_cast %78 : vector<8x128xf32> to vector<1x8x128xf32>
    tpu.vector_store %arg4[%79, %c0_30, %c0_31], %82 {strides = array<i32>} : memref<8x8x128xf32, #tpu.memory_space<vmem>>, vector<1x8x128xf32>,
    %c1_i32 = arith.constant 1 : i32
    %83 = arith.index_cast %c1_i32 : i32 to index
    %c0_32 = arith.constant 0 : index
    %c0_33 = arith.constant 0 : index
    %84 = vector.load %arg0[%83, %c0_32, %c0_33] : memref<8x8x512xf32, #tpu.memory_space<vmem>>, vector<1x8x512xf32>
    %85 = vector.shape_cast %84 : vector<1x8x512xf32> to vector<8x512xf32>
    %cst_34 = arith.constant dense<0.000000e+00> : vector<8x512xf32>
    %86 = tpu.matmul %44, %0, %cst_34 {dimension_numbers = #tpu.dot_dimension_numbers<[1], [0], [0], [1], [0, 0, 1, 1], [], []>} : vector<8x128xf32>, vector<128x512xf32>, vector<8x512xf32> -> vector<8x512xf32>
    %87 = arith.addf %85, %86 : vector<8x512xf32>
    %88 = vector.extract_strided_slice %87 {offsets = [0, 0], sizes = [8, 128], strides = [1, 1]} : vector<8x512xf32> to vector<8x128xf32>
    %cst_35 = arith.constant 5.000000e-01 : f32
    %89 = vector.broadcast %cst_35 : f32 to vector<8x128xf32>
    %90 = arith.mulf %89, %88 : vector<8x128xf32>
    %91 = math.tanh %90 : vector<8x128xf32>
    %cst_36 = arith.constant 5.000000e-01 : f32
    %92 = vector.broadcast %cst_36 : f32 to vector<8x128xf32>
    %93 = arith.mulf %92, %91 : vector<8x128xf32>
    %cst_37 = arith.constant 5.000000e-01 : f32
    %94 = vector.broadcast %cst_37 : f32 to vector<8x128xf32>
    %95 = arith.addf %93, %94 : vector<8x128xf32>
    %96 = vector.extract_strided_slice %87 {offsets = [0, 128], sizes = [8, 128], strides = [1, 1]} : vector<8x512xf32> to vector<8x128xf32>
    %cst_38 = arith.constant 5.000000e-01 : f32
    %97 = vector.broadcast %cst_38 : f32 to vector<8x128xf32>
    %98 = arith.mulf %97, %96 : vector<8x128xf32>
    %99 = math.tanh %98 : vector<8x128xf32>
    %cst_39 = arith.constant 5.000000e-01 : f32
    %100 = vector.broadcast %cst_39 : f32 to vector<8x128xf32>
    %101 = arith.mulf %100, %99 : vector<8x128xf32>
    %cst_40 = arith.constant 5.000000e-01 : f32
    %102 = vector.broadcast %cst_40 : f32 to vector<8x128xf32>
    %103 = arith.addf %101, %102 : vector<8x128xf32>
    %104 = vector.extract_strided_slice %87 {offsets = [0, 256], sizes = [8, 128], strides = [1, 1]} : vector<8x512xf32> to vector<8x128xf32>
    %105 = math.tanh %104 : vector<8x128xf32>
    %106 = vector.extract_strided_slice %87 {offsets = [0, 384], sizes = [8, 128], strides = [1, 1]} : vector<8x512xf32> to vector<8x128xf32>
    %cst_41 = arith.constant 5.000000e-01 : f32
    %107 = vector.broadcast %cst_41 : f32 to vector<8x128xf32>
    %108 = arith.mulf %107, %106 : vector<8x128xf32>
    %109 = math.tanh %108 : vector<8x128xf32>
    %cst_42 = arith.constant 5.000000e-01 : f32
    %110 = vector.broadcast %cst_42 : f32 to vector<8x128xf32>
    %111 = arith.mulf %110, %109 : vector<8x128xf32>
    %cst_43 = arith.constant 5.000000e-01 : f32
    %112 = vector.broadcast %cst_43 : f32 to vector<8x128xf32>
    %113 = arith.addf %111, %112 : vector<8x128xf32>
    %114 = arith.mulf %103, %42 : vector<8x128xf32>
    %115 = arith.mulf %95, %105 : vector<8x128xf32>
    %116 = arith.addf %114, %115 : vector<8x128xf32>
    %117 = math.tanh %116 : vector<8x128xf32>
    %118 = arith.mulf %113, %117 : vector<8x128xf32>
    %119 = tpu.concatenate %118, %78 in 1 : vector<8x128xf32>, vector<8x128xf32> -> vector<8x256xf32>
    %cst_44 = arith.constant dense<0.000000e+00> : vector<8x512xf32>
    %120 = tpu.matmul %119, %1, %cst_44 {dimension_numbers = #tpu.dot_dimension_numbers<[1], [0], [0], [1], [0, 0, 1, 1], [], []>} : vector<8x256xf32>, vector<256x512xf32>, vector<8x512xf32> -> vector<8x512xf32>
    %121 = arith.addf %120, %4 : vector<8x512xf32>
    %122 = vector.extract_strided_slice %121 {offsets = [0, 0], sizes = [8, 128], strides = [1, 1]} : vector<8x512xf32> to vector<8x128xf32>
    %cst_45 = arith.constant 5.000000e-01 : f32
    %123 = vector.broadcast %cst_45 : f32 to vector<8x128xf32>
    %124 = arith.mulf %123, %122 : vector<8x128xf32>
    %125 = math.tanh %124 : vector<8x128xf32>
    %cst_46 = arith.constant 5.000000e-01 : f32
    %126 = vector.broadcast %cst_46 : f32 to vector<8x128xf32>
    %127 = arith.mulf %126, %125 : vector<8x128xf32>
    %cst_47 = arith.constant 5.000000e-01 : f32
    %128 = vector.broadcast %cst_47 : f32 to vector<8x128xf32>
    %129 = arith.addf %127, %128 : vector<8x128xf32>
    %130 = vector.extract_strided_slice %121 {offsets = [0, 128], sizes = [8, 128], strides = [1, 1]} : vector<8x512xf32> to vector<8x128xf32>
    %cst_48 = arith.constant 5.000000e-01 : f32
    %131 = vector.broadcast %cst_48 : f32 to vector<8x128xf32>
    %132 = arith.mulf %131, %130 : vector<8x128xf32>
    %133 = math.tanh %132 : vector<8x128xf32>
    %cst_49 = arith.constant 5.000000e-01 : f32
    %134 = vector.broadcast %cst_49 : f32 to vector<8x128xf32>
    %135 = arith.mulf %134, %133 : vector<8x128xf32>
    %cst_50 = arith.constant 5.000000e-01 : f32
    %136 = vector.broadcast %cst_50 : f32 to vector<8x128xf32>
    %137 = arith.addf %135, %136 : vector<8x128xf32>
    %138 = vector.extract_strided_slice %121 {offsets = [0, 256], sizes = [8, 128], strides = [1, 1]} : vector<8x512xf32> to vector<8x128xf32>
    %139 = math.tanh %138 : vector<8x128xf32>
    %140 = vector.extract_strided_slice %121 {offsets = [0, 384], sizes = [8, 128], strides = [1, 1]} : vector<8x512xf32> to vector<8x128xf32>
    %cst_51 = arith.constant 5.000000e-01 : f32
    %141 = vector.broadcast %cst_51 : f32 to vector<8x128xf32>
    %142 = arith.mulf %141, %140 : vector<8x128xf32>
    %143 = math.tanh %142 : vector<8x128xf32>
    %cst_52 = arith.constant 5.000000e-01 : f32
    %144 = vector.broadcast %cst_52 : f32 to vector<8x128xf32>
    %145 = arith.mulf %144, %143 : vector<8x128xf32>
    %cst_53 = arith.constant 5.000000e-01 : f32
    %146 = vector.broadcast %cst_53 : f32 to vector<8x128xf32>
    %147 = arith.addf %145, %146 : vector<8x128xf32>
    %148 = arith.mulf %137, %76 : vector<8x128xf32>
    %149 = arith.mulf %129, %139 : vector<8x128xf32>
    %150 = arith.addf %148, %149 : vector<8x128xf32>
    %151 = math.tanh %150 : vector<8x128xf32>
    %152 = arith.mulf %147, %151 : vector<8x128xf32>
    %153 = arith.index_cast %c1_i32 : i32 to index
    %c0_54 = arith.constant 0 : index
    %c0_55 = arith.constant 0 : index
    %154 = vector.load %arg4[%153, %c0_54, %c0_55] : memref<8x8x128xf32, #tpu.memory_space<vmem>>, vector<1x8x128xf32>
    %155 = vector.shape_cast %154 : vector<1x8x128xf32> to vector<8x128xf32>
    %156 = vector.shape_cast %152 : vector<8x128xf32> to vector<1x8x128xf32>
    tpu.vector_store %arg4[%153, %c0_54, %c0_55], %156 {strides = array<i32>} : memref<8x8x128xf32, #tpu.memory_space<vmem>>, vector<1x8x128xf32>,
    %c2_i32 = arith.constant 2 : i32
    %157 = arith.index_cast %c2_i32 : i32 to index
    %c0_56 = arith.constant 0 : index
    %c0_57 = arith.constant 0 : index
    %158 = vector.load %arg0[%157, %c0_56, %c0_57] : memref<8x8x512xf32, #tpu.memory_space<vmem>>, vector<1x8x512xf32>
    %159 = vector.shape_cast %158 : vector<1x8x512xf32> to vector<8x512xf32>
    %cst_58 = arith.constant dense<0.000000e+00> : vector<8x512xf32>
    %160 = tpu.matmul %118, %0, %cst_58 {dimension_numbers = #tpu.dot_dimension_numbers<[1], [0], [0], [1], [0, 0, 1, 1], [], []>} : vector<8x128xf32>, vector<128x512xf32>, vector<8x512xf32> -> vector<8x512xf32>
    %161 = arith.addf %159, %160 : vector<8x512xf32>
    %162 = vector.extract_strided_slice %161 {offsets = [0, 0], sizes = [8, 128], strides = [1, 1]} : vector<8x512xf32> to vector<8x128xf32>
    %cst_59 = arith.constant 5.000000e-01 : f32
    %163 = vector.broadcast %cst_59 : f32 to vector<8x128xf32>
    %164 = arith.mulf %163, %162 : vector<8x128xf32>
    %165 = math.tanh %164 : vector<8x128xf32>
    %cst_60 = arith.constant 5.000000e-01 : f32
    %166 = vector.broadcast %cst_60 : f32 to vector<8x128xf32>
    %167 = arith.mulf %166, %165 : vector<8x128xf32>
    %cst_61 = arith.constant 5.000000e-01 : f32
    %168 = vector.broadcast %cst_61 : f32 to vector<8x128xf32>
    %169 = arith.addf %167, %168 : vector<8x128xf32>
    %170 = vector.extract_strided_slice %161 {offsets = [0, 128], sizes = [8, 128], strides = [1, 1]} : vector<8x512xf32> to vector<8x128xf32>
    %cst_62 = arith.constant 5.000000e-01 : f32
    %171 = vector.broadcast %cst_62 : f32 to vector<8x128xf32>
    %172 = arith.mulf %171, %170 : vector<8x128xf32>
    %173 = math.tanh %172 : vector<8x128xf32>
    %cst_63 = arith.constant 5.000000e-01 : f32
    %174 = vector.broadcast %cst_63 : f32 to vector<8x128xf32>
    %175 = arith.mulf %174, %173 : vector<8x128xf32>
    %cst_64 = arith.constant 5.000000e-01 : f32
    %176 = vector.broadcast %cst_64 : f32 to vector<8x128xf32>
    %177 = arith.addf %175, %176 : vector<8x128xf32>
    %178 = vector.extract_strided_slice %161 {offsets = [0, 256], sizes = [8, 128], strides = [1, 1]} : vector<8x512xf32> to vector<8x128xf32>
    %179 = math.tanh %178 : vector<8x128xf32>
    %180 = vector.extract_strided_slice %161 {offsets = [0, 384], sizes = [8, 128], strides = [1, 1]} : vector<8x512xf32> to vector<8x128xf32>
    %cst_65 = arith.constant 5.000000e-01 : f32
    %181 = vector.broadcast %cst_65 : f32 to vector<8x128xf32>
    %182 = arith.mulf %181, %180 : vector<8x128xf32>
    %183 = math.tanh %182 : vector<8x128xf32>
    %cst_66 = arith.constant 5.000000e-01 : f32
    %184 = vector.broadcast %cst_66 : f32 to vector<8x128xf32>
    %185 = arith.mulf %184, %183 : vector<8x128xf32>
    %cst_67 = arith.constant 5.000000e-01 : f32
    %186 = vector.broadcast %cst_67 : f32 to vector<8x128xf32>
    %187 = arith.addf %185, %186 : vector<8x128xf32>
    %188 = arith.mulf %177, %116 : vector<8x128xf32>
    %189 = arith.mulf %169, %179 : vector<8x128xf32>
    %190 = arith.addf %188, %189 : vector<8x128xf32>
    %191 = math.tanh %190 : vector<8x128xf32>
    %192 = arith.mulf %187, %191 : vector<8x128xf32>
    %193 = tpu.concatenate %192, %152 in 1 : vector<8x128xf32>, vector<8x128xf32> -> vector<8x256xf32>
    %cst_68 = arith.constant dense<0.000000e+00> : vector<8x512xf32>
    %194 = tpu.matmul %193, %1, %cst_68 {dimension_numbers = #tpu.dot_dimension_numbers<[1], [0], [0], [1], [0, 0, 1, 1], [], []>} : vector<8x256xf32>, vector<256x512xf32>, vector<8x512xf32> -> vector<8x512xf32>
    %195 = arith.addf %194, %4 : vector<8x512xf32>
    %196 = vector.extract_strided_slice %195 {offsets = [0, 0], sizes = [8, 128], strides = [1, 1]} : vector<8x512xf32> to vector<8x128xf32>
    %cst_69 = arith.constant 5.000000e-01 : f32
    %197 = vector.broadcast %cst_69 : f32 to vector<8x128xf32>
    %198 = arith.mulf %197, %196 : vector<8x128xf32>
    %199 = math.tanh %198 : vector<8x128xf32>
    %cst_70 = arith.constant 5.000000e-01 : f32
    %200 = vector.broadcast %cst_70 : f32 to vector<8x128xf32>
    %201 = arith.mulf %200, %199 : vector<8x128xf32>
    %cst_71 = arith.constant 5.000000e-01 : f32
    %202 = vector.broadcast %cst_71 : f32 to vector<8x128xf32>
    %203 = arith.addf %201, %202 : vector<8x128xf32>
    %204 = vector.extract_strided_slice %195 {offsets = [0, 128], sizes = [8, 128], strides = [1, 1]} : vector<8x512xf32> to vector<8x128xf32>
    %cst_72 = arith.constant 5.000000e-01 : f32
    %205 = vector.broadcast %cst_72 : f32 to vector<8x128xf32>
    %206 = arith.mulf %205, %204 : vector<8x128xf32>
    %207 = math.tanh %206 : vector<8x128xf32>
    %cst_73 = arith.constant 5.000000e-01 : f32
    %208 = vector.broadcast %cst_73 : f32 to vector<8x128xf32>
    %209 = arith.mulf %208, %207 : vector<8x128xf32>
    %cst_74 = arith.constant 5.000000e-01 : f32
    %210 = vector.broadcast %cst_74 : f32 to vector<8x128xf32>
    %211 = arith.addf %209, %210 : vector<8x128xf32>
    %212 = vector.extract_strided_slice %195 {offsets = [0, 256], sizes = [8, 128], strides = [1, 1]} : vector<8x512xf32> to vector<8x128xf32>
    %213 = math.tanh %212 : vector<8x128xf32>
    %214 = vector.extract_strided_slice %195 {offsets = [0, 384], sizes = [8, 128], strides = [1, 1]} : vector<8x512xf32> to vector<8x128xf32>
    %cst_75 = arith.constant 5.000000e-01 : f32
    %215 = vector.broadcast %cst_75 : f32 to vector<8x128xf32>
    %216 = arith.mulf %215, %214 : vector<8x128xf32>
    %217 = math.tanh %216 : vector<8x128xf32>
    %cst_76 = arith.constant 5.000000e-01 : f32
    %218 = vector.broadcast %cst_76 : f32 to vector<8x128xf32>
    %219 = arith.mulf %218, %217 : vector<8x128xf32>
    %cst_77 = arith.constant 5.000000e-01 : f32
    %220 = vector.broadcast %cst_77 : f32 to vector<8x128xf32>
    %221 = arith.addf %219, %220 : vector<8x128xf32>
    %222 = arith.mulf %211, %150 : vector<8x128xf32>
    %223 = arith.mulf %203, %213 : vector<8x128xf32>
    %224 = arith.addf %222, %223 : vector<8x128xf32>
    %225 = math.tanh %224 : vector<8x128xf32>
    %226 = arith.mulf %221, %225 : vector<8x128xf32>
    %227 = arith.index_cast %c2_i32 : i32 to index
    %c0_78 = arith.constant 0 : index
    %c0_79 = arith.constant 0 : index
    %228 = vector.load %arg4[%227, %c0_78, %c0_79] : memref<8x8x128xf32, #tpu.memory_space<vmem>>, vector<1x8x128xf32>
    %229 = vector.shape_cast %228 : vector<1x8x128xf32> to vector<8x128xf32>
    %230 = vector.shape_cast %226 : vector<8x128xf32> to vector<1x8x128xf32>
    tpu.vector_store %arg4[%227, %c0_78, %c0_79], %230 {strides = array<i32>} : memref<8x8x128xf32, #tpu.memory_space<vmem>>, vector<1x8x128xf32>,
    %c3_i32 = arith.constant 3 : i32
    %231 = arith.index_cast %c3_i32 : i32 to index
    %c0_80 = arith.constant 0 : index
    %c0_81 = arith.constant 0 : index
    %232 = vector.load %arg0[%231, %c0_80, %c0_81] : memref<8x8x512xf32, #tpu.memory_space<vmem>>, vector<1x8x512xf32>
    %233 = vector.shape_cast %232 : vector<1x8x512xf32> to vector<8x512xf32>
    %cst_82 = arith.constant dense<0.000000e+00> : vector<8x512xf32>
    %234 = tpu.matmul %192, %0, %cst_82 {dimension_numbers = #tpu.dot_dimension_numbers<[1], [0], [0], [1], [0, 0, 1, 1], [], []>} : vector<8x128xf32>, vector<128x512xf32>, vector<8x512xf32> -> vector<8x512xf32>
    %235 = arith.addf %233, %234 : vector<8x512xf32>
    %236 = vector.extract_strided_slice %235 {offsets = [0, 0], sizes = [8, 128], strides = [1, 1]} : vector<8x512xf32> to vector<8x128xf32>
    %cst_83 = arith.constant 5.000000e-01 : f32
    %237 = vector.broadcast %cst_83 : f32 to vector<8x128xf32>
    %238 = arith.mulf %237, %236 : vector<8x128xf32>
    %239 = math.tanh %238 : vector<8x128xf32>
    %cst_84 = arith.constant 5.000000e-01 : f32
    %240 = vector.broadcast %cst_84 : f32 to vector<8x128xf32>
    %241 = arith.mulf %240, %239 : vector<8x128xf32>
    %cst_85 = arith.constant 5.000000e-01 : f32
    %242 = vector.broadcast %cst_85 : f32 to vector<8x128xf32>
    %243 = arith.addf %241, %242 : vector<8x128xf32>
    %244 = vector.extract_strided_slice %235 {offsets = [0, 128], sizes = [8, 128], strides = [1, 1]} : vector<8x512xf32> to vector<8x128xf32>
    %cst_86 = arith.constant 5.000000e-01 : f32
    %245 = vector.broadcast %cst_86 : f32 to vector<8x128xf32>
    %246 = arith.mulf %245, %244 : vector<8x128xf32>
    %247 = math.tanh %246 : vector<8x128xf32>
    %cst_87 = arith.constant 5.000000e-01 : f32
    %248 = vector.broadcast %cst_87 : f32 to vector<8x128xf32>
    %249 = arith.mulf %248, %247 : vector<8x128xf32>
    %cst_88 = arith.constant 5.000000e-01 : f32
    %250 = vector.broadcast %cst_88 : f32 to vector<8x128xf32>
    %251 = arith.addf %249, %250 : vector<8x128xf32>
    %252 = vector.extract_strided_slice %235 {offsets = [0, 256], sizes = [8, 128], strides = [1, 1]} : vector<8x512xf32> to vector<8x128xf32>
    %253 = math.tanh %252 : vector<8x128xf32>
    %254 = vector.extract_strided_slice %235 {offsets = [0, 384], sizes = [8, 128], strides = [1, 1]} : vector<8x512xf32> to vector<8x128xf32>
    %cst_89 = arith.constant 5.000000e-01 : f32
    %255 = vector.broadcast %cst_89 : f32 to vector<8x128xf32>
    %256 = arith.mulf %255, %254 : vector<8x128xf32>
    %257 = math.tanh %256 : vector<8x128xf32>
    %cst_90 = arith.constant 5.000000e-01 : f32
    %258 = vector.broadcast %cst_90 : f32 to vector<8x128xf32>
    %259 = arith.mulf %258, %257 : vector<8x128xf32>
    %cst_91 = arith.constant 5.000000e-01 : f32
    %260 = vector.broadcast %cst_91 : f32 to vector<8x128xf32>
    %261 = arith.addf %259, %260 : vector<8x128xf32>
    %262 = arith.mulf %251, %190 : vector<8x128xf32>
    %263 = arith.mulf %243, %253 : vector<8x128xf32>
    %264 = arith.addf %262, %263 : vector<8x128xf32>
    %265 = math.tanh %264 : vector<8x128xf32>
    %266 = arith.mulf %261, %265 : vector<8x128xf32>
    %267 = tpu.concatenate %266, %226 in 1 : vector<8x128xf32>, vector<8x128xf32> -> vector<8x256xf32>
    %cst_92 = arith.constant dense<0.000000e+00> : vector<8x512xf32>
    %268 = tpu.matmul %267, %1, %cst_92 {dimension_numbers = #tpu.dot_dimension_numbers<[1], [0], [0], [1], [0, 0, 1, 1], [], []>} : vector<8x256xf32>, vector<256x512xf32>, vector<8x512xf32> -> vector<8x512xf32>
    %269 = arith.addf %268, %4 : vector<8x512xf32>
    %270 = vector.extract_strided_slice %269 {offsets = [0, 0], sizes = [8, 128], strides = [1, 1]} : vector<8x512xf32> to vector<8x128xf32>
    %cst_93 = arith.constant 5.000000e-01 : f32
    %271 = vector.broadcast %cst_93 : f32 to vector<8x128xf32>
    %272 = arith.mulf %271, %270 : vector<8x128xf32>
    %273 = math.tanh %272 : vector<8x128xf32>
    %cst_94 = arith.constant 5.000000e-01 : f32
    %274 = vector.broadcast %cst_94 : f32 to vector<8x128xf32>
    %275 = arith.mulf %274, %273 : vector<8x128xf32>
    %cst_95 = arith.constant 5.000000e-01 : f32
    %276 = vector.broadcast %cst_95 : f32 to vector<8x128xf32>
    %277 = arith.addf %275, %276 : vector<8x128xf32>
    %278 = vector.extract_strided_slice %269 {offsets = [0, 128], sizes = [8, 128], strides = [1, 1]} : vector<8x512xf32> to vector<8x128xf32>
    %cst_96 = arith.constant 5.000000e-01 : f32
    %279 = vector.broadcast %cst_96 : f32 to vector<8x128xf32>
    %280 = arith.mulf %279, %278 : vector<8x128xf32>
    %281 = math.tanh %280 : vector<8x128xf32>
    %cst_97 = arith.constant 5.000000e-01 : f32
    %282 = vector.broadcast %cst_97 : f32 to vector<8x128xf32>
    %283 = arith.mulf %282, %281 : vector<8x128xf32>
    %cst_98 = arith.constant 5.000000e-01 : f32
    %284 = vector.broadcast %cst_98 : f32 to vector<8x128xf32>
    %285 = arith.addf %283, %284 : vector<8x128xf32>
    %286 = vector.extract_strided_slice %269 {offsets = [0, 256], sizes = [8, 128], strides = [1, 1]} : vector<8x512xf32> to vector<8x128xf32>
    %287 = math.tanh %286 : vector<8x128xf32>
    %288 = vector.extract_strided_slice %269 {offsets = [0, 384], sizes = [8, 128], strides = [1, 1]} : vector<8x512xf32> to vector<8x128xf32>
    %cst_99 = arith.constant 5.000000e-01 : f32
    %289 = vector.broadcast %cst_99 : f32 to vector<8x128xf32>
    %290 = arith.mulf %289, %288 : vector<8x128xf32>
    %291 = math.tanh %290 : vector<8x128xf32>
    %cst_100 = arith.constant 5.000000e-01 : f32
    %292 = vector.broadcast %cst_100 : f32 to vector<8x128xf32>
    %293 = arith.mulf %292, %291 : vector<8x128xf32>
    %cst_101 = arith.constant 5.000000e-01 : f32
    %294 = vector.broadcast %cst_101 : f32 to vector<8x128xf32>
    %295 = arith.addf %293, %294 : vector<8x128xf32>
    %296 = arith.mulf %285, %224 : vector<8x128xf32>
    %297 = arith.mulf %277, %287 : vector<8x128xf32>
    %298 = arith.addf %296, %297 : vector<8x128xf32>
    %299 = math.tanh %298 : vector<8x128xf32>
    %300 = arith.mulf %295, %299 : vector<8x128xf32>
    %301 = arith.index_cast %c3_i32 : i32 to index
    %c0_102 = arith.constant 0 : index
    %c0_103 = arith.constant 0 : index
    %302 = vector.load %arg4[%301, %c0_102, %c0_103] : memref<8x8x128xf32, #tpu.memory_space<vmem>>, vector<1x8x128xf32>
    %303 = vector.shape_cast %302 : vector<1x8x128xf32> to vector<8x128xf32>
    %304 = vector.shape_cast %300 : vector<8x128xf32> to vector<1x8x128xf32>
    tpu.vector_store %arg4[%301, %c0_102, %c0_103], %304 {strides = array<i32>} : memref<8x8x128xf32, #tpu.memory_space<vmem>>, vector<1x8x128xf32>,
    %c4_i32 = arith.constant 4 : i32
    %305 = arith.index_cast %c4_i32 : i32 to index
    %c0_104 = arith.constant 0 : index
    %c0_105 = arith.constant 0 : index
    %306 = vector.load %arg0[%305, %c0_104, %c0_105] : memref<8x8x512xf32, #tpu.memory_space<vmem>>, vector<1x8x512xf32>
    %307 = vector.shape_cast %306 : vector<1x8x512xf32> to vector<8x512xf32>
    %cst_106 = arith.constant dense<0.000000e+00> : vector<8x512xf32>
    %308 = tpu.matmul %266, %0, %cst_106 {dimension_numbers = #tpu.dot_dimension_numbers<[1], [0], [0], [1], [0, 0, 1, 1], [], []>} : vector<8x128xf32>, vector<128x512xf32>, vector<8x512xf32> -> vector<8x512xf32>
    %309 = arith.addf %307, %308 : vector<8x512xf32>
    %310 = vector.extract_strided_slice %309 {offsets = [0, 0], sizes = [8, 128], strides = [1, 1]} : vector<8x512xf32> to vector<8x128xf32>
    %cst_107 = arith.constant 5.000000e-01 : f32
    %311 = vector.broadcast %cst_107 : f32 to vector<8x128xf32>
    %312 = arith.mulf %311, %310 : vector<8x128xf32>
    %313 = math.tanh %312 : vector<8x128xf32>
    %cst_108 = arith.constant 5.000000e-01 : f32
    %314 = vector.broadcast %cst_108 : f32 to vector<8x128xf32>
    %315 = arith.mulf %314, %313 : vector<8x128xf32>
    %cst_109 = arith.constant 5.000000e-01 : f32
    %316 = vector.broadcast %cst_109 : f32 to vector<8x128xf32>
    %317 = arith.addf %315, %316 : vector<8x128xf32>
    %318 = vector.extract_strided_slice %309 {offsets = [0, 128], sizes = [8, 128], strides = [1, 1]} : vector<8x512xf32> to vector<8x128xf32>
    %cst_110 = arith.constant 5.000000e-01 : f32
    %319 = vector.broadcast %cst_110 : f32 to vector<8x128xf32>
    %320 = arith.mulf %319, %318 : vector<8x128xf32>
    %321 = math.tanh %320 : vector<8x128xf32>
    %cst_111 = arith.constant 5.000000e-01 : f32
    %322 = vector.broadcast %cst_111 : f32 to vector<8x128xf32>
    %323 = arith.mulf %322, %321 : vector<8x128xf32>
    %cst_112 = arith.constant 5.000000e-01 : f32
    %324 = vector.broadcast %cst_112 : f32 to vector<8x128xf32>
    %325 = arith.addf %323, %324 : vector<8x128xf32>
    %326 = vector.extract_strided_slice %309 {offsets = [0, 256], sizes = [8, 128], strides = [1, 1]} : vector<8x512xf32> to vector<8x128xf32>
    %327 = math.tanh %326 : vector<8x128xf32>
    %328 = vector.extract_strided_slice %309 {offsets = [0, 384], sizes = [8, 128], strides = [1, 1]} : vector<8x512xf32> to vector<8x128xf32>
    %cst_113 = arith.constant 5.000000e-01 : f32
    %329 = vector.broadcast %cst_113 : f32 to vector<8x128xf32>
    %330 = arith.mulf %329, %328 : vector<8x128xf32>
    %331 = math.tanh %330 : vector<8x128xf32>
    %cst_114 = arith.constant 5.000000e-01 : f32
    %332 = vector.broadcast %cst_114 : f32 to vector<8x128xf32>
    %333 = arith.mulf %332, %331 : vector<8x128xf32>
    %cst_115 = arith.constant 5.000000e-01 : f32
    %334 = vector.broadcast %cst_115 : f32 to vector<8x128xf32>
    %335 = arith.addf %333, %334 : vector<8x128xf32>
    %336 = arith.mulf %325, %264 : vector<8x128xf32>
    %337 = arith.mulf %317, %327 : vector<8x128xf32>
    %338 = arith.addf %336, %337 : vector<8x128xf32>
    %339 = math.tanh %338 : vector<8x128xf32>
    %340 = arith.mulf %335, %339 : vector<8x128xf32>
    %341 = tpu.concatenate %340, %300 in 1 : vector<8x128xf32>, vector<8x128xf32> -> vector<8x256xf32>
    %cst_116 = arith.constant dense<0.000000e+00> : vector<8x512xf32>
    %342 = tpu.matmul %341, %1, %cst_116 {dimension_numbers = #tpu.dot_dimension_numbers<[1], [0], [0], [1], [0, 0, 1, 1], [], []>} : vector<8x256xf32>, vector<256x512xf32>, vector<8x512xf32> -> vector<8x512xf32>
    %343 = arith.addf %342, %4 : vector<8x512xf32>
    %344 = vector.extract_strided_slice %343 {offsets = [0, 0], sizes = [8, 128], strides = [1, 1]} : vector<8x512xf32> to vector<8x128xf32>
    %cst_117 = arith.constant 5.000000e-01 : f32
    %345 = vector.broadcast %cst_117 : f32 to vector<8x128xf32>
    %346 = arith.mulf %345, %344 : vector<8x128xf32>
    %347 = math.tanh %346 : vector<8x128xf32>
    %cst_118 = arith.constant 5.000000e-01 : f32
    %348 = vector.broadcast %cst_118 : f32 to vector<8x128xf32>
    %349 = arith.mulf %348, %347 : vector<8x128xf32>
    %cst_119 = arith.constant 5.000000e-01 : f32
    %350 = vector.broadcast %cst_119 : f32 to vector<8x128xf32>
    %351 = arith.addf %349, %350 : vector<8x128xf32>
    %352 = vector.extract_strided_slice %343 {offsets = [0, 128], sizes = [8, 128], strides = [1, 1]} : vector<8x512xf32> to vector<8x128xf32>
    %cst_120 = arith.constant 5.000000e-01 : f32
    %353 = vector.broadcast %cst_120 : f32 to vector<8x128xf32>
    %354 = arith.mulf %353, %352 : vector<8x128xf32>
    %355 = math.tanh %354 : vector<8x128xf32>
    %cst_121 = arith.constant 5.000000e-01 : f32
    %356 = vector.broadcast %cst_121 : f32 to vector<8x128xf32>
    %357 = arith.mulf %356, %355 : vector<8x128xf32>
    %cst_122 = arith.constant 5.000000e-01 : f32
    %358 = vector.broadcast %cst_122 : f32 to vector<8x128xf32>
    %359 = arith.addf %357, %358 : vector<8x128xf32>
    %360 = vector.extract_strided_slice %343 {offsets = [0, 256], sizes = [8, 128], strides = [1, 1]} : vector<8x512xf32> to vector<8x128xf32>
    %361 = math.tanh %360 : vector<8x128xf32>
    %362 = vector.extract_strided_slice %343 {offsets = [0, 384], sizes = [8, 128], strides = [1, 1]} : vector<8x512xf32> to vector<8x128xf32>
    %cst_123 = arith.constant 5.000000e-01 : f32
    %363 = vector.broadcast %cst_123 : f32 to vector<8x128xf32>
    %364 = arith.mulf %363, %362 : vector<8x128xf32>
    %365 = math.tanh %364 : vector<8x128xf32>
    %cst_124 = arith.constant 5.000000e-01 : f32
    %366 = vector.broadcast %cst_124 : f32 to vector<8x128xf32>
    %367 = arith.mulf %366, %365 : vector<8x128xf32>
    %cst_125 = arith.constant 5.000000e-01 : f32
    %368 = vector.broadcast %cst_125 : f32 to vector<8x128xf32>
    %369 = arith.addf %367, %368 : vector<8x128xf32>
    %370 = arith.mulf %359, %298 : vector<8x128xf32>
    %371 = arith.mulf %351, %361 : vector<8x128xf32>
    %372 = arith.addf %370, %371 : vector<8x128xf32>
    %373 = math.tanh %372 : vector<8x128xf32>
    %374 = arith.mulf %369, %373 : vector<8x128xf32>
    %375 = arith.index_cast %c4_i32 : i32 to index
    %c0_126 = arith.constant 0 : index
    %c0_127 = arith.constant 0 : index
    %376 = vector.load %arg4[%375, %c0_126, %c0_127] : memref<8x8x128xf32, #tpu.memory_space<vmem>>, vector<1x8x128xf32>
    %377 = vector.shape_cast %376 : vector<1x8x128xf32> to vector<8x128xf32>
    %378 = vector.shape_cast %374 : vector<8x128xf32> to vector<1x8x128xf32>
    tpu.vector_store %arg4[%375, %c0_126, %c0_127], %378 {strides = array<i32>} : memref<8x8x128xf32, #tpu.memory_space<vmem>>, vector<1x8x128xf32>,
    %c5_i32 = arith.constant 5 : i32
    %379 = arith.index_cast %c5_i32 : i32 to index
    %c0_128 = arith.constant 0 : index
    %c0_129 = arith.constant 0 : index
    %380 = vector.load %arg0[%379, %c0_128, %c0_129] : memref<8x8x512xf32, #tpu.memory_space<vmem>>, vector<1x8x512xf32>
    %381 = vector.shape_cast %380 : vector<1x8x512xf32> to vector<8x512xf32>
    %cst_130 = arith.constant dense<0.000000e+00> : vector<8x512xf32>
    %382 = tpu.matmul %340, %0, %cst_130 {dimension_numbers = #tpu.dot_dimension_numbers<[1], [0], [0], [1], [0, 0, 1, 1], [], []>} : vector<8x128xf32>, vector<128x512xf32>, vector<8x512xf32> -> vector<8x512xf32>
    %383 = arith.addf %381, %382 : vector<8x512xf32>
    %384 = vector.extract_strided_slice %383 {offsets = [0, 0], sizes = [8, 128], strides = [1, 1]} : vector<8x512xf32> to vector<8x128xf32>
    %cst_131 = arith.constant 5.000000e-01 : f32
    %385 = vector.broadcast %cst_131 : f32 to vector<8x128xf32>
    %386 = arith.mulf %385, %384 : vector<8x128xf32>
    %387 = math.tanh %386 : vector<8x128xf32>
    %cst_132 = arith.constant 5.000000e-01 : f32
    %388 = vector.broadcast %cst_132 : f32 to vector<8x128xf32>
    %389 = arith.mulf %388, %387 : vector<8x128xf32>
    %cst_133 = arith.constant 5.000000e-01 : f32
    %390 = vector.broadcast %cst_133 : f32 to vector<8x128xf32>
    %391 = arith.addf %389, %390 : vector<8x128xf32>
    %392 = vector.extract_strided_slice %383 {offsets = [0, 128], sizes = [8, 128], strides = [1, 1]} : vector<8x512xf32> to vector<8x128xf32>
    %cst_134 = arith.constant 5.000000e-01 : f32
    %393 = vector.broadcast %cst_134 : f32 to vector<8x128xf32>
    %394 = arith.mulf %393, %392 : vector<8x128xf32>
    %395 = math.tanh %394 : vector<8x128xf32>
    %cst_135 = arith.constant 5.000000e-01 : f32
    %396 = vector.broadcast %cst_135 : f32 to vector<8x128xf32>
    %397 = arith.mulf %396, %395 : vector<8x128xf32>
    %cst_136 = arith.constant 5.000000e-01 : f32
    %398 = vector.broadcast %cst_136 : f32 to vector<8x128xf32>
    %399 = arith.addf %397, %398 : vector<8x128xf32>
    %400 = vector.extract_strided_slice %383 {offsets = [0, 256], sizes = [8, 128], strides = [1, 1]} : vector<8x512xf32> to vector<8x128xf32>
    %401 = math.tanh %400 : vector<8x128xf32>
    %402 = vector.extract_strided_slice %383 {offsets = [0, 384], sizes = [8, 128], strides = [1, 1]} : vector<8x512xf32> to vector<8x128xf32>
    %cst_137 = arith.constant 5.000000e-01 : f32
    %403 = vector.broadcast %cst_137 : f32 to vector<8x128xf32>
    %404 = arith.mulf %403, %402 : vector<8x128xf32>
    %405 = math.tanh %404 : vector<8x128xf32>
    %cst_138 = arith.constant 5.000000e-01 : f32
    %406 = vector.broadcast %cst_138 : f32 to vector<8x128xf32>
    %407 = arith.mulf %406, %405 : vector<8x128xf32>
    %cst_139 = arith.constant 5.000000e-01 : f32
    %408 = vector.broadcast %cst_139 : f32 to vector<8x128xf32>
    %409 = arith.addf %407, %408 : vector<8x128xf32>
    %410 = arith.mulf %399, %338 : vector<8x128xf32>
    %411 = arith.mulf %391, %401 : vector<8x128xf32>
    %412 = arith.addf %410, %411 : vector<8x128xf32>
    %413 = math.tanh %412 : vector<8x128xf32>
    %414 = arith.mulf %409, %413 : vector<8x128xf32>
    %415 = tpu.concatenate %414, %374 in 1 : vector<8x128xf32>, vector<8x128xf32> -> vector<8x256xf32>
    %cst_140 = arith.constant dense<0.000000e+00> : vector<8x512xf32>
    %416 = tpu.matmul %415, %1, %cst_140 {dimension_numbers = #tpu.dot_dimension_numbers<[1], [0], [0], [1], [0, 0, 1, 1], [], []>} : vector<8x256xf32>, vector<256x512xf32>, vector<8x512xf32> -> vector<8x512xf32>
    %417 = arith.addf %416, %4 : vector<8x512xf32>
    %418 = vector.extract_strided_slice %417 {offsets = [0, 0], sizes = [8, 128], strides = [1, 1]} : vector<8x512xf32> to vector<8x128xf32>
    %cst_141 = arith.constant 5.000000e-01 : f32
    %419 = vector.broadcast %cst_141 : f32 to vector<8x128xf32>
    %420 = arith.mulf %419, %418 : vector<8x128xf32>
    %421 = math.tanh %420 : vector<8x128xf32>
    %cst_142 = arith.constant 5.000000e-01 : f32
    %422 = vector.broadcast %cst_142 : f32 to vector<8x128xf32>
    %423 = arith.mulf %422, %421 : vector<8x128xf32>
    %cst_143 = arith.constant 5.000000e-01 : f32
    %424 = vector.broadcast %cst_143 : f32 to vector<8x128xf32>
    %425 = arith.addf %423, %424 : vector<8x128xf32>
    %426 = vector.extract_strided_slice %417 {offsets = [0, 128], sizes = [8, 128], strides = [1, 1]} : vector<8x512xf32> to vector<8x128xf32>
    %cst_144 = arith.constant 5.000000e-01 : f32
    %427 = vector.broadcast %cst_144 : f32 to vector<8x128xf32>
    %428 = arith.mulf %427, %426 : vector<8x128xf32>
    %429 = math.tanh %428 : vector<8x128xf32>
    %cst_145 = arith.constant 5.000000e-01 : f32
    %430 = vector.broadcast %cst_145 : f32 to vector<8x128xf32>
    %431 = arith.mulf %430, %429 : vector<8x128xf32>
    %cst_146 = arith.constant 5.000000e-01 : f32
    %432 = vector.broadcast %cst_146 : f32 to vector<8x128xf32>
    %433 = arith.addf %431, %432 : vector<8x128xf32>
    %434 = vector.extract_strided_slice %417 {offsets = [0, 256], sizes = [8, 128], strides = [1, 1]} : vector<8x512xf32> to vector<8x128xf32>
    %435 = math.tanh %434 : vector<8x128xf32>
    %436 = vector.extract_strided_slice %417 {offsets = [0, 384], sizes = [8, 128], strides = [1, 1]} : vector<8x512xf32> to vector<8x128xf32>
    %cst_147 = arith.constant 5.000000e-01 : f32
    %437 = vector.broadcast %cst_147 : f32 to vector<8x128xf32>
    %438 = arith.mulf %437, %436 : vector<8x128xf32>
    %439 = math.tanh %438 : vector<8x128xf32>
    %cst_148 = arith.constant 5.000000e-01 : f32
    %440 = vector.broadcast %cst_148 : f32 to vector<8x128xf32>
    %441 = arith.mulf %440, %439 : vector<8x128xf32>
    %cst_149 = arith.constant 5.000000e-01 : f32
    %442 = vector.broadcast %cst_149 : f32 to vector<8x128xf32>
    %443 = arith.addf %441, %442 : vector<8x128xf32>
    %444 = arith.mulf %433, %372 : vector<8x128xf32>
    %445 = arith.mulf %425, %435 : vector<8x128xf32>
    %446 = arith.addf %444, %445 : vector<8x128xf32>
    %447 = math.tanh %446 : vector<8x128xf32>
    %448 = arith.mulf %443, %447 : vector<8x128xf32>
    %449 = arith.index_cast %c5_i32 : i32 to index
    %c0_150 = arith.constant 0 : index
    %c0_151 = arith.constant 0 : index
    %450 = vector.load %arg4[%449, %c0_150, %c0_151] : memref<8x8x128xf32, #tpu.memory_space<vmem>>, vector<1x8x128xf32>
    %451 = vector.shape_cast %450 : vector<1x8x128xf32> to vector<8x128xf32>
    %452 = vector.shape_cast %448 : vector<8x128xf32> to vector<1x8x128xf32>
    tpu.vector_store %arg4[%449, %c0_150, %c0_151], %452 {strides = array<i32>} : memref<8x8x128xf32, #tpu.memory_space<vmem>>, vector<1x8x128xf32>,
    %c6_i32 = arith.constant 6 : i32
    %453 = arith.index_cast %c6_i32 : i32 to index
    %c0_152 = arith.constant 0 : index
    %c0_153 = arith.constant 0 : index
    %454 = vector.load %arg0[%453, %c0_152, %c0_153] : memref<8x8x512xf32, #tpu.memory_space<vmem>>, vector<1x8x512xf32>
    %455 = vector.shape_cast %454 : vector<1x8x512xf32> to vector<8x512xf32>
    %cst_154 = arith.constant dense<0.000000e+00> : vector<8x512xf32>
    %456 = tpu.matmul %414, %0, %cst_154 {dimension_numbers = #tpu.dot_dimension_numbers<[1], [0], [0], [1], [0, 0, 1, 1], [], []>} : vector<8x128xf32>, vector<128x512xf32>, vector<8x512xf32> -> vector<8x512xf32>
    %457 = arith.addf %455, %456 : vector<8x512xf32>
    %458 = vector.extract_strided_slice %457 {offsets = [0, 0], sizes = [8, 128], strides = [1, 1]} : vector<8x512xf32> to vector<8x128xf32>
    %cst_155 = arith.constant 5.000000e-01 : f32
    %459 = vector.broadcast %cst_155 : f32 to vector<8x128xf32>
    %460 = arith.mulf %459, %458 : vector<8x128xf32>
    %461 = math.tanh %460 : vector<8x128xf32>
    %cst_156 = arith.constant 5.000000e-01 : f32
    %462 = vector.broadcast %cst_156 : f32 to vector<8x128xf32>
    %463 = arith.mulf %462, %461 : vector<8x128xf32>
    %cst_157 = arith.constant 5.000000e-01 : f32
    %464 = vector.broadcast %cst_157 : f32 to vector<8x128xf32>
    %465 = arith.addf %463, %464 : vector<8x128xf32>
    %466 = vector.extract_strided_slice %457 {offsets = [0, 128], sizes = [8, 128], strides = [1, 1]} : vector<8x512xf32> to vector<8x128xf32>
    %cst_158 = arith.constant 5.000000e-01 : f32
    %467 = vector.broadcast %cst_158 : f32 to vector<8x128xf32>
    %468 = arith.mulf %467, %466 : vector<8x128xf32>
    %469 = math.tanh %468 : vector<8x128xf32>
    %cst_159 = arith.constant 5.000000e-01 : f32
    %470 = vector.broadcast %cst_159 : f32 to vector<8x128xf32>
    %471 = arith.mulf %470, %469 : vector<8x128xf32>
    %cst_160 = arith.constant 5.000000e-01 : f32
    %472 = vector.broadcast %cst_160 : f32 to vector<8x128xf32>
    %473 = arith.addf %471, %472 : vector<8x128xf32>
    %474 = vector.extract_strided_slice %457 {offsets = [0, 256], sizes = [8, 128], strides = [1, 1]} : vector<8x512xf32> to vector<8x128xf32>
    %475 = math.tanh %474 : vector<8x128xf32>
    %476 = vector.extract_strided_slice %457 {offsets = [0, 384], sizes = [8, 128], strides = [1, 1]} : vector<8x512xf32> to vector<8x128xf32>
    %cst_161 = arith.constant 5.000000e-01 : f32
    %477 = vector.broadcast %cst_161 : f32 to vector<8x128xf32>
    %478 = arith.mulf %477, %476 : vector<8x128xf32>
    %479 = math.tanh %478 : vector<8x128xf32>
    %cst_162 = arith.constant 5.000000e-01 : f32
    %480 = vector.broadcast %cst_162 : f32 to vector<8x128xf32>
    %481 = arith.mulf %480, %479 : vector<8x128xf32>
    %cst_163 = arith.constant 5.000000e-01 : f32
    %482 = vector.broadcast %cst_163 : f32 to vector<8x128xf32>
    %483 = arith.addf %481, %482 : vector<8x128xf32>
    %484 = arith.mulf %473, %412 : vector<8x128xf32>
    %485 = arith.mulf %465, %475 : vector<8x128xf32>
    %486 = arith.addf %484, %485 : vector<8x128xf32>
    %487 = math.tanh %486 : vector<8x128xf32>
    %488 = arith.mulf %483, %487 : vector<8x128xf32>
    %489 = tpu.concatenate %488, %448 in 1 : vector<8x128xf32>, vector<8x128xf32> -> vector<8x256xf32>
    %cst_164 = arith.constant dense<0.000000e+00> : vector<8x512xf32>
    %490 = tpu.matmul %489, %1, %cst_164 {dimension_numbers = #tpu.dot_dimension_numbers<[1], [0], [0], [1], [0, 0, 1, 1], [], []>} : vector<8x256xf32>, vector<256x512xf32>, vector<8x512xf32> -> vector<8x512xf32>
    %491 = arith.addf %490, %4 : vector<8x512xf32>
    %492 = vector.extract_strided_slice %491 {offsets = [0, 0], sizes = [8, 128], strides = [1, 1]} : vector<8x512xf32> to vector<8x128xf32>
    %cst_165 = arith.constant 5.000000e-01 : f32
    %493 = vector.broadcast %cst_165 : f32 to vector<8x128xf32>
    %494 = arith.mulf %493, %492 : vector<8x128xf32>
    %495 = math.tanh %494 : vector<8x128xf32>
    %cst_166 = arith.constant 5.000000e-01 : f32
    %496 = vector.broadcast %cst_166 : f32 to vector<8x128xf32>
    %497 = arith.mulf %496, %495 : vector<8x128xf32>
    %cst_167 = arith.constant 5.000000e-01 : f32
    %498 = vector.broadcast %cst_167 : f32 to vector<8x128xf32>
    %499 = arith.addf %497, %498 : vector<8x128xf32>
    %500 = vector.extract_strided_slice %491 {offsets = [0, 128], sizes = [8, 128], strides = [1, 1]} : vector<8x512xf32> to vector<8x128xf32>
    %cst_168 = arith.constant 5.000000e-01 : f32
    %501 = vector.broadcast %cst_168 : f32 to vector<8x128xf32>
    %502 = arith.mulf %501, %500 : vector<8x128xf32>
    %503 = math.tanh %502 : vector<8x128xf32>
    %cst_169 = arith.constant 5.000000e-01 : f32
    %504 = vector.broadcast %cst_169 : f32 to vector<8x128xf32>
    %505 = arith.mulf %504, %503 : vector<8x128xf32>
    %cst_170 = arith.constant 5.000000e-01 : f32
    %506 = vector.broadcast %cst_170 : f32 to vector<8x128xf32>
    %507 = arith.addf %505, %506 : vector<8x128xf32>
    %508 = vector.extract_strided_slice %491 {offsets = [0, 256], sizes = [8, 128], strides = [1, 1]} : vector<8x512xf32> to vector<8x128xf32>
    %509 = math.tanh %508 : vector<8x128xf32>
    %510 = vector.extract_strided_slice %491 {offsets = [0, 384], sizes = [8, 128], strides = [1, 1]} : vector<8x512xf32> to vector<8x128xf32>
    %cst_171 = arith.constant 5.000000e-01 : f32
    %511 = vector.broadcast %cst_171 : f32 to vector<8x128xf32>
    %512 = arith.mulf %511, %510 : vector<8x128xf32>
    %513 = math.tanh %512 : vector<8x128xf32>
    %cst_172 = arith.constant 5.000000e-01 : f32
    %514 = vector.broadcast %cst_172 : f32 to vector<8x128xf32>
    %515 = arith.mulf %514, %513 : vector<8x128xf32>
    %cst_173 = arith.constant 5.000000e-01 : f32
    %516 = vector.broadcast %cst_173 : f32 to vector<8x128xf32>
    %517 = arith.addf %515, %516 : vector<8x128xf32>
    %518 = arith.mulf %507, %446 : vector<8x128xf32>
    %519 = arith.mulf %499, %509 : vector<8x128xf32>
    %520 = arith.addf %518, %519 : vector<8x128xf32>
    %521 = math.tanh %520 : vector<8x128xf32>
    %522 = arith.mulf %517, %521 : vector<8x128xf32>
    %523 = arith.index_cast %c6_i32 : i32 to index
    %c0_174 = arith.constant 0 : index
    %c0_175 = arith.constant 0 : index
    %524 = vector.load %arg4[%523, %c0_174, %c0_175] : memref<8x8x128xf32, #tpu.memory_space<vmem>>, vector<1x8x128xf32>
    %525 = vector.shape_cast %524 : vector<1x8x128xf32> to vector<8x128xf32>
    %526 = vector.shape_cast %522 : vector<8x128xf32> to vector<1x8x128xf32>
    tpu.vector_store %arg4[%523, %c0_174, %c0_175], %526 {strides = array<i32>} : memref<8x8x128xf32, #tpu.memory_space<vmem>>, vector<1x8x128xf32>,
    %c7_i32 = arith.constant 7 : i32
    %527 = arith.index_cast %c7_i32 : i32 to index
    %c0_176 = arith.constant 0 : index
    %c0_177 = arith.constant 0 : index
    %528 = vector.load %arg0[%527, %c0_176, %c0_177] : memref<8x8x512xf32, #tpu.memory_space<vmem>>, vector<1x8x512xf32>
    %529 = vector.shape_cast %528 : vector<1x8x512xf32> to vector<8x512xf32>
    %cst_178 = arith.constant dense<0.000000e+00> : vector<8x512xf32>
    %530 = tpu.matmul %488, %0, %cst_178 {dimension_numbers = #tpu.dot_dimension_numbers<[1], [0], [0], [1], [0, 0, 1, 1], [], []>} : vector<8x128xf32>, vector<128x512xf32>, vector<8x512xf32> -> vector<8x512xf32>
    %531 = arith.addf %529, %530 : vector<8x512xf32>
    %532 = vector.extract_strided_slice %531 {offsets = [0, 0], sizes = [8, 128], strides = [1, 1]} : vector<8x512xf32> to vector<8x128xf32>
    %cst_179 = arith.constant 5.000000e-01 : f32
    %533 = vector.broadcast %cst_179 : f32 to vector<8x128xf32>
    %534 = arith.mulf %533, %532 : vector<8x128xf32>
    %535 = math.tanh %534 : vector<8x128xf32>
    %cst_180 = arith.constant 5.000000e-01 : f32
    %536 = vector.broadcast %cst_180 : f32 to vector<8x128xf32>
    %537 = arith.mulf %536, %535 : vector<8x128xf32>
    %cst_181 = arith.constant 5.000000e-01 : f32
    %538 = vector.broadcast %cst_181 : f32 to vector<8x128xf32>
    %539 = arith.addf %537, %538 : vector<8x128xf32>
    %540 = vector.extract_strided_slice %531 {offsets = [0, 128], sizes = [8, 128], strides = [1, 1]} : vector<8x512xf32> to vector<8x128xf32>
    %cst_182 = arith.constant 5.000000e-01 : f32
    %541 = vector.broadcast %cst_182 : f32 to vector<8x128xf32>
    %542 = arith.mulf %541, %540 : vector<8x128xf32>
    %543 = math.tanh %542 : vector<8x128xf32>
    %cst_183 = arith.constant 5.000000e-01 : f32
    %544 = vector.broadcast %cst_183 : f32 to vector<8x128xf32>
    %545 = arith.mulf %544, %543 : vector<8x128xf32>
    %cst_184 = arith.constant 5.000000e-01 : f32
    %546 = vector.broadcast %cst_184 : f32 to vector<8x128xf32>
    %547 = arith.addf %545, %546 : vector<8x128xf32>
    %548 = vector.extract_strided_slice %531 {offsets = [0, 256], sizes = [8, 128], strides = [1, 1]} : vector<8x512xf32> to vector<8x128xf32>
    %549 = math.tanh %548 : vector<8x128xf32>
    %550 = vector.extract_strided_slice %531 {offsets = [0, 384], sizes = [8, 128], strides = [1, 1]} : vector<8x512xf32> to vector<8x128xf32>
    %cst_185 = arith.constant 5.000000e-01 : f32
    %551 = vector.broadcast %cst_185 : f32 to vector<8x128xf32>
    %552 = arith.mulf %551, %550 : vector<8x128xf32>
    %553 = math.tanh %552 : vector<8x128xf32>
    %cst_186 = arith.constant 5.000000e-01 : f32
    %554 = vector.broadcast %cst_186 : f32 to vector<8x128xf32>
    %555 = arith.mulf %554, %553 : vector<8x128xf32>
    %cst_187 = arith.constant 5.000000e-01 : f32
    %556 = vector.broadcast %cst_187 : f32 to vector<8x128xf32>
    %557 = arith.addf %555, %556 : vector<8x128xf32>
    %558 = arith.mulf %547, %486 : vector<8x128xf32>
    %559 = arith.mulf %539, %549 : vector<8x128xf32>
    %560 = arith.addf %558, %559 : vector<8x128xf32>
    %561 = math.tanh %560 : vector<8x128xf32>
    %562 = arith.mulf %557, %561 : vector<8x128xf32>
    %563 = tpu.concatenate %562, %522 in 1 : vector<8x128xf32>, vector<8x128xf32> -> vector<8x256xf32>
    %cst_188 = arith.constant dense<0.000000e+00> : vector<8x512xf32>
    %564 = tpu.matmul %563, %1, %cst_188 {dimension_numbers = #tpu.dot_dimension_numbers<[1], [0], [0], [1], [0, 0, 1, 1], [], []>} : vector<8x256xf32>, vector<256x512xf32>, vector<8x512xf32> -> vector<8x512xf32>
    %565 = arith.addf %564, %4 : vector<8x512xf32>
    %566 = vector.extract_strided_slice %565 {offsets = [0, 0], sizes = [8, 128], strides = [1, 1]} : vector<8x512xf32> to vector<8x128xf32>
    %cst_189 = arith.constant 5.000000e-01 : f32
    %567 = vector.broadcast %cst_189 : f32 to vector<8x128xf32>
    %568 = arith.mulf %567, %566 : vector<8x128xf32>
    %569 = math.tanh %568 : vector<8x128xf32>
    %cst_190 = arith.constant 5.000000e-01 : f32
    %570 = vector.broadcast %cst_190 : f32 to vector<8x128xf32>
    %571 = arith.mulf %570, %569 : vector<8x128xf32>
    %cst_191 = arith.constant 5.000000e-01 : f32
    %572 = vector.broadcast %cst_191 : f32 to vector<8x128xf32>
    %573 = arith.addf %571, %572 : vector<8x128xf32>
    %574 = vector.extract_strided_slice %565 {offsets = [0, 128], sizes = [8, 128], strides = [1, 1]} : vector<8x512xf32> to vector<8x128xf32>
    %cst_192 = arith.constant 5.000000e-01 : f32
    %575 = vector.broadcast %cst_192 : f32 to vector<8x128xf32>
    %576 = arith.mulf %575, %574 : vector<8x128xf32>
    %577 = math.tanh %576 : vector<8x128xf32>
    %cst_193 = arith.constant 5.000000e-01 : f32
    %578 = vector.broadcast %cst_193 : f32 to vector<8x128xf32>
    %579 = arith.mulf %578, %577 : vector<8x128xf32>
    %cst_194 = arith.constant 5.000000e-01 : f32
    %580 = vector.broadcast %cst_194 : f32 to vector<8x128xf32>
    %581 = arith.addf %579, %580 : vector<8x128xf32>
    %582 = vector.extract_strided_slice %565 {offsets = [0, 256], sizes = [8, 128], strides = [1, 1]} : vector<8x512xf32> to vector<8x128xf32>
    %583 = math.tanh %582 : vector<8x128xf32>
    %584 = vector.extract_strided_slice %565 {offsets = [0, 384], sizes = [8, 128], strides = [1, 1]} : vector<8x512xf32> to vector<8x128xf32>
    %cst_195 = arith.constant 5.000000e-01 : f32
    %585 = vector.broadcast %cst_195 : f32 to vector<8x128xf32>
    %586 = arith.mulf %585, %584 : vector<8x128xf32>
    %587 = math.tanh %586 : vector<8x128xf32>
    %cst_196 = arith.constant 5.000000e-01 : f32
    %588 = vector.broadcast %cst_196 : f32 to vector<8x128xf32>
    %589 = arith.mulf %588, %587 : vector<8x128xf32>
    %cst_197 = arith.constant 5.000000e-01 : f32
    %590 = vector.broadcast %cst_197 : f32 to vector<8x128xf32>
    %591 = arith.addf %589, %590 : vector<8x128xf32>
    %592 = arith.mulf %581, %520 : vector<8x128xf32>
    %593 = arith.mulf %573, %583 : vector<8x128xf32>
    %594 = arith.addf %592, %593 : vector<8x128xf32>
    %595 = math.tanh %594 : vector<8x128xf32>
    %596 = arith.mulf %591, %595 : vector<8x128xf32>
    %597 = arith.index_cast %c7_i32 : i32 to index
    %c0_198 = arith.constant 0 : index
    %c0_199 = arith.constant 0 : index
    %598 = vector.load %arg4[%597, %c0_198, %c0_199] : memref<8x8x128xf32, #tpu.memory_space<vmem>>, vector<1x8x128xf32>
    %599 = vector.shape_cast %598 : vector<1x8x128xf32> to vector<8x128xf32>
    %600 = vector.shape_cast %596 : vector<8x128xf32> to vector<1x8x128xf32>
    tpu.vector_store %arg4[%597, %c0_198, %c0_199], %600 {strides = array<i32>} : memref<8x8x128xf32, #tpu.memory_space<vmem>>, vector<1x8x128xf32>,
    %c8_i32 = arith.constant 8 : i32
    %c0_200 = arith.constant 0 : index
    %c0_201 = arith.constant 0 : index
    %601 = vector.load %arg5[%c0_200, %c0_201] : memref<8x128xf32, #tpu.memory_space<vmem>>, vector<8x128xf32>
    tpu.vector_store %arg5[%c0_200, %c0_201], %596 {strides = array<i32>} : memref<8x128xf32, #tpu.memory_space<vmem>>, vector<8x128xf32>,
    return
  }
}

</mosaic_0001>

<llo_original>
// kernel: tpu_custom_call.1
$region0: #{tpu_custom_call.1}
  #allocation0 [shape = 'u32[]', space=smem, size = 0x4, offset = 0x4, fixed_abs, tag = 'smem constant byte address 0x4 - core index']
  #allocation1 [shape = 'u32[144,128]{1,0:T(1,128)}', space=vmem, size = 0x12000, scoped, tag = 'internal scratch']
  %s0 = inlined_call_operand.hbm [shape: f32[8,8,512], index: 0, kind: input, shape index: {}]
  %s1 = inlined_call_operand.hbm [shape: f32[128,512], index: 1, kind: input, shape index: {}]
  %s2 = inlined_call_operand.hbm [shape: f32[256,512], index: 2, kind: input, shape index: {}]
  %s3 = inlined_call_operand.vmem [shape: f32[1,512], index: 3, kind: input, shape index: {}]
  %s4 = inlined_call_operand.hbm [shape: f32[8,8,128], index: 4, kind: output, shape index: {0}]
  %s5 = inlined_call_operand.hbm [shape: f32[8,128], index: 5, kind: output, shape index: {1}]
  %6 = xla_tuple %s4, %s5
  %s7 = sld [smem:[#allocation0]]
  $region46: #{tpu_custom_call.1} parent=0
    _
  %s9 = ssub.s32 1, %s7
  %s10 = scalar_select 0, %s9, %s7
  $region1: #{tpu_custom_call.1} parent=0
    #allocation2 [shape = 'u8[131072]{0}', space=vmem, size = 0x20000, scoped, tag = 'input window, operand 0, single buffered']
    #allocation3 [shape = 's32[1]{0}', space=sflag, size = 0x4, scoped, tag = 'scoped memory for tpu_custom_call.1']
    #allocation4 [shape = 's32[1]{0}', space=sflag, size = 0x4, scoped, tag = 'scoped memory for tpu_custom_call.1']
    #allocation5 [shape = 'u8[262144]{0}', space=vmem, size = 0x40000, scoped, tag = 'input window, operand 1, single buffered']
    #allocation6 [shape = 's32[1]{0}', space=sflag, size = 0x4, scoped, tag = 'scoped memory for tpu_custom_call.1']
    #allocation7 [shape = 'u8[524288]{0}', space=vmem, size = 0x80000, scoped, tag = 'input window, operand 2, single buffered']
    #allocation8 [shape = 'u8[32768]{0}', space=vmem, size = 0x8000, scoped, tag = 'output window, operand 0, single buffered']
    #allocation9 [shape = 'u8[4096]{0}', space=vmem, size = 0x1000, scoped, tag = 'output window, operand 1, single buffered']
    #allocation10 [shape = 's32[1]{0}', space=sflag, size = 0x4, scoped, tag = 'scoped memory for tpu_custom_call.1']
    %11 = vsyncpa [#allocation3], 0
    %12 = vsyncpa [#allocation6], 0
    %13 = vsyncpa [#allocation4], 0
    %14 = vsyncpa [#allocation10], 0
    // Predicated region
    $region2: #{tpu_custom_call.1} parent=1 // pred_check
      _
    $region3: #{tpu_custom_call.1} parent=1 // pred_check_branch
      %16 = sbr.rel (0) target = $region5
    $region4: #{tpu_custom_call.1} parent=1 // pred_region
      %s18 = ssub.s32 4096, 4096
      %19 = vsyncadd [#allocation3], %s18
      %s20 = sshll.u32 [#allocation2], 4
      %s21 = int_to_ptr.vmem [resolvable:$true] %s20
      %26 = dma.hbm_to_vmem [thread:$0]  %s0, 4096, %s21, [#allocation3], 512, 512, 32
    $region5: #{tpu_custom_call.1} parent=1 // pred_fallthru
      _
    // Predicated region
    $region6: #{tpu_custom_call.1} parent=1 // pred_check
      _
    $region7: #{tpu_custom_call.1} parent=1 // pred_check_branch
      %28 = sbr.rel (0) target = $region9
    $region8: #{tpu_custom_call.1} parent=1 // pred_region
      %s30 = ssub.s32 8192, 8192
      %31 = vsyncadd [#allocation6], %s30
      %s32 = sshll.u32 [#allocation5], 4
      %s33 = int_to_ptr.vmem [resolvable:$true] %s32
      %38 = dma.hbm_to_vmem [thread:$0]  %s1, 8192, %s33, [#allocation6], 512, 512, 32
    $region9: #{tpu_custom_call.1} parent=1 // pred_fallthru
      _
    // Predicated region
    $region10: #{tpu_custom_call.1} parent=1 // pred_check
      _
    $region11: #{tpu_custom_call.1} parent=1 // pred_check_branch
      %40 = sbr.rel (0) target = $region13
    $region12: #{tpu_custom_call.1} parent=1 // pred_region
      %s42 = ssub.s32 16384, 16384
      %43 = vsyncadd [#allocation6], %s42
      %s44 = sshll.u32 [#allocation7], 4
      %s45 = int_to_ptr.vmem [resolvable:$true] %s44
      %50 = dma.hbm_to_vmem [thread:$0]  %s2, 16384, %s45, [#allocation6], 512, 512, 32
    $region13: #{tpu_custom_call.1} parent=1 // pred_fallthru
      _
    // Predicated region
    $region14: #{tpu_custom_call.1} parent=1 // pred_check
      _
    $region15: #{tpu_custom_call.1} parent=1 // pred_check_branch
      %52 = sbr.rel (0) target = $region17
    $region16: #{tpu_custom_call.1} parent=1 // pred_region
      _
    $region17: #{tpu_custom_call.1} parent=1 // pred_fallthru
      _
    // Predicated region
    $region18: #{tpu_custom_call.1} parent=1 // pred_check
      _
    $region19: #{tpu_custom_call.1} parent=1 // pred_check_branch
      %54 = sbr.rel (0) target = $region21
    $region20: #{tpu_custom_call.1} parent=1 // pred_region
      %55 = dma.done [#allocation3], 4096
    $region21: #{tpu_custom_call.1} parent=1 // pred_fallthru
      _
    // Predicated region
    $region22: #{tpu_custom_call.1} parent=1 // pred_check
      _
    $region23: #{tpu_custom_call.1} parent=1 // pred_check_branch
      %57 = sbr.rel (0) target = $region25
    $region24: #{tpu_custom_call.1} parent=1 // pred_region
      %58 = dma.done [#allocation6], 8192
    $region25: #{tpu_custom_call.1} parent=1 // pred_fallthru
      _
    // Predicated region
    $region26: #{tpu_custom_call.1} parent=1 // pred_check
      _
    $region27: #{tpu_custom_call.1} parent=1 // pred_check_branch
      %60 = sbr.rel (0) target = $region29
    $region28: #{tpu_custom_call.1} parent=1 // pred_region
      %61 = dma.done [#allocation6], 16384
    $region29: #{tpu_custom_call.1} parent=1 // pred_fallthru
      _
    %v62 = vld [vmem:[#allocation5] sm:$0xff]
    %v63 = vld [vmem:[#allocation5 + $0x8] sm:$0xff]
    %v64 = vld [vmem:[#allocation5 + $0x10] sm:$0xff]
    %v65 = vld [vmem:[#allocation5 + $0x18] sm:$0xff]
    %v66 = vld [vmem:[#allocation5 + $0x20] sm:$0xff]
    %v67 = vld [vmem:[#allocation5 + $0x28] sm:$0xff]
    %v68 = vld [vmem:[#allocation5 + $0x30] sm:$0xff]
    %v69 = vld [vmem:[#allocation5 + $0x38] sm:$0xff]
    %v70 = vld [vmem:[#allocation5 + $0x40] sm:$0xff]
    %v71 = vld [vmem:[#allocation5 + $0x48] sm:$0xff]
    %v72 = vld [vmem:[#allocation5 + $0x50] sm:$0xff]
    %v73 = vld [vmem:[#allocation5 + $0x58] sm:$0xff]
    %v74 = vld [vmem:[#allocation5 + $0x60] sm:$0xff]
    %v75 = vld [vmem:[#allocation5 + $0x68] sm:$0xff]
    %v76 = vld [vmem:[#allocation5 + $0x70] sm:$0xff]
    %v77 = vld [vmem:[#allocation5 + $0x78] sm:$0xff]
    %v78 = vld [vmem:[#allocation5 + $0x80] sm:$0xff]
    %v79 = vld [vmem:[#allocation5 + $0x88] sm:$0xff]
    %v80 = vld [vmem:[#allocation5 + $0x90] sm:$0xff]
    %v81 = vld [vmem:[#allocation5 + $0x98] sm:$0xff]
    %v82 = vld [vmem:[#allocation5 + $0xa0] sm:$0xff]
    %v83 = vld [vmem:[#allocation5 + $0xa8] sm:$0xff]
    %v84 = vld [vmem:[#allocation5 + $0xb0] sm:$0xff]
    %v85 = vld [vmem:[#allocation5 + $0xb8] sm:$0xff]
    %v86 = vld [vmem:[#allocation5 + $0xc0] sm:$0xff]
    %v87 = vld [vmem:[#allocation5 + $0xc8] sm:$0xff]
    %v88 = vld [vmem:[#allocation5 + $0xd0] sm:$0xff]
    %v89 = vld [vmem:[#allocation5 + $0xd8] sm:$0xff]
    %v90 = vld [vmem:[#allocation5 + $0xe0] sm:$0xff]
    %v91 = vld [vmem:[#allocation5 + $0xe8] sm:$0xff]
    %v92 = vld [vmem:[#allocation5 + $0xf0] sm:$0xff]
    %v93 = vld [vmem:[#allocation5 + $0xf8] sm:$0xff]
    %v94 = vld [vmem:[#allocation5 + $0x100] sm:$0xff]
    %v95 = vld [vmem:[#allocation5 + $0x108] sm:$0xff]
    %v96 = vld [vmem:[#allocation5 + $0x110] sm:$0xff]
    %v97 = vld [vmem:[#allocation5 + $0x118] sm:$0xff]
    %v98 = vld [vmem:[#allocation5 + $0x120] sm:$0xff]
    %v99 = vld [vmem:[#allocation5 + $0x128] sm:$0xff]
    %v100 = vld [vmem:[#allocation5 + $0x130] sm:$0xff]
    %v101 = vld [vmem:[#allocation5 + $0x138] sm:$0xff]
    %v102 = vld [vmem:[#allocation5 + $0x140] sm:$0xff]
    %v103 = vld [vmem:[#allocation5 + $0x148] sm:$0xff]
    %v104 = vld [vmem:[#allocation5 + $0x150] sm:$0xff]
    %v105 = vld [vmem:[#allocation5 + $0x158] sm:$0xff]
    %v106 = vld [vmem:[#allocation5 + $0x160] sm:$0xff]
    %v107 = vld [vmem:[#allocation5 + $0x168] sm:$0xff]
    %v108 = vld [vmem:[#allocation5 + $0x170] sm:$0xff]
    %v109 = vld [vmem:[#allocation5 + $0x178] sm:$0xff]
    %v110 = vld [vmem:[#allocation5 + $0x180] sm:$0xff]
    %v111 = vld [vmem:[#allocation5 + $0x188] sm:$0xff]
    %v112 = vld [vmem:[#allocation5 + $0x190] sm:$0xff]
    %v113 = vld [vmem:[#allocation5 + $0x198] sm:$0xff]
    %v114 = vld [vmem:[#allocation5 + $0x1a0] sm:$0xff]
    %v115 = vld [vmem:[#allocation5 + $0x1a8] sm:$0xff]
    %v116 = vld [vmem:[#allocation5 + $0x1b0] sm:$0xff]
    %v117 = vld [vmem:[#allocation5 + $0x1b8] sm:$0xff]
    %v118 = vld [vmem:[#allocation5 + $0x1c0] sm:$0xff]
    %v119 = vld [vmem:[#allocation5 + $0x1c8] sm:$0xff]
    %v120 = vld [vmem:[#allocation5 + $0x1d0] sm:$0xff]
    %v121 = vld [vmem:[#allocation5 + $0x1d8] sm:$0xff]
    %v122 = vld [vmem:[#allocation5 + $0x1e0] sm:$0xff]
    %v123 = vld [vmem:[#allocation5 + $0x1e8] sm:$0xff]
    %v124 = vld [vmem:[#allocation5 + $0x1f0] sm:$0xff]
    %v125 = vld [vmem:[#allocation5 + $0x1f8] sm:$0xff]
    %v126 = vld [vmem:[#allocation7] sm:$0xff]
    %v127 = vld [vmem:[#allocation7 + $0x8] sm:$0xff]
    %v128 = vld [vmem:[#allocation7 + $0x10] sm:$0xff]
    %v129 = vld [vmem:[#allocation7 + $0x18] sm:$0xff]
    %v130 = vld [vmem:[#allocation7 + $0x20] sm:$0xff]
    %v131 = vld [vmem:[#allocation7 + $0x28] sm:$0xff]
    %v132 = vld [vmem:[#allocation7 + $0x30] sm:$0xff]
    %v133 = vld [vmem:[#allocation7 + $0x38] sm:$0xff]
    %v134 = vld [vmem:[#allocation7 + $0x40] sm:$0xff]
    %v135 = vld [vmem:[#allocation7 + $0x48] sm:$0xff]
    %v136 = vld [vmem:[#allocation7 + $0x50] sm:$0xff]
    %v137 = vld [vmem:[#allocation7 + $0x58] sm:$0xff]
    %v138 = vld [vmem:[#allocation7 + $0x60] sm:$0xff]
    %v139 = vld [vmem:[#allocation7 + $0x68] sm:$0xff]
    %v140 = vld [vmem:[#allocation7 + $0x70] sm:$0xff]
    %v141 = vld [vmem:[#allocation7 + $0x78] sm:$0xff]
    %v142 = vld [vmem:[#allocation7 + $0x80] sm:$0xff]
    %v143 = vld [vmem:[#allocation7 + $0x88] sm:$0xff]
    %v144 = vld [vmem:[#allocation7 + $0x90] sm:$0xff]
    %v145 = vld [vmem:[#allocation7 + $0x98] sm:$0xff]
    %v146 = vld [vmem:[#allocation7 + $0xa0] sm:$0xff]
    %v147 = vld [vmem:[#allocation7 + $0xa8] sm:$0xff]
    %v148 = vld [vmem:[#allocation7 + $0xb0] sm:$0xff]
    %v149 = vld [vmem:[#allocation7 + $0xb8] sm:$0xff]
    %v150 = vld [vmem:[#allocation7 + $0xc0] sm:$0xff]
    %v151 = vld [vmem:[#allocation7 + $0xc8] sm:$0xff]
    %v152 = vld [vmem:[#allocation7 + $0xd0] sm:$0xff]
    %v153 = vld [vmem:[#allocation7 + $0xd8] sm:$0xff]
    %v154 = vld [vmem:[#allocation7 + $0xe0] sm:$0xff]
    %v155 = vld [vmem:[#allocation7 + $0xe8] sm:$0xff]
    %v156 = vld [vmem:[#allocation7 + $0xf0] sm:$0xff]
    %v157 = vld [vmem:[#allocation7 + $0xf8] sm:$0xff]
    %v158 = vld [vmem:[#allocation7 + $0x100] sm:$0xff]
    %v159 = vld [vmem:[#allocation7 + $0x108] sm:$0xff]
    %v160 = vld [vmem:[#allocation7 + $0x110] sm:$0xff]
    %v161 = vld [vmem:[#allocation7 + $0x118] sm:$0xff]
    %v162 = vld [vmem:[#allocation7 + $0x120] sm:$0xff]
    %v163 = vld [vmem:[#allocation7 + $0x128] sm:$0xff]
    %v164 = vld [vmem:[#allocation7 + $0x130] sm:$0xff]
    %v165 = vld [vmem:[#allocation7 + $0x138] sm:$0xff]
    %v166 = vld [vmem:[#allocation7 + $0x140] sm:$0xff]
    %v167 = vld [vmem:[#allocation7 + $0x148] sm:$0xff]
    %v168 = vld [vmem:[#allocation7 + $0x150] sm:$0xff]
    %v169 = vld [vmem:[#allocation7 + $0x158] sm:$0xff]
    %v170 = vld [vmem:[#allocation7 + $0x160] sm:$0xff]
    %v171 = vld [vmem:[#allocation7 + $0x168] sm:$0xff]
    %v172 = vld [vmem:[#allocation7 + $0x170] sm:$0xff]
    %v173 = vld [vmem:[#allocation7 + $0x178] sm:$0xff]
    %v174 = vld [vmem:[#allocation7 + $0x180] sm:$0xff]
    %v175 = vld [vmem:[#allocation7 + $0x188] sm:$0xff]
    %v176 = vld [vmem:[#allocation7 + $0x190] sm:$0xff]
    %v177 = vld [vmem:[#allocation7 + $0x198] sm:$0xff]
    %v178 = vld [vmem:[#allocation7 + $0x1a0] sm:$0xff]
    %v179 = vld [vmem:[#allocation7 + $0x1a8] sm:$0xff]
    %v180 = vld [vmem:[#allocation7 + $0x1b0] sm:$0xff]
    %v181 = vld [vmem:[#allocation7 + $0x1b8] sm:$0xff]
    %v182 = vld [vmem:[#allocation7 + $0x1c0] sm:$0xff]
    %v183 = vld [vmem:[#allocation7 + $0x1c8] sm:$0xff]
    %v184 = vld [vmem:[#allocation7 + $0x1d0] sm:$0xff]
    %v185 = vld [vmem:[#allocation7 + $0x1d8] sm:$0xff]
    %v186 = vld [vmem:[#allocation7 + $0x1e0] sm:$0xff]
    %v187 = vld [vmem:[#allocation7 + $0x1e8] sm:$0xff]
    %v188 = vld [vmem:[#allocation7 + $0x1f0] sm:$0xff]
    %v189 = vld [vmem:[#allocation7 + $0x1f8] sm:$0xff]
    %v190 = vld [vmem:[#allocation7 + $0x200] sm:$0xff]
    %v191 = vld [vmem:[#allocation7 + $0x208] sm:$0xff]
    %v192 = vld [vmem:[#allocation7 + $0x210] sm:$0xff]
    %v193 = vld [vmem:[#allocation7 + $0x218] sm:$0xff]
    %v194 = vld [vmem:[#allocation7 + $0x220] sm:$0xff]
    %v195 = vld [vmem:[#allocation7 + $0x228] sm:$0xff]
    %v196 = vld [vmem:[#allocation7 + $0x230] sm:$0xff]
    %v197 = vld [vmem:[#allocation7 + $0x238] sm:$0xff]
    %v198 = vld [vmem:[#allocation7 + $0x240] sm:$0xff]
    %v199 = vld [vmem:[#allocation7 + $0x248] sm:$0xff]
    %v200 = vld [vmem:[#allocation7 + $0x250] sm:$0xff]
    %v201 = vld [vmem:[#allocation7 + $0x258] sm:$0xff]
    %v202 = vld [vmem:[#allocation7 + $0x260] sm:$0xff]
    %v203 = vld [vmem:[#allocation7 + $0x268] sm:$0xff]
    %v204 = vld [vmem:[#allocation7 + $0x270] sm:$0xff]
    %v205 = vld [vmem:[#allocation7 + $0x278] sm:$0xff]
    %v206 = vld [vmem:[#allocation7 + $0x280] sm:$0xff]
    %v207 = vld [vmem:[#allocation7 + $0x288] sm:$0xff]
    %v208 = vld [vmem:[#allocation7 + $0x290] sm:$0xff]
    %v209 = vld [vmem:[#allocation7 + $0x298] sm:$0xff]
    %v210 = vld [vmem:[#allocation7 + $0x2a0] sm:$0xff]
    %v211 = vld [vmem:[#allocation7 + $0x2a8] sm:$0xff]
    %v212 = vld [vmem:[#allocation7 + $0x2b0] sm:$0xff]
    %v213 = vld [vmem:[#allocation7 + $0x2b8] sm:$0xff]
    %v214 = vld [vmem:[#allocation7 + $0x2c0] sm:$0xff]
    %v215 = vld [vmem:[#allocation7 + $0x2c8] sm:$0xff]
    %v216 = vld [vmem:[#allocation7 + $0x2d0] sm:$0xff]
    %v217 = vld [vmem:[#allocation7 + $0x2d8] sm:$0xff]
    %v218 = vld [vmem:[#allocation7 + $0x2e0] sm:$0xff]
    %v219 = vld [vmem:[#allocation7 + $0x2e8] sm:$0xff]
    %v220 = vld [vmem:[#allocation7 + $0x2f0] sm:$0xff]
    %v221 = vld [vmem:[#allocation7 + $0x2f8] sm:$0xff]
    %v222 = vld [vmem:[#allocation7 + $0x300] sm:$0xff]
    %v223 = vld [vmem:[#allocation7 + $0x308] sm:$0xff]
    %v224 = vld [vmem:[#allocation7 + $0x310] sm:$0xff]
    %v225 = vld [vmem:[#allocation7 + $0x318] sm:$0xff]
    %v226 = vld [vmem:[#allocation7 + $0x320] sm:$0xff]
    %v227 = vld [vmem:[#allocation7 + $0x328] sm:$0xff]
    %v228 = vld [vmem:[#allocation7 + $0x330] sm:$0xff]
    %v229 = vld [vmem:[#allocation7 + $0x338] sm:$0xff]
    %v230 = vld [vmem:[#allocation7 + $0x340] sm:$0xff]
    %v231 = vld [vmem:[#allocation7 + $0x348] sm:$0xff]
    %v232 = vld [vmem:[#allocation7 + $0x350] sm:$0xff]
    %v233 = vld [vmem:[#allocation7 + $0x358] sm:$0xff]
    %v234 = vld [vmem:[#allocation7 + $0x360] sm:$0xff]
    %v235 = vld [vmem:[#allocation7 + $0x368] sm:$0xff]
    %v236 = vld [vmem:[#allocation7 + $0x370] sm:$0xff]
    %v237 = vld [vmem:[#allocation7 + $0x378] sm:$0xff]
    %v238 = vld [vmem:[#allocation7 + $0x380] sm:$0xff]
    %v239 = vld [vmem:[#allocation7 + $0x388] sm:$0xff]
    %v240 = vld [vmem:[#allocation7 + $0x390] sm:$0xff]
    %v241 = vld [vmem:[#allocation7 + $0x398] sm:$0xff]
    %v242 = vld [vmem:[#allocation7 + $0x3a0] sm:$0xff]
    %v243 = vld [vmem:[#allocation7 + $0x3a8] sm:$0xff]
    %v244 = vld [vmem:[#allocation7 + $0x3b0] sm:$0xff]
    %v245 = vld [vmem:[#allocation7 + $0x3b8] sm:$0xff]
    %v246 = vld [vmem:[#allocation7 + $0x3c0] sm:$0xff]
    %v247 = vld [vmem:[#allocation7 + $0x3c8] sm:$0xff]
    %v248 = vld [vmem:[#allocation7 + $0x3d0] sm:$0xff]
    %v249 = vld [vmem:[#allocation7 + $0x3d8] sm:$0xff]
    %v250 = vld [vmem:[#allocation7 + $0x3e0] sm:$0xff]
    %v251 = vld [vmem:[#allocation7 + $0x3e8] sm:$0xff]
    %v252 = vld [vmem:[#allocation7 + $0x3f0] sm:$0xff]
    %v253 = vld [vmem:[#allocation7 + $0x3f8] sm:$0xff]
    %v254 = vld [vmem:[%s3] sm:$0xf]
    %v256 = vlaneseq
    %v257 = vshrl.u32 %v256, 7
    %v258 = vsub.s32 0, %v257
    %v259 = vrot.slane %v254, %v258
    %v260 = vlaneseq
    %v261 = vshrl.u32 %v260, 7
    %v262 = vsub.s32 1, %v261
    %v263 = vrot.slane %v254, %v262
    %v264 = vlaneseq
    %v265 = vshrl.u32 %v264, 7
    %v266 = vsub.s32 2, %v265
    %v267 = vrot.slane %v254, %v266
    %v268 = vlaneseq
    %v269 = vshrl.u32 %v268, 7
    %v270 = vsub.s32 3, %v269
    %v271 = vrot.slane %v254, %v270
    %v276 = vld [vmem:[#allocation2] sm:$0xff]
    %v277 = vld [vmem:[#allocation2 + $0x8] sm:$0xff]
    %v278 = vld [vmem:[#allocation2 + $0x10] sm:$0xff]
    %v279 = vld [vmem:[#allocation2 + $0x18] sm:$0xff]
    %280 = vmatprep.subr.mxu0 %v63
    %281 = vmatpush1.msra.mxu0 %v62
    %282 = vmatprep.subr.mxu0 %v67
    %283 = vmatpush1.msra.mxu0 %v66
    %284 = vmatprep.subr.mxu0 %v71
    %285 = vmatpush1.msra.mxu0 %v70
    %286 = vmatprep.subr.mxu0 %v75
    %287 = vmatpush1.msra.mxu0 %v74
    %288 = vmatprep.subr.mxu0 %v79
    %289 = vmatpush1.msra.mxu0 %v78
    %290 = vmatprep.subr.mxu0 %v83
    %291 = vmatpush1.msra.mxu0 %v82
    %292 = vmatprep.subr.mxu0 %v87
    %293 = vmatpush1.msra.mxu0 %v86
    %294 = vmatprep.subr.mxu0 %v91
    %295 = vmatpush1.msra.mxu0 %v90
    %296 = vmatprep.subr.mxu0 %v95
    %297 = vmatpush1.msra.mxu0 %v94
    %298 = vmatprep.subr.mxu0 %v99
    %299 = vmatpush1.msra.mxu0 %v98
    %300 = vmatprep.subr.mxu0 %v103
    %301 = vmatpush1.msra.mxu0 %v102
    %302 = vmatprep.subr.mxu0 %v107
    %303 = vmatpush1.msra.mxu0 %v106
    %304 = vmatprep.subr.mxu0 %v111
    %305 = vmatpush1.msra.mxu0 %v110
    %306 = vmatprep.subr.mxu0 %v115
    %307 = vmatpush1.msra.mxu0 %v114
    %308 = vmatprep.subr.mxu0 %v119
    %309 = vmatpush1.msra.mxu0 %v118
    %310 = vmatprep.subr.mxu0 %v123
    %311 = vmatpush1.msra.mxu0 %v122
    %312 = vmatprep.subr.mxu0 0.0
    %313 = vmatpush1.msra.mxu0 0.0
    %314 = vmatprep.subr.mxu0 0.0
    %315 = vmatpush1.msra.mxu0 0.0
    %316 = vmatprep.subr.mxu0 0.0
    %317 = vmatpush1.msra.mxu0 0.0
    %318 = vmatprep.subr.mxu0 0.0
    %319 = vmatpush1.msra.mxu0 0.0
    %320 = vmatprep.subr.mxu0 0.0
    %321 = vmatpush1.msra.mxu0 0.0
    %322 = vmatprep.subr.mxu0 0.0
    %323 = vmatpush1.msra.mxu0 0.0
    %324 = vmatprep.subr.mxu0 0.0
    %325 = vmatpush1.msra.mxu0 0.0
    %326 = vmatprep.subr.mxu0 0.0
    %327 = vmatpush1.msra.mxu0 0.0
    %328 = vmatprep.subr.mxu0 0.0
    %329 = vmatpush1.msra.mxu0 0.0
    %330 = vmatprep.subr.mxu0 0.0
    %331 = vmatpush1.msra.mxu0 0.0
    %332 = vmatprep.subr.mxu0 0.0
    %333 = vmatpush1.msra.mxu0 0.0
    %334 = vmatprep.subr.mxu0 0.0
    %335 = vmatpush1.msra.mxu0 0.0
    %336 = vmatprep.subr.mxu0 0.0
    %337 = vmatpush1.msra.mxu0 0.0
    %338 = vmatprep.subr.mxu0 0.0
    %339 = vmatpush1.msra.mxu0 0.0
    %340 = vmatprep.subr.mxu0 0.0
    %341 = vmatpush1.msra.mxu0 0.0
    %342 = vmatprep.subr.mxu0 0.0
    %343 = vmatpush1.msra.mxu0 0.0
    %344 = vmatprep.mubr.f32.mxu0 0.0
    %345 = vmatmul.mubr.f32.gmra.mrb[0].mxu0 0.0
    %v346 = vpop.f32.mrb[0].mxu0
    %v347 = vadd.f32 0.0, %v346
    %v348 = vpop.f32.mrb[0].mxu0
    %v349 = vadd.f32 0.0, %v348
    %350 = vdwg.mxu0
    %351 = vmatprep.subr.mxu0 %v65
    %352 = vmatpush1.msra.mxu0 %v64
    %353 = vmatprep.subr.mxu0 %v69
    %354 = vmatpush1.msra.mxu0 %v68
    %355 = vmatprep.subr.mxu0 %v73
    %356 = vmatpush1.msra.mxu0 %v72
    %357 = vmatprep.subr.mxu0 %v77
    %358 = vmatpush1.msra.mxu0 %v76
    %359 = vmatprep.subr.mxu0 %v81
    %360 = vmatpush1.msra.mxu0 %v80
    %361 = vmatprep.subr.mxu0 %v85
    %362 = vmatpush1.msra.mxu0 %v84
    %363 = vmatprep.subr.mxu0 %v89
    %364 = vmatpush1.msra.mxu0 %v88
    %365 = vmatprep.subr.mxu0 %v93
    %366 = vmatpush1.msra.mxu0 %v92
    %367 = vmatprep.subr.mxu0 %v97
    %368 = vmatpush1.msra.mxu0 %v96
    %369 = vmatprep.subr.mxu0 %v101
    %370 = vmatpush1.msra.mxu0 %v100
    %371 = vmatprep.subr.mxu0 %v105
    %372 = vmatpush1.msra.mxu0 %v104
    %373 = vmatprep.subr.mxu0 %v109
    %374 = vmatpush1.msra.mxu0 %v108
    %375 = vmatprep.subr.mxu0 %v113
    %376 = vmatpush1.msra.mxu0 %v112
    %377 = vmatprep.subr.mxu0 %v117
    %378 = vmatpush1.msra.mxu0 %v116
    %379 = vmatprep.subr.mxu0 %v121
    %380 = vmatpush1.msra.mxu0 %v120
    %381 = vmatprep.subr.mxu0 %v125
    %382 = vmatpush1.msra.mxu0 %v124
    %383 = vmatprep.subr.mxu0 0.0
    %384 = vmatpush1.msra.mxu0 0.0
    %385 = vmatprep.subr.mxu0 0.0
    %386 = vmatpush1.msra.mxu0 0.0
    %387 = vmatprep.subr.mxu0 0.0
    %388 = vmatpush1.msra.mxu0 0.0
    %389 = vmatprep.subr.mxu0 0.0
    %390 = vmatpush1.msra.mxu0 0.0
    %391 = vmatprep.subr.mxu0 0.0
    %392 = vmatpush1.msra.mxu0 0.0
    %393 = vmatprep.subr.mxu0 0.0
    %394 = vmatpush1.msra.mxu0 0.0
    %395 = vmatprep.subr.mxu0 0.0
    %396 = vmatpush1.msra.mxu0 0.0
    %397 = vmatprep.subr.mxu0 0.0
    %398 = vmatpush1.msra.mxu0 0.0
    %399 = vmatprep.subr.mxu0 0.0
    %400 = vmatpush1.msra.mxu0 0.0
    %401 = vmatprep.subr.mxu0 0.0
    %402 = vmatpush1.msra.mxu0 0.0
    %403 = vmatprep.subr.mxu0 0.0
    %404 = vmatpush1.msra.mxu0 0.0
    %405 = vmatprep.subr.mxu0 0.0
    %406 = vmatpush1.msra.mxu0 0.0
    %407 = vmatprep.subr.mxu0 0.0
    %408 = vmatpush1.msra.mxu0 0.0
    %409 = vmatprep.subr.mxu0 0.0
    %410 = vmatpush1.msra.mxu0 0.0
    %411 = vmatprep.subr.mxu0 0.0
    %412 = vmatpush1.msra.mxu0 0.0
    %413 = vmatprep.subr.mxu0 0.0
    %414 = vmatpush1.msra.mxu0 0.0
    %415 = vmatprep.mubr.f32.mxu0 0.0
    %416 = vmatmul.mubr.f32.gmra.mrb[0].mxu0 0.0
    %v417 = vpop.f32.mrb[0].mxu0
    %v418 = vadd.f32 0.0, %v417
    %v419 = vpop.f32.mrb[0].mxu0
    %v420 = vadd.f32 0.0, %v419
    %421 = vdwg.mxu0
    %v422 = vadd.f32 %v276, %v347
    %v423 = vadd.f32 %v277, %v349
    %v424 = vadd.f32 %v278, %v418
    %v425 = vadd.f32 %v279, %v420
    %v426 = vmul.f32 %v422, 0.5
    %v427 = vtanh.pop %v426
    %v428 = vmul.f32 %v427, 0.5
    %v429 = vadd.f32 %v428, 0.5
    %v430 = vmul.f32 %v423, 0.5
    %v431 = vtanh.pop %v430
    %v432 = vmul.f32 %v431, 0.5
    %v433 = vadd.f32 %v432, 0.5
    %v434 = vtanh.pop %v424
    %v435 = vmul.f32 %v425, 0.5
    %v436 = vtanh.pop %v435
    %v437 = vmul.f32 %v436, 0.5
    %v438 = vadd.f32 %v437, 0.5
    %v439 = vmul.f32 %v433, 0.0
    %v440 = vmul.f32 %v429, %v434
    %v441 = vadd.f32 %v439, %v440
    %v442 = vtanh.pop %v441
    %v443 = vmul.f32 %v438, %v442
    %444 = vmatprep.subr.mxu0 %v127
    %445 = vmatpush1.msra.mxu0 %v126
    %446 = vmatprep.subr.mxu0 %v131
    %447 = vmatpush1.msra.mxu0 %v130
    %448 = vmatprep.subr.mxu0 %v135
    %449 = vmatpush1.msra.mxu0 %v134
    %450 = vmatprep.subr.mxu0 %v139
    %451 = vmatpush1.msra.mxu0 %v138
    %452 = vmatprep.subr.mxu0 %v143
    %453 = vmatpush1.msra.mxu0 %v142
    %454 = vmatprep.subr.mxu0 %v147
    %455 = vmatpush1.msra.mxu0 %v146
    %456 = vmatprep.subr.mxu0 %v151
    %457 = vmatpush1.msra.mxu0 %v150
    %458 = vmatprep.subr.mxu0 %v155
    %459 = vmatpush1.msra.mxu0 %v154
    %460 = vmatprep.subr.mxu0 %v159
    %461 = vmatpush1.msra.mxu0 %v158
    %462 = vmatprep.subr.mxu0 %v163
    %463 = vmatpush1.msra.mxu0 %v162
    %464 = vmatprep.subr.mxu0 %v167
    %465 = vmatpush1.msra.mxu0 %v166
    %466 = vmatprep.subr.mxu0 %v171
    %467 = vmatpush1.msra.mxu0 %v170
    %468 = vmatprep.subr.mxu0 %v175
    %469 = vmatpush1.msra.mxu0 %v174
    %470 = vmatprep.subr.mxu0 %v179
    %471 = vmatpush1.msra.mxu0 %v178
    %472 = vmatprep.subr.mxu0 %v183
    %473 = vmatpush1.msra.mxu0 %v182
    %474 = vmatprep.subr.mxu0 %v187
    %475 = vmatpush1.msra.mxu0 %v186
    %476 = vmatprep.subr.mxu0 %v191
    %477 = vmatpush1.msra.mxu0 %v190
    %478 = vmatprep.subr.mxu0 %v195
    %479 = vmatpush1.msra.mxu0 %v194
    %480 = vmatprep.subr.mxu0 %v199
    %481 = vmatpush1.msra.mxu0 %v198
    %482 = vmatprep.subr.mxu0 %v203
    %483 = vmatpush1.msra.mxu0 %v202
    %484 = vmatprep.subr.mxu0 %v207
    %485 = vmatpush1.msra.mxu0 %v206
    %486 = vmatprep.subr.mxu0 %v211
    %487 = vmatpush1.msra.mxu0 %v210
    %488 = vmatprep.subr.mxu0 %v215
    %489 = vmatpush1.msra.mxu0 %v214
    %490 = vmatprep.subr.mxu0 %v219
    %491 = vmatpush1.msra.mxu0 %v218
    %492 = vmatprep.subr.mxu0 %v223
    %493 = vmatpush1.msra.mxu0 %v222
    %494 = vmatprep.subr.mxu0 %v227
    %495 = vmatpush1.msra.mxu0 %v226
    %496 = vmatprep.subr.mxu0 %v231
    %497 = vmatpush1.msra.mxu0 %v230
    %498 = vmatprep.subr.mxu0 %v235
    %499 = vmatpush1.msra.mxu0 %v234
    %500 = vmatprep.subr.mxu0 %v239
    %501 = vmatpush1.msra.mxu0 %v238
    %502 = vmatprep.subr.mxu0 %v243
    %503 = vmatpush1.msra.mxu0 %v242
    %504 = vmatprep.subr.mxu0 %v247
    %505 = vmatpush1.msra.mxu0 %v246
    %506 = vmatprep.subr.mxu0 %v251
    %507 = vmatpush1.msra.mxu0 %v250
    %508 = vmatprep.mubr.f32.mxu0 0.0
    %509 = vmatmul.mubr.f32.gmra.mrb[0].mxu0 %v443
    %v510 = vpop.f32.mrb[0].mxu0
    %v511 = vadd.f32 %v259, %v510
    %v512 = vpop.f32.mrb[0].mxu0
    %v513 = vadd.f32 %v263, %v512
    %514 = vdwg.mxu0
    %515 = vmatprep.subr.mxu0 %v129
    %516 = vmatpush1.msra.mxu0 %v128
    %517 = vmatprep.subr.mxu0 %v133
    %518 = vmatpush1.msra.mxu0 %v132
    %519 = vmatprep.subr.mxu0 %v137
    %520 = vmatpush1.msra.mxu0 %v136
    %521 = vmatprep.subr.mxu0 %v141
    %522 = vmatpush1.msra.mxu0 %v140
    %523 = vmatprep.subr.mxu0 %v145
    %524 = vmatpush1.msra.mxu0 %v144
    %525 = vmatprep.subr.mxu0 %v149
    %526 = vmatpush1.msra.mxu0 %v148
    %527 = vmatprep.subr.mxu0 %v153
    %528 = vmatpush1.msra.mxu0 %v152
    %529 = vmatprep.subr.mxu0 %v157
    %530 = vmatpush1.msra.mxu0 %v156
    %531 = vmatprep.subr.mxu0 %v161
    %532 = vmatpush1.msra.mxu0 %v160
    %533 = vmatprep.subr.mxu0 %v165
    %534 = vmatpush1.msra.mxu0 %v164
    %535 = vmatprep.subr.mxu0 %v169
    %536 = vmatpush1.msra.mxu0 %v168
    %537 = vmatprep.subr.mxu0 %v173
    %538 = vmatpush1.msra.mxu0 %v172
    %539 = vmatprep.subr.mxu0 %v177
    %540 = vmatpush1.msra.mxu0 %v176
    %541 = vmatprep.subr.mxu0 %v181
    %542 = vmatpush1.msra.mxu0 %v180
    %543 = vmatprep.subr.mxu0 %v185
    %544 = vmatpush1.msra.mxu0 %v184
    %545 = vmatprep.subr.mxu0 %v189
    %546 = vmatpush1.msra.mxu0 %v188
    %547 = vmatprep.subr.mxu0 %v193
    %548 = vmatpush1.msra.mxu0 %v192
    %549 = vmatprep.subr.mxu0 %v197
    %550 = vmatpush1.msra.mxu0 %v196
    %551 = vmatprep.subr.mxu0 %v201
    %552 = vmatpush1.msra.mxu0 %v200
    %553 = vmatprep.subr.mxu0 %v205
    %554 = vmatpush1.msra.mxu0 %v204
    %555 = vmatprep.subr.mxu0 %v209
    %556 = vmatpush1.msra.mxu0 %v208
    %557 = vmatprep.subr.mxu0 %v213
    %558 = vmatpush1.msra.mxu0 %v212
    %559 = vmatprep.subr.mxu0 %v217
    %560 = vmatpush1.msra.mxu0 %v216
    %561 = vmatprep.subr.mxu0 %v221
    %562 = vmatpush1.msra.mxu0 %v220
    %563 = vmatprep.subr.mxu0 %v225
    %564 = vmatpush1.msra.mxu0 %v224
    %565 = vmatprep.subr.mxu0 %v229
    %566 = vmatpush1.msra.mxu0 %v228
    %567 = vmatprep.subr.mxu0 %v233
    %568 = vmatpush1.msra.mxu0 %v232
    %569 = vmatprep.subr.mxu0 %v237
    %570 = vmatpush1.msra.mxu0 %v236
    %571 = vmatprep.subr.mxu0 %v241
    %572 = vmatpush1.msra.mxu0 %v240
    %573 = vmatprep.subr.mxu0 %v245
    %574 = vmatpush1.msra.mxu0 %v244
    %575 = vmatprep.subr.mxu0 %v249
    %576 = vmatpush1.msra.mxu0 %v248
    %577 = vmatprep.subr.mxu0 %v253
    %578 = vmatpush1.msra.mxu0 %v252
    %579 = vmatprep.mubr.f32.mxu0 0.0
    %580 = vmatmul.mubr.f32.gmra.mrb[0].mxu0 %v443
    %v581 = vpop.f32.mrb[0].mxu0
    %v582 = vadd.f32 %v267, %v581
    %v583 = vpop.f32.mrb[0].mxu0
    %v584 = vadd.f32 %v271, %v583
    %585 = vdwg.mxu0
    %v586 = vmul.f32 %v511, 0.5
    %v587 = vtanh.pop %v586
    %v588 = vmul.f32 %v587, 0.5
    %v589 = vadd.f32 %v588, 0.5
    %v590 = vmul.f32 %v513, 0.5
    %v591 = vtanh.pop %v590
    %v592 = vmul.f32 %v591, 0.5
    %v593 = vadd.f32 %v592, 0.5
    %v594 = vtanh.pop %v582
    %v595 = vmul.f32 %v584, 0.5
    %v596 = vtanh.pop %v595
    %v597 = vmul.f32 %v596, 0.5
    %v598 = vadd.f32 %v597, 0.5
    %v599 = vmul.f32 %v593, 0.0
    %v600 = vmul.f32 %v589, %v594
    %v601 = vadd.f32 %v599, %v600
    %v602 = vtanh.pop %v601
    %v603 = vmul.f32 %v598, %v602
    %604 = vst [vmem:[#allocation8] sm:$0xff] %v603
    %s605 = scalar_lea.vmem [#allocation2], 32
    %v606 = vld [vmem:[%s605] sm:$0xff]
    %v607 = vld [vmem:[%s605 + $0x8] sm:$0xff]
    %v608 = vld [vmem:[%s605 + $0x10] sm:$0xff]
    %v609 = vld [vmem:[%s605 + $0x18] sm:$0xff]
    %610 = vmatprep.subr.mxu0 %v63
    %611 = vmatpush1.msra.mxu0 %v62
    %612 = vmatprep.subr.mxu0 %v67
    %613 = vmatpush1.msra.mxu0 %v66
    %614 = vmatprep.subr.mxu0 %v71
    %615 = vmatpush1.msra.mxu0 %v70
    %616 = vmatprep.subr.mxu0 %v75
    %617 = vmatpush1.msra.mxu0 %v74
    %618 = vmatprep.subr.mxu0 %v79
    %619 = vmatpush1.msra.mxu0 %v78
    %620 = vmatprep.subr.mxu0 %v83
    %621 = vmatpush1.msra.mxu0 %v82
    %622 = vmatprep.subr.mxu0 %v87
    %623 = vmatpush1.msra.mxu0 %v86
    %624 = vmatprep.subr.mxu0 %v91
    %625 = vmatpush1.msra.mxu0 %v90
    %626 = vmatprep.subr.mxu0 %v95
    %627 = vmatpush1.msra.mxu0 %v94
    %628 = vmatprep.subr.mxu0 %v99
    %629 = vmatpush1.msra.mxu0 %v98
    %630 = vmatprep.subr.mxu0 %v103
    %631 = vmatpush1.msra.mxu0 %v102
    %632 = vmatprep.subr.mxu0 %v107
    %633 = vmatpush1.msra.mxu0 %v106
    %634 = vmatprep.subr.mxu0 %v111
    %635 = vmatpush1.msra.mxu0 %v110
    %636 = vmatprep.subr.mxu0 %v115
    %637 = vmatpush1.msra.mxu0 %v114
    %638 = vmatprep.subr.mxu0 %v119
    %639 = vmatpush1.msra.mxu0 %v118
    %640 = vmatprep.subr.mxu0 %v123
    %641 = vmatpush1.msra.mxu0 %v122
    %642 = vmatprep.subr.mxu0 0.0
    %643 = vmatpush1.msra.mxu0 0.0
    %644 = vmatprep.subr.mxu0 0.0
    %645 = vmatpush1.msra.mxu0 0.0
    %646 = vmatprep.subr.mxu0 0.0
    %647 = vmatpush1.msra.mxu0 0.0
    %648 = vmatprep.subr.mxu0 0.0
    %649 = vmatpush1.msra.mxu0 0.0
    %650 = vmatprep.subr.mxu0 0.0
    %651 = vmatpush1.msra.mxu0 0.0
    %652 = vmatprep.subr.mxu0 0.0
    %653 = vmatpush1.msra.mxu0 0.0
    %654 = vmatprep.subr.mxu0 0.0
    %655 = vmatpush1.msra.mxu0 0.0
    %656 = vmatprep.subr.mxu0 0.0
    %657 = vmatpush1.msra.mxu0 0.0
    %658 = vmatprep.subr.mxu0 0.0
    %659 = vmatpush1.msra.mxu0 0.0
    %660 = vmatprep.subr.mxu0 0.0
    %661 = vmatpush1.msra.mxu0 0.0
    %662 = vmatprep.subr.mxu0 0.0
    %663 = vmatpush1.msra.mxu0 0.0
    %664 = vmatprep.subr.mxu0 0.0
    %665 = vmatpush1.msra.mxu0 0.0
    %666 = vmatprep.subr.mxu0 0.0
    %667 = vmatpush1.msra.mxu0 0.0
    %668 = vmatprep.subr.mxu0 0.0
    %669 = vmatpush1.msra.mxu0 0.0
    %670 = vmatprep.subr.mxu0 0.0
    %671 = vmatpush1.msra.mxu0 0.0
    %672 = vmatprep.subr.mxu0 0.0
    %673 = vmatpush1.msra.mxu0 0.0
    %674 = vmatprep.mubr.f32.mxu0 0.0
    %675 = vmatmul.mubr.f32.gmra.mrb[0].mxu0 %v443
    %v676 = vpop.f32.mrb[0].mxu0
    %v677 = vadd.f32 0.0, %v676
    %v678 = vpop.f32.mrb[0].mxu0
    %v679 = vadd.f32 0.0, %v678
    %680 = vdwg.mxu0
    %681 = vmatprep.subr.mxu0 %v65
    %682 = vmatpush1.msra.mxu0 %v64
    %683 = vmatprep.subr.mxu0 %v69
    %684 = vmatpush1.msra.mxu0 %v68
    %685 = vmatprep.subr.mxu0 %v73
    %686 = vmatpush1.msra.mxu0 %v72
    %687 = vmatprep.subr.mxu0 %v77
    %688 = vmatpush1.msra.mxu0 %v76
    %689 = vmatprep.subr.mxu0 %v81
    %690 = vmatpush1.msra.mxu0 %v80
    %691 = vmatprep.subr.mxu0 %v85
    %692 = vmatpush1.msra.mxu0 %v84
    %693 = vmatprep.subr.mxu0 %v89
    %694 = vmatpush1.msra.mxu0 %v88
    %695 = vmatprep.subr.mxu0 %v93
    %696 = vmatpush1.msra.mxu0 %v92
    %697 = vmatprep.subr.mxu0 %v97
    %698 = vmatpush1.msra.mxu0 %v96
    %699 = vmatprep.subr.mxu0 %v101
    %700 = vmatpush1.msra.mxu0 %v100
    %701 = vmatprep.subr.mxu0 %v105
    %702 = vmatpush1.msra.mxu0 %v104
    %703 = vmatprep.subr.mxu0 %v109
    %704 = vmatpush1.msra.mxu0 %v108
    %705 = vmatprep.subr.mxu0 %v113
    %706 = vmatpush1.msra.mxu0 %v112
    %707 = vmatprep.subr.mxu0 %v117
    %708 = vmatpush1.msra.mxu0 %v116
    %709 = vmatprep.subr.mxu0 %v121
    %710 = vmatpush1.msra.mxu0 %v120
    %711 = vmatprep.subr.mxu0 %v125
    %712 = vmatpush1.msra.mxu0 %v124
    %713 = vmatprep.subr.mxu0 0.0
    %714 = vmatpush1.msra.mxu0 0.0
    %715 = vmatprep.subr.mxu0 0.0
    %716 = vmatpush1.msra.mxu0 0.0
    %717 = vmatprep.subr.mxu0 0.0
    %718 = vmatpush1.msra.mxu0 0.0
    %719 = vmatprep.subr.mxu0 0.0
    %720 = vmatpush1.msra.mxu0 0.0
    %721 = vmatprep.subr.mxu0 0.0
    %722 = vmatpush1.msra.mxu0 0.0
    %723 = vmatprep.subr.mxu0 0.0
    %724 = vmatpush1.msra.mxu0 0.0
    %725 = vmatprep.subr.mxu0 0.0
    %726 = vmatpush1.msra.mxu0 0.0
    %727 = vmatprep.subr.mxu0 0.0
    %728 = vmatpush1.msra.mxu0 0.0
    %729 = vmatprep.subr.mxu0 0.0
    %730 = vmatpush1.msra.mxu0 0.0
    %731 = vmatprep.subr.mxu0 0.0
    %732 = vmatpush1.msra.mxu0 0.0
    %733 = vmatprep.subr.mxu0 0.0
    %734 = vmatpush1.msra.mxu0 0.0
    %735 = vmatprep.subr.mxu0 0.0
    %736 = vmatpush1.msra.mxu0 0.0
    %737 = vmatprep.subr.mxu0 0.0
    %738 = vmatpush1.msra.mxu0 0.0
    %739 = vmatprep.subr.mxu0 0.0
    %740 = vmatpush1.msra.mxu0 0.0
    %741 = vmatprep.subr.mxu0 0.0
    %742 = vmatpush1.msra.mxu0 0.0
    %743 = vmatprep.subr.mxu0 0.0
    %744 = vmatpush1.msra.mxu0 0.0
    %745 = vmatprep.mubr.f32.mxu0 0.0
    %746 = vmatmul.mubr.f32.gmra.mrb[0].mxu0 %v443
    %v747 = vpop.f32.mrb[0].mxu0
    %v748 = vadd.f32 0.0, %v747
    %v749 = vpop.f32.mrb[0].mxu0
    %v750 = vadd.f32 0.0, %v749
    %751 = vdwg.mxu0
    %v752 = vadd.f32 %v606, %v677
    %v753 = vadd.f32 %v607, %v679
    %v754 = vadd.f32 %v608, %v748
    %v755 = vadd.f32 %v609, %v750
    %v756 = vmul.f32 %v752, 0.5
    %v757 = vtanh.pop %v756
    %v758 = vmul.f32 %v757, 0.5
    %v759 = vadd.f32 %v758, 0.5
    %v760 = vmul.f32 %v753, 0.5
    %v761 = vtanh.pop %v760
    %v762 = vmul.f32 %v761, 0.5
    %v763 = vadd.f32 %v762, 0.5
    %v764 = vtanh.pop %v754
    %v765 = vmul.f32 %v755, 0.5
    %v766 = vtanh.pop %v765
    %v767 = vmul.f32 %v766, 0.5
    %v768 = vadd.f32 %v767, 0.5
    %v769 = vmul.f32 %v763, %v441
    %v770 = vmul.f32 %v759, %v764
    %v771 = vadd.f32 %v769, %v770
    %v772 = vtanh.pop %v771
    %v773 = vmul.f32 %v768, %v772
    %774 = vmatprep.subr.mxu0 %v127
    %775 = vmatpush1.msra.mxu0 %v126
    %776 = vmatprep.subr.mxu0 %v131
    %777 = vmatpush1.msra.mxu0 %v130
    %778 = vmatprep.subr.mxu0 %v135
    %779 = vmatpush1.msra.mxu0 %v134
    %780 = vmatprep.subr.mxu0 %v139
    %781 = vmatpush1.msra.mxu0 %v138
    %782 = vmatprep.subr.mxu0 %v143
    %783 = vmatpush1.msra.mxu0 %v142
    %784 = vmatprep.subr.mxu0 %v147
    %785 = vmatpush1.msra.mxu0 %v146
    %786 = vmatprep.subr.mxu0 %v151
    %787 = vmatpush1.msra.mxu0 %v150
    %788 = vmatprep.subr.mxu0 %v155
    %789 = vmatpush1.msra.mxu0 %v154
    %790 = vmatprep.subr.mxu0 %v159
    %791 = vmatpush1.msra.mxu0 %v158
    %792 = vmatprep.subr.mxu0 %v163
    %793 = vmatpush1.msra.mxu0 %v162
    %794 = vmatprep.subr.mxu0 %v167
    %795 = vmatpush1.msra.mxu0 %v166
    %796 = vmatprep.subr.mxu0 %v171
    %797 = vmatpush1.msra.mxu0 %v170
    %798 = vmatprep.subr.mxu0 %v175
    %799 = vmatpush1.msra.mxu0 %v174
    %800 = vmatprep.subr.mxu0 %v179
    %801 = vmatpush1.msra.mxu0 %v178
    %802 = vmatprep.subr.mxu0 %v183
    %803 = vmatpush1.msra.mxu0 %v182
    %804 = vmatprep.subr.mxu0 %v187
    %805 = vmatpush1.msra.mxu0 %v186
    %806 = vmatprep.subr.mxu0 %v191
    %807 = vmatpush1.msra.mxu0 %v190
    %808 = vmatprep.subr.mxu0 %v195
    %809 = vmatpush1.msra.mxu0 %v194
    %810 = vmatprep.subr.mxu0 %v199
    %811 = vmatpush1.msra.mxu0 %v198
    %812 = vmatprep.subr.mxu0 %v203
    %813 = vmatpush1.msra.mxu0 %v202
    %814 = vmatprep.subr.mxu0 %v207
    %815 = vmatpush1.msra.mxu0 %v206
    %816 = vmatprep.subr.mxu0 %v211
    %817 = vmatpush1.msra.mxu0 %v210
    %818 = vmatprep.subr.mxu0 %v215
    %819 = vmatpush1.msra.mxu0 %v214
    %820 = vmatprep.subr.mxu0 %v219
    %821 = vmatpush1.msra.mxu0 %v218
    %822 = vmatprep.subr.mxu0 %v223
    %823 = vmatpush1.msra.mxu0 %v222
    %824 = vmatprep.subr.mxu0 %v227
    %825 = vmatpush1.msra.mxu0 %v226
    %826 = vmatprep.subr.mxu0 %v231
    %827 = vmatpush1.msra.mxu0 %v230
    %828 = vmatprep.subr.mxu0 %v235
    %829 = vmatpush1.msra.mxu0 %v234
    %830 = vmatprep.subr.mxu0 %v239
    %831 = vmatpush1.msra.mxu0 %v238
    %832 = vmatprep.subr.mxu0 %v243
    %833 = vmatpush1.msra.mxu0 %v242
    %834 = vmatprep.subr.mxu0 %v247
    %835 = vmatpush1.msra.mxu0 %v246
    %836 = vmatprep.subr.mxu0 %v251
    %837 = vmatpush1.msra.mxu0 %v250
    %838 = vmatprep.mubr.f32.mxu0 %v603
    %839 = vmatmul.mubr.f32.gmra.mrb[0].mxu0 %v773
    %v840 = vpop.f32.mrb[0].mxu0
    %v841 = vadd.f32 %v259, %v840
    %v842 = vpop.f32.mrb[0].mxu0
    %v843 = vadd.f32 %v263, %v842
    %844 = vdwg.mxu0
    %845 = vmatprep.subr.mxu0 %v129
    %846 = vmatpush1.msra.mxu0 %v128
    %847 = vmatprep.subr.mxu0 %v133
    %848 = vmatpush1.msra.mxu0 %v132
    %849 = vmatprep.subr.mxu0 %v137
    %850 = vmatpush1.msra.mxu0 %v136
    %851 = vmatprep.subr.mxu0 %v141
    %852 = vmatpush1.msra.mxu0 %v140
    %853 = vmatprep.subr.mxu0 %v145
    %854 = vmatpush1.msra.mxu0 %v144
    %855 = vmatprep.subr.mxu0 %v149
    %856 = vmatpush1.msra.mxu0 %v148
    %857 = vmatprep.subr.mxu0 %v153
    %858 = vmatpush1.msra.mxu0 %v152
    %859 = vmatprep.subr.mxu0 %v157
    %860 = vmatpush1.msra.mxu0 %v156
    %861 = vmatprep.subr.mxu0 %v161
    %862 = vmatpush1.msra.mxu0 %v160
    %863 = vmatprep.subr.mxu0 %v165
    %864 = vmatpush1.msra.mxu0 %v164
    %865 = vmatprep.subr.mxu0 %v169
    %866 = vmatpush1.msra.mxu0 %v168
    %867 = vmatprep.subr.mxu0 %v173
    %868 = vmatpush1.msra.mxu0 %v172
    %869 = vmatprep.subr.mxu0 %v177
    %870 = vmatpush1.msra.mxu0 %v176
    %871 = vmatprep.subr.mxu0 %v181
    %872 = vmatpush1.msra.mxu0 %v180
    %873 = vmatprep.subr.mxu0 %v185
    %874 = vmatpush1.msra.mxu0 %v184
    %875 = vmatprep.subr.mxu0 %v189
    %876 = vmatpush1.msra.mxu0 %v188
    %877 = vmatprep.subr.mxu0 %v193
    %878 = vmatpush1.msra.mxu0 %v192
    %879 = vmatprep.subr.mxu0 %v197
    %880 = vmatpush1.msra.mxu0 %v196
    %881 = vmatprep.subr.mxu0 %v201
    %882 = vmatpush1.msra.mxu0 %v200
    %883 = vmatprep.subr.mxu0 %v205
    %884 = vmatpush1.msra.mxu0 %v204
    %885 = vmatprep.subr.mxu0 %v209
    %886 = vmatpush1.msra.mxu0 %v208
    %887 = vmatprep.subr.mxu0 %v213
    %888 = vmatpush1.msra.mxu0 %v212
    %889 = vmatprep.subr.mxu0 %v217
    %890 = vmatpush1.msra.mxu0 %v216
    %891 = vmatprep.subr.mxu0 %v221
    %892 = vmatpush1.msra.mxu0 %v220
    %893 = vmatprep.subr.mxu0 %v225
    %894 = vmatpush1.msra.mxu0 %v224
    %895 = vmatprep.subr.mxu0 %v229
    %896 = vmatpush1.msra.mxu0 %v228
    %897 = vmatprep.subr.mxu0 %v233
    %898 = vmatpush1.msra.mxu0 %v232
    %899 = vmatprep.subr.mxu0 %v237
    %900 = vmatpush1.msra.mxu0 %v236
    %901 = vmatprep.subr.mxu0 %v241
    %902 = vmatpush1.msra.mxu0 %v240
    %903 = vmatprep.subr.mxu0 %v245
    %904 = vmatpush1.msra.mxu0 %v244
    %905 = vmatprep.subr.mxu0 %v249
    %906 = vmatpush1.msra.mxu0 %v248
    %907 = vmatprep.subr.mxu0 %v253
    %908 = vmatpush1.msra.mxu0 %v252
    %909 = vmatprep.mubr.f32.mxu0 %v603
    %910 = vmatmul.mubr.f32.gmra.mrb[0].mxu0 %v773
    %v911 = vpop.f32.mrb[0].mxu0
    %v912 = vadd.f32 %v267, %v911
    %v913 = vpop.f32.mrb[0].mxu0
    %v914 = vadd.f32 %v271, %v913
    %915 = vdwg.mxu0
    %v916 = vmul.f32 %v841, 0.5
    %v917 = vtanh.pop %v916
    %v918 = vmul.f32 %v917, 0.5
    %v919 = vadd.f32 %v918, 0.5
    %v920 = vmul.f32 %v843, 0.5
    %v921 = vtanh.pop %v920
    %v922 = vmul.f32 %v921, 0.5
    %v923 = vadd.f32 %v922, 0.5
    %v924 = vtanh.pop %v912
    %v925 = vmul.f32 %v914, 0.5
    %v926 = vtanh.pop %v925
    %v927 = vmul.f32 %v926, 0.5
    %v928 = vadd.f32 %v927, 0.5
    %v929 = vmul.f32 %v923, %v601
    %v930 = vmul.f32 %v919, %v924
    %v931 = vadd.f32 %v929, %v930
    %v932 = vtanh.pop %v931
    %v933 = vmul.f32 %v928, %v932
    %s934 = scalar_lea.vmem [#allocation8], 8
    %935 = vst [vmem:[%s934] sm:$0xff] %v933
    %s936 = scalar_lea.vmem [#allocation2], 64
    %v937 = vld [vmem:[%s936] sm:$0xff]
    %v938 = vld [vmem:[%s936 + $0x8] sm:$0xff]
    %v939 = vld [vmem:[%s936 + $0x10] sm:$0xff]
    %v940 = vld [vmem:[%s936 + $0x18] sm:$0xff]
    %941 = vmatprep.subr.mxu0 %v63
    %942 = vmatpush1.msra.mxu0 %v62
    %943 = vmatprep.subr.mxu0 %v67
    %944 = vmatpush1.msra.mxu0 %v66
    %945 = vmatprep.subr.mxu0 %v71
    %946 = vmatpush1.msra.mxu0 %v70
    %947 = vmatprep.subr.mxu0 %v75
    %948 = vmatpush1.msra.mxu0 %v74
    %949 = vmatprep.subr.mxu0 %v79
    %950 = vmatpush1.msra.mxu0 %v78
    %951 = vmatprep.subr.mxu0 %v83
    %952 = vmatpush1.msra.mxu0 %v82
    %953 = vmatprep.subr.mxu0 %v87
    %954 = vmatpush1.msra.mxu0 %v86
    %955 = vmatprep.subr.mxu0 %v91
    %956 = vmatpush1.msra.mxu0 %v90
    %957 = vmatprep.subr.mxu0 %v95
    %958 = vmatpush1.msra.mxu0 %v94
    %959 = vmatprep.subr.mxu0 %v99
    %960 = vmatpush1.msra.mxu0 %v98
    %961 = vmatprep.subr.mxu0 %v103
    %962 = vmatpush1.msra.mxu0 %v102
    %963 = vmatprep.subr.mxu0 %v107
    %964 = vmatpush1.msra.mxu0 %v106
    %965 = vmatprep.subr.mxu0 %v111
    %966 = vmatpush1.msra.mxu0 %v110
    %967 = vmatprep.subr.mxu0 %v115
    %968 = vmatpush1.msra.mxu0 %v114
    %969 = vmatprep.subr.mxu0 %v119
    %970 = vmatpush1.msra.mxu0 %v118
    %971 = vmatprep.subr.mxu0 %v123
    %972 = vmatpush1.msra.mxu0 %v122
    %973 = vmatprep.subr.mxu0 0.0
    %974 = vmatpush1.msra.mxu0 0.0
    %975 = vmatprep.subr.mxu0 0.0
    %976 = vmatpush1.msra.mxu0 0.0
    %977 = vmatprep.subr.mxu0 0.0
    %978 = vmatpush1.msra.mxu0 0.0
    %979 = vmatprep.subr.mxu0 0.0
    %980 = vmatpush1.msra.mxu0 0.0
    %981 = vmatprep.subr.mxu0 0.0
    %982 = vmatpush1.msra.mxu0 0.0
    %983 = vmatprep.subr.mxu0 0.0
    %984 = vmatpush1.msra.mxu0 0.0
    %985 = vmatprep.subr.mxu0 0.0
    %986 = vmatpush1.msra.mxu0 0.0
    %987 = vmatprep.subr.mxu0 0.0
    %988 = vmatpush1.msra.mxu0 0.0
    %989 = vmatprep.subr.mxu0 0.0
    %990 = vmatpush1.msra.mxu0 0.0
    %991 = vmatprep.subr.mxu0 0.0
    %992 = vmatpush1.msra.mxu0 0.0
    %993 = vmatprep.subr.mxu0 0.0
    %994 = vmatpush1.msra.mxu0 0.0
    %995 = vmatprep.subr.mxu0 0.0
    %996 = vmatpush1.msra.mxu0 0.0
    %997 = vmatprep.subr.mxu0 0.0
    %998 = vmatpush1.msra.mxu0 0.0
    %999 = vmatprep.subr.mxu0 0.0
    %1000 = vmatpush1.msra.mxu0 0.0
    %1001 = vmatprep.subr.mxu0 0.0
    %1002 = vmatpush1.msra.mxu0 0.0
    %1003 = vmatprep.subr.mxu0 0.0
    %1004 = vmatpush1.msra.mxu0 0.0
    %1005 = vmatprep.mubr.f32.mxu0 0.0
    %1006 = vmatmul.mubr.f32.gmra.mrb[0].mxu0 %v773
    %v1007 = vpop.f32.mrb[0].mxu0
    %v1008 = vadd.f32 0.0, %v1007
    %v1009 = vpop.f32.mrb[0].mxu0
    %v1010 = vadd.f32 0.0, %v1009
    %1011 = vdwg.mxu0
    %1012 = vmatprep.subr.mxu0 %v65
    %1013 = vmatpush1.msra.mxu0 %v64
    %1014 = vmatprep.subr.mxu0 %v69
    %1015 = vmatpush1.msra.mxu0 %v68
    %1016 = vmatprep.subr.mxu0 %v73
    %1017 = vmatpush1.msra.mxu0 %v72
    %1018 = vmatprep.subr.mxu0 %v77
    %1019 = vmatpush1.msra.mxu0 %v76
    %1020 = vmatprep.subr.mxu0 %v81
    %1021 = vmatpush1.msra.mxu0 %v80
    %1022 = vmatprep.subr.mxu0 %v85
    %1023 = vmatpush1.msra.mxu0 %v84
    %1024 = vmatprep.subr.mxu0 %v89
    %1025 = vmatpush1.msra.mxu0 %v88
    %1026 = vmatprep.subr.mxu0 %v93
    %1027 = vmatpush1.msra.mxu0 %v92
    %1028 = vmatprep.subr.mxu0 %v97
    %1029 = vmatpush1.msra.mxu0 %v96
    %1030 = vmatprep.subr.mxu0 %v101
    %1031 = vmatpush1.msra.mxu0 %v100
    %1032 = vmatprep.subr.mxu0 %v105
    %1033 = vmatpush1.msra.mxu0 %v104
    %1034 = vmatprep.subr.mxu0 %v109
    %1035 = vmatpush1.msra.mxu0 %v108
    %1036 = vmatprep.subr.mxu0 %v113
    %1037 = vmatpush1.msra.mxu0 %v112
    %1038 = vmatprep.subr.mxu0 %v117
    %1039 = vmatpush1.msra.mxu0 %v116
    %1040 = vmatprep.subr.mxu0 %v121
    %1041 = vmatpush1.msra.mxu0 %v120
    %1042 = vmatprep.subr.mxu0 %v125
    %1043 = vmatpush1.msra.mxu0 %v124
    %1044 = vmatprep.subr.mxu0 0.0
    %1045 = vmatpush1.msra.mxu0 0.0
    %1046 = vmatprep.subr.mxu0 0.0
    %1047 = vmatpush1.msra.mxu0 0.0
    %1048 = vmatprep.subr.mxu0 0.0
    %1049 = vmatpush1.msra.mxu0 0.0
    %1050 = vmatprep.subr.mxu0 0.0
    %1051 = vmatpush1.msra.mxu0 0.0
    %1052 = vmatprep.subr.mxu0 0.0
    %1053 = vmatpush1.msra.mxu0 0.0
    %1054 = vmatprep.subr.mxu0 0.0
    %1055 = vmatpush1.msra.mxu0 0.0
    %1056 = vmatprep.subr.mxu0 0.0
    %1057 = vmatpush1.msra.mxu0 0.0
    %1058 = vmatprep.subr.mxu0 0.0
    %1059 = vmatpush1.msra.mxu0 0.0
    %1060 = vmatprep.subr.mxu0 0.0
    %1061 = vmatpush1.msra.mxu0 0.0
    %1062 = vmatprep.subr.mxu0 0.0
    %1063 = vmatpush1.msra.mxu0 0.0
    %1064 = vmatprep.subr.mxu0 0.0
    %1065 = vmatpush1.msra.mxu0 0.0
    %1066 = vmatprep.subr.mxu0 0.0
    %1067 = vmatpush1.msra.mxu0 0.0
    %1068 = vmatprep.subr.mxu0 0.0
    %1069 = vmatpush1.msra.mxu0 0.0
    %1070 = vmatprep.subr.mxu0 0.0
    %1071 = vmatpush1.msra.mxu0 0.0
    %1072 = vmatprep.subr.mxu0 0.0
    %1073 = vmatpush1.msra.mxu0 0.0
    %1074 = vmatprep.subr.mxu0 0.0
    %1075 = vmatpush1.msra.mxu0 0.0
    %1076 = vmatprep.mubr.f32.mxu0 0.0
    %1077 = vmatmul.mubr.f32.gmra.mrb[0].mxu0 %v773
    %v1078 = vpop.f32.mrb[0].mxu0
    %v1079 = vadd.f32 0.0, %v1078
    %v1080 = vpop.f32.mrb[0].mxu0
    %v1081 = vadd.f32 0.0, %v1080
    %1082 = vdwg.mxu0
    %v1083 = vadd.f32 %v937, %v1008
    %v1084 = vadd.f32 %v938, %v1010
    %v1085 = vadd.f32 %v939, %v1079
    %v1086 = vadd.f32 %v940, %v1081
    %v1087 = vmul.f32 %v1083, 0.5
    %v1088 = vtanh.pop %v1087
    %v1089 = vmul.f32 %v1088, 0.5
    %v1090 = vadd.f32 %v1089, 0.5
    %v1091 = vmul.f32 %v1084, 0.5
    %v1092 = vtanh.pop %v1091
    %v1093 = vmul.f32 %v1092, 0.5
    %v1094 = vadd.f32 %v1093, 0.5
    %v1095 = vtanh.pop %v1085
    %v1096 = vmul.f32 %v1086, 0.5
    %v1097 = vtanh.pop %v1096
    %v1098 = vmul.f32 %v1097, 0.5
    %v1099 = vadd.f32 %v1098, 0.5
    %v1100 = vmul.f32 %v1094, %v771
    %v1101 = vmul.f32 %v1090, %v1095
    %v1102 = vadd.f32 %v1100, %v1101
    %v1103 = vtanh.pop %v1102
    %v1104 = vmul.f32 %v1099, %v1103
    %1105 = vmatprep.subr.mxu0 %v127
    %1106 = vmatpush1.msra.mxu0 %v126
    %1107 = vmatprep.subr.mxu0 %v131
    %1108 = vmatpush1.msra.mxu0 %v130
    %1109 = vmatprep.subr.mxu0 %v135
    %1110 = vmatpush1.msra.mxu0 %v134
    %1111 = vmatprep.subr.mxu0 %v139
    %1112 = vmatpush1.msra.mxu0 %v138
    %1113 = vmatprep.subr.mxu0 %v143
    %1114 = vmatpush1.msra.mxu0 %v142
    %1115 = vmatprep.subr.mxu0 %v147
    %1116 = vmatpush1.msra.mxu0 %v146
    %1117 = vmatprep.subr.mxu0 %v151
    %1118 = vmatpush1.msra.mxu0 %v150
    %1119 = vmatprep.subr.mxu0 %v155
    %1120 = vmatpush1.msra.mxu0 %v154
    %1121 = vmatprep.subr.mxu0 %v159
    %1122 = vmatpush1.msra.mxu0 %v158
    %1123 = vmatprep.subr.mxu0 %v163
    %1124 = vmatpush1.msra.mxu0 %v162
    %1125 = vmatprep.subr.mxu0 %v167
    %1126 = vmatpush1.msra.mxu0 %v166
    %1127 = vmatprep.subr.mxu0 %v171
    %1128 = vmatpush1.msra.mxu0 %v170
    %1129 = vmatprep.subr.mxu0 %v175
    %1130 = vmatpush1.msra.mxu0 %v174
    %1131 = vmatprep.subr.mxu0 %v179
    %1132 = vmatpush1.msra.mxu0 %v178
    %1133 = vmatprep.subr.mxu0 %v183
    %1134 = vmatpush1.msra.mxu0 %v182
    %1135 = vmatprep.subr.mxu0 %v187
    %1136 = vmatpush1.msra.mxu0 %v186
    %1137 = vmatprep.subr.mxu0 %v191
    %1138 = vmatpush1.msra.mxu0 %v190
    %1139 = vmatprep.subr.mxu0 %v195
    %1140 = vmatpush1.msra.mxu0 %v194
    %1141 = vmatprep.subr.mxu0 %v199
    %1142 = vmatpush1.msra.mxu0 %v198
    %1143 = vmatprep.subr.mxu0 %v203
    %1144 = vmatpush1.msra.mxu0 %v202
    %1145 = vmatprep.subr.mxu0 %v207
    %1146 = vmatpush1.msra.mxu0 %v206
    %1147 = vmatprep.subr.mxu0 %v211
    %1148 = vmatpush1.msra.mxu0 %v210
    %1149 = vmatprep.subr.mxu0 %v215
    %1150 = vmatpush1.msra.mxu0 %v214
    %1151 = vmatprep.subr.mxu0 %v219
    %1152 = vmatpush1.msra.mxu0 %v218
    %1153 = vmatprep.subr.mxu0 %v223
    %1154 = vmatpush1.msra.mxu0 %v222
    %1155 = vmatprep.subr.mxu0 %v227
    %1156 = vmatpush1.msra.mxu0 %v226
    %1157 = vmatprep.subr.mxu0 %v231
    %1158 = vmatpush1.msra.mxu0 %v230
    %1159 = vmatprep.subr.mxu0 %v235
    %1160 = vmatpush1.msra.mxu0 %v234
    %1161 = vmatprep.subr.mxu0 %v239
    %1162 = vmatpush1.msra.mxu0 %v238
    %1163 = vmatprep.subr.mxu0 %v243
    %1164 = vmatpush1.msra.mxu0 %v242
    %1165 = vmatprep.subr.mxu0 %v247
    %1166 = vmatpush1.msra.mxu0 %v246
    %1167 = vmatprep.subr.mxu0 %v251
    %1168 = vmatpush1.msra.mxu0 %v250
    %1169 = vmatprep.mubr.f32.mxu0 %v933
    %1170 = vmatmul.mubr.f32.gmra.mrb[0].mxu0 %v1104
    %v1171 = vpop.f32.mrb[0].mxu0
    %v1172 = vadd.f32 %v259, %v1171
    %v1173 = vpop.f32.mrb[0].mxu0
    %v1174 = vadd.f32 %v263, %v1173
    %1175 = vdwg.mxu0
    %1176 = vmatprep.subr.mxu0 %v129
    %1177 = vmatpush1.msra.mxu0 %v128
    %1178 = vmatprep.subr.mxu0 %v133
    %1179 = vmatpush1.msra.mxu0 %v132
    %1180 = vmatprep.subr.mxu0 %v137
    %1181 = vmatpush1.msra.mxu0 %v136
    %1182 = vmatprep.subr.mxu0 %v141
    %1183 = vmatpush1.msra.mxu0 %v140
    %1184 = vmatprep.subr.mxu0 %v145
    %1185 = vmatpush1.msra.mxu0 %v144
    %1186 = vmatprep.subr.mxu0 %v149
    %1187 = vmatpush1.msra.mxu0 %v148
    %1188 = vmatprep.subr.mxu0 %v153
    %1189 = vmatpush1.msra.mxu0 %v152
    %1190 = vmatprep.subr.mxu0 %v157
    %1191 = vmatpush1.msra.mxu0 %v156
    %1192 = vmatprep.subr.mxu0 %v161
    %1193 = vmatpush1.msra.mxu0 %v160
    %1194 = vmatprep.subr.mxu0 %v165
    %1195 = vmatpush1.msra.mxu0 %v164
    %1196 = vmatprep.subr.mxu0 %v169
    %1197 = vmatpush1.msra.mxu0 %v168
    %1198 = vmatprep.subr.mxu0 %v173
    %1199 = vmatpush1.msra.mxu0 %v172
    %1200 = vmatprep.subr.mxu0 %v177
    %1201 = vmatpush1.msra.mxu0 %v176
    %1202 = vmatprep.subr.mxu0 %v181
    %1203 = vmatpush1.msra.mxu0 %v180
    %1204 = vmatprep.subr.mxu0 %v185
    %1205 = vmatpush1.msra.mxu0 %v184
    %1206 = vmatprep.subr.mxu0 %v189
    %1207 = vmatpush1.msra.mxu0 %v188
    %1208 = vmatprep.subr.mxu0 %v193
    %1209 = vmatpush1.msra.mxu0 %v192
    %1210 = vmatprep.subr.mxu0 %v197
    %1211 = vmatpush1.msra.mxu0 %v196
    %1212 = vmatprep.subr.mxu0 %v201
    %1213 = vmatpush1.msra.mxu0 %v200
    %1214 = vmatprep.subr.mxu0 %v205
    %1215 = vmatpush1.msra.mxu0 %v204
    %1216 = vmatprep.subr.mxu0 %v209
    %1217 = vmatpush1.msra.mxu0 %v208
    %1218 = vmatprep.subr.mxu0 %v213
    %1219 = vmatpush1.msra.mxu0 %v212
    %1220 = vmatprep.subr.mxu0 %v217
    %1221 = vmatpush1.msra.mxu0 %v216
    %1222 = vmatprep.subr.mxu0 %v221
    %1223 = vmatpush1.msra.mxu0 %v220
    %1224 = vmatprep.subr.mxu0 %v225
    %1225 = vmatpush1.msra.mxu0 %v224
    %1226 = vmatprep.subr.mxu0 %v229
    %1227 = vmatpush1.msra.mxu0 %v228
    %1228 = vmatprep.subr.mxu0 %v233
    %1229 = vmatpush1.msra.mxu0 %v232
    %1230 = vmatprep.subr.mxu0 %v237
    %1231 = vmatpush1.msra.mxu0 %v236
    %1232 = vmatprep.subr.mxu0 %v241
    %1233 = vmatpush1.msra.mxu0 %v240
    %1234 = vmatprep.subr.mxu0 %v245
    %1235 = vmatpush1.msra.mxu0 %v244
    %1236 = vmatprep.subr.mxu0 %v249
    %1237 = vmatpush1.msra.mxu0 %v248
    %1238 = vmatprep.subr.mxu0 %v253
    %1239 = vmatpush1.msra.mxu0 %v252
    %1240 = vmatprep.mubr.f32.mxu0 %v933
    %1241 = vmatmul.mubr.f32.gmra.mrb[0].mxu0 %v1104
    %v1242 = vpop.f32.mrb[0].mxu0
    %v1243 = vadd.f32 %v267, %v1242
    %v1244 = vpop.f32.mrb[0].mxu0
    %v1245 = vadd.f32 %v271, %v1244
    %1246 = vdwg.mxu0
    %v1247 = vmul.f32 %v1172, 0.5
    %v1248 = vtanh.pop %v1247
    %v1249 = vmul.f32 %v1248, 0.5
    %v1250 = vadd.f32 %v1249, 0.5
    %v1251 = vmul.f32 %v1174, 0.5
    %v1252 = vtanh.pop %v1251
    %v1253 = vmul.f32 %v1252, 0.5
    %v1254 = vadd.f32 %v1253, 0.5
    %v1255 = vtanh.pop %v1243
    %v1256 = vmul.f32 %v1245, 0.5
    %v1257 = vtanh.pop %v1256
    %v1258 = vmul.f32 %v1257, 0.5
    %v1259 = vadd.f32 %v1258, 0.5
    %v1260 = vmul.f32 %v1254, %v931
    %v1261 = vmul.f32 %v1250, %v1255
    %v1262 = vadd.f32 %v1260, %v1261
    %v1263 = vtanh.pop %v1262
    %v1264 = vmul.f32 %v1259, %v1263
    %s1265 = scalar_lea.vmem [#allocation8], 16
    %1266 = vst [vmem:[%s1265] sm:$0xff] %v1264
    %s1267 = scalar_lea.vmem [#allocation2], 96
    %v1268 = vld [vmem:[%s1267] sm:$0xff]
    %v1269 = vld [vmem:[%s1267 + $0x8] sm:$0xff]
    %v1270 = vld [vmem:[%s1267 + $0x10] sm:$0xff]
    %v1271 = vld [vmem:[%s1267 + $0x18] sm:$0xff]
    %1272 = vmatprep.subr.mxu0 %v63
    %1273 = vmatpush1.msra.mxu0 %v62
    %1274 = vmatprep.subr.mxu0 %v67
    %1275 = vmatpush1.msra.mxu0 %v66
    %1276 = vmatprep.subr.mxu0 %v71
    %1277 = vmatpush1.msra.mxu0 %v70
    %1278 = vmatprep.subr.mxu0 %v75
    %1279 = vmatpush1.msra.mxu0 %v74
    %1280 = vmatprep.subr.mxu0 %v79
    %1281 = vmatpush1.msra.mxu0 %v78
    %1282 = vmatprep.subr.mxu0 %v83
    %1283 = vmatpush1.msra.mxu0 %v82
    %1284 = vmatprep.subr.mxu0 %v87
    %1285 = vmatpush1.msra.mxu0 %v86
    %1286 = vmatprep.subr.mxu0 %v91
    %1287 = vmatpush1.msra.mxu0 %v90
    %1288 = vmatprep.subr.mxu0 %v95
    %1289 = vmatpush1.msra.mxu0 %v94
    %1290 = vmatprep.subr.mxu0 %v99
    %1291 = vmatpush1.msra.mxu0 %v98
    %1292 = vmatprep.subr.mxu0 %v103
    %1293 = vmatpush1.msra.mxu0 %v102
    %1294 = vmatprep.subr.mxu0 %v107
    %1295 = vmatpush1.msra.mxu0 %v106
    %1296 = vmatprep.subr.mxu0 %v111
    %1297 = vmatpush1.msra.mxu0 %v110
    %1298 = vmatprep.subr.mxu0 %v115
    %1299 = vmatpush1.msra.mxu0 %v114
    %1300 = vmatprep.subr.mxu0 %v119
    %1301 = vmatpush1.msra.mxu0 %v118
    %1302 = vmatprep.subr.mxu0 %v123
    %1303 = vmatpush1.msra.mxu0 %v122
    %1304 = vmatprep.subr.mxu0 0.0
    %1305 = vmatpush1.msra.mxu0 0.0
    %1306 = vmatprep.subr.mxu0 0.0
    %1307 = vmatpush1.msra.mxu0 0.0
    %1308 = vmatprep.subr.mxu0 0.0
    %1309 = vmatpush1.msra.mxu0 0.0
    %1310 = vmatprep.subr.mxu0 0.0
    %1311 = vmatpush1.msra.mxu0 0.0
    %1312 = vmatprep.subr.mxu0 0.0
    %1313 = vmatpush1.msra.mxu0 0.0
    %1314 = vmatprep.subr.mxu0 0.0
    %1315 = vmatpush1.msra.mxu0 0.0
    %1316 = vmatprep.subr.mxu0 0.0
    %1317 = vmatpush1.msra.mxu0 0.0
    %1318 = vmatprep.subr.mxu0 0.0
    %1319 = vmatpush1.msra.mxu0 0.0
    %1320 = vmatprep.subr.mxu0 0.0
    %1321 = vmatpush1.msra.mxu0 0.0
    %1322 = vmatprep.subr.mxu0 0.0
    %1323 = vmatpush1.msra.mxu0 0.0
    %1324 = vmatprep.subr.mxu0 0.0
    %1325 = vmatpush1.msra.mxu0 0.0
    %1326 = vmatprep.subr.mxu0 0.0
    %1327 = vmatpush1.msra.mxu0 0.0
    %1328 = vmatprep.subr.mxu0 0.0
    %1329 = vmatpush1.msra.mxu0 0.0
    %1330 = vmatprep.subr.mxu0 0.0
    %1331 = vmatpush1.msra.mxu0 0.0
    %1332 = vmatprep.subr.mxu0 0.0
    %1333 = vmatpush1.msra.mxu0 0.0
    %1334 = vmatprep.subr.mxu0 0.0
    %1335 = vmatpush1.msra.mxu0 0.0
    %1336 = vmatprep.mubr.f32.mxu0 0.0
    %1337 = vmatmul.mubr.f32.gmra.mrb[0].mxu0 %v1104
    %v1338 = vpop.f32.mrb[0].mxu0
    %v1339 = vadd.f32 0.0, %v1338
    %v1340 = vpop.f32.mrb[0].mxu0
    %v1341 = vadd.f32 0.0, %v1340
    %1342 = vdwg.mxu0
    %1343 = vmatprep.subr.mxu0 %v65
    %1344 = vmatpush1.msra.mxu0 %v64
    %1345 = vmatprep.subr.mxu0 %v69
    %1346 = vmatpush1.msra.mxu0 %v68
    %1347 = vmatprep.subr.mxu0 %v73
    %1348 = vmatpush1.msra.mxu0 %v72
    %1349 = vmatprep.subr.mxu0 %v77
    %1350 = vmatpush1.msra.mxu0 %v76
    %1351 = vmatprep.subr.mxu0 %v81
    %1352 = vmatpush1.msra.mxu0 %v80
    %1353 = vmatprep.subr.mxu0 %v85
    %1354 = vmatpush1.msra.mxu0 %v84
    %1355 = vmatprep.subr.mxu0 %v89
    %1356 = vmatpush1.msra.mxu0 %v88
    %1357 = vmatprep.subr.mxu0 %v93
    %1358 = vmatpush1.msra.mxu0 %v92
    %1359 = vmatprep.subr.mxu0 %v97
    %1360 = vmatpush1.msra.mxu0 %v96
    %1361 = vmatprep.subr.mxu0 %v101
    %1362 = vmatpush1.msra.mxu0 %v100
    %1363 = vmatprep.subr.mxu0 %v105
    %1364 = vmatpush1.msra.mxu0 %v104
    %1365 = vmatprep.subr.mxu0 %v109
    %1366 = vmatpush1.msra.mxu0 %v108
    %1367 = vmatprep.subr.mxu0 %v113
    %1368 = vmatpush1.msra.mxu0 %v112
    %1369 = vmatprep.subr.mxu0 %v117
    %1370 = vmatpush1.msra.mxu0 %v116
    %1371 = vmatprep.subr.mxu0 %v121
    %1372 = vmatpush1.msra.mxu0 %v120
    %1373 = vmatprep.subr.mxu0 %v125
    %1374 = vmatpush1.msra.mxu0 %v124
    %1375 = vmatprep.subr.mxu0 0.0
    %1376 = vmatpush1.msra.mxu0 0.0
    %1377 = vmatprep.subr.mxu0 0.0
    %1378 = vmatpush1.msra.mxu0 0.0
    %1379 = vmatprep.subr.mxu0 0.0
    %1380 = vmatpush1.msra.mxu0 0.0
    %1381 = vmatprep.subr.mxu0 0.0
    %1382 = vmatpush1.msra.mxu0 0.0
    %1383 = vmatprep.subr.mxu0 0.0
    %1384 = vmatpush1.msra.mxu0 0.0
    %1385 = vmatprep.subr.mxu0 0.0
    %1386 = vmatpush1.msra.mxu0 0.0
    %1387 = vmatprep.subr.mxu0 0.0
    %1388 = vmatpush1.msra.mxu0 0.0
    %1389 = vmatprep.subr.mxu0 0.0
    %1390 = vmatpush1.msra.mxu0 0.0
    %1391 = vmatprep.subr.mxu0 0.0
    %1392 = vmatpush1.msra.mxu0 0.0
    %1393 = vmatprep.subr.mxu0 0.0
    %1394 = vmatpush1.msra.mxu0 0.0
    %1395 = vmatprep.subr.mxu0 0.0
    %1396 = vmatpush1.msra.mxu0 0.0
    %1397 = vmatprep.subr.mxu0 0.0
    %1398 = vmatpush1.msra.mxu0 0.0
    %1399 = vmatprep.subr.mxu0 0.0
    %1400 = vmatpush1.msra.mxu0 0.0
    %1401 = vmatprep.subr.mxu0 0.0
    %1402 = vmatpush1.msra.mxu0 0.0
    %1403 = vmatprep.subr.mxu0 0.0
    %1404 = vmatpush1.msra.mxu0 0.0
    %1405 = vmatprep.subr.mxu0 0.0
    %1406 = vmatpush1.msra.mxu0 0.0
    %1407 = vmatprep.mubr.f32.mxu0 0.0
    %1408 = vmatmul.mubr.f32.gmra.mrb[0].mxu0 %v1104
    %v1409 = vpop.f32.mrb[0].mxu0
    %v1410 = vadd.f32 0.0, %v1409
    %v1411 = vpop.f32.mrb[0].mxu0
    %v1412 = vadd.f32 0.0, %v1411
    %1413 = vdwg.mxu0
    %v1414 = vadd.f32 %v1268, %v1339
    %v1415 = vadd.f32 %v1269, %v1341
    %v1416 = vadd.f32 %v1270, %v1410
    %v1417 = vadd.f32 %v1271, %v1412
    %v1418 = vmul.f32 %v1414, 0.5
    %v1419 = vtanh.pop %v1418
    %v1420 = vmul.f32 %v1419, 0.5
    %v1421 = vadd.f32 %v1420, 0.5
    %v1422 = vmul.f32 %v1415, 0.5
    %v1423 = vtanh.pop %v1422
    %v1424 = vmul.f32 %v1423, 0.5
    %v1425 = vadd.f32 %v1424, 0.5
    %v1426 = vtanh.pop %v1416
    %v1427 = vmul.f32 %v1417, 0.5
    %v1428 = vtanh.pop %v1427
    %v1429 = vmul.f32 %v1428, 0.5
    %v1430 = vadd.f32 %v1429, 0.5
    %v1431 = vmul.f32 %v1425, %v1102
    %v1432 = vmul.f32 %v1421, %v1426
    %v1433 = vadd.f32 %v1431, %v1432
    %v1434 = vtanh.pop %v1433
    %v1435 = vmul.f32 %v1430, %v1434
    %1436 = vmatprep.subr.mxu0 %v127
    %1437 = vmatpush1.msra.mxu0 %v126
    %1438 = vmatprep.subr.mxu0 %v131
    %1439 = vmatpush1.msra.mxu0 %v130
    %1440 = vmatprep.subr.mxu0 %v135
    %1441 = vmatpush1.msra.mxu0 %v134
    %1442 = vmatprep.subr.mxu0 %v139
    %1443 = vmatpush1.msra.mxu0 %v138
    %1444 = vmatprep.subr.mxu0 %v143
    %1445 = vmatpush1.msra.mxu0 %v142
    %1446 = vmatprep.subr.mxu0 %v147
    %1447 = vmatpush1.msra.mxu0 %v146
    %1448 = vmatprep.subr.mxu0 %v151
    %1449 = vmatpush1.msra.mxu0 %v150
    %1450 = vmatprep.subr.mxu0 %v155
    %1451 = vmatpush1.msra.mxu0 %v154
    %1452 = vmatprep.subr.mxu0 %v159
    %1453 = vmatpush1.msra.mxu0 %v158
    %1454 = vmatprep.subr.mxu0 %v163
    %1455 = vmatpush1.msra.mxu0 %v162
    %1456 = vmatprep.subr.mxu0 %v167
    %1457 = vmatpush1.msra.mxu0 %v166
    %1458 = vmatprep.subr.mxu0 %v171
    %1459 = vmatpush1.msra.mxu0 %v170
    %1460 = vmatprep.subr.mxu0 %v175
    %1461 = vmatpush1.msra.mxu0 %v174
    %1462 = vmatprep.subr.mxu0 %v179
    %1463 = vmatpush1.msra.mxu0 %v178
    %1464 = vmatprep.subr.mxu0 %v183
    %1465 = vmatpush1.msra.mxu0 %v182
    %1466 = vmatprep.subr.mxu0 %v187
    %1467 = vmatpush1.msra.mxu0 %v186
    %1468 = vmatprep.subr.mxu0 %v191
    %1469 = vmatpush1.msra.mxu0 %v190
    %1470 = vmatprep.subr.mxu0 %v195
    %1471 = vmatpush1.msra.mxu0 %v194
    %1472 = vmatprep.subr.mxu0 %v199
    %1473 = vmatpush1.msra.mxu0 %v198
    %1474 = vmatprep.subr.mxu0 %v203
    %1475 = vmatpush1.msra.mxu0 %v202
    %1476 = vmatprep.subr.mxu0 %v207
    %1477 = vmatpush1.msra.mxu0 %v206
    %1478 = vmatprep.subr.mxu0 %v211
    %1479 = vmatpush1.msra.mxu0 %v210
    %1480 = vmatprep.subr.mxu0 %v215
    %1481 = vmatpush1.msra.mxu0 %v214
    %1482 = vmatprep.subr.mxu0 %v219
    %1483 = vmatpush1.msra.mxu0 %v218
    %1484 = vmatprep.subr.mxu0 %v223
    %1485 = vmatpush1.msra.mxu0 %v222
    %1486 = vmatprep.subr.mxu0 %v227
    %1487 = vmatpush1.msra.mxu0 %v226
    %1488 = vmatprep.subr.mxu0 %v231
    %1489 = vmatpush1.msra.mxu0 %v230
    %1490 = vmatprep.subr.mxu0 %v235
    %1491 = vmatpush1.msra.mxu0 %v234
    %1492 = vmatprep.subr.mxu0 %v239
    %1493 = vmatpush1.msra.mxu0 %v238
    %1494 = vmatprep.subr.mxu0 %v243
    %1495 = vmatpush1.msra.mxu0 %v242
    %1496 = vmatprep.subr.mxu0 %v247
    %1497 = vmatpush1.msra.mxu0 %v246
    %1498 = vmatprep.subr.mxu0 %v251
    %1499 = vmatpush1.msra.mxu0 %v250
    %1500 = vmatprep.mubr.f32.mxu0 %v1264
    %1501 = vmatmul.mubr.f32.gmra.mrb[0].mxu0 %v1435
    %v1502 = vpop.f32.mrb[0].mxu0
    %v1503 = vadd.f32 %v259, %v1502
    %v1504 = vpop.f32.mrb[0].mxu0
    %v1505 = vadd.f32 %v263, %v1504
    %1506 = vdwg.mxu0
    %1507 = vmatprep.subr.mxu0 %v129
    %1508 = vmatpush1.msra.mxu0 %v128
    %1509 = vmatprep.subr.mxu0 %v133
    %1510 = vmatpush1.msra.mxu0 %v132
    %1511 = vmatprep.subr.mxu0 %v137
    %1512 = vmatpush1.msra.mxu0 %v136
    %1513 = vmatprep.subr.mxu0 %v141
    %1514 = vmatpush1.msra.mxu0 %v140
    %1515 = vmatprep.subr.mxu0 %v145
    %1516 = vmatpush1.msra.mxu0 %v144
    %1517 = vmatprep.subr.mxu0 %v149
    %1518 = vmatpush1.msra.mxu0 %v148
    %1519 = vmatprep.subr.mxu0 %v153
    %1520 = vmatpush1.msra.mxu0 %v152
    %1521 = vmatprep.subr.mxu0 %v157
    %1522 = vmatpush1.msra.mxu0 %v156
    %1523 = vmatprep.subr.mxu0 %v161
    %1524 = vmatpush1.msra.mxu0 %v160
    %1525 = vmatprep.subr.mxu0 %v165
    %1526 = vmatpush1.msra.mxu0 %v164
    %1527 = vmatprep.subr.mxu0 %v169
    %1528 = vmatpush1.msra.mxu0 %v168
    %1529 = vmatprep.subr.mxu0 %v173
    %1530 = vmatpush1.msra.mxu0 %v172
    %1531 = vmatprep.subr.mxu0 %v177
    %1532 = vmatpush1.msra.mxu0 %v176
    %1533 = vmatprep.subr.mxu0 %v181
    %1534 = vmatpush1.msra.mxu0 %v180
    %1535 = vmatprep.subr.mxu0 %v185
    %1536 = vmatpush1.msra.mxu0 %v184
    %1537 = vmatprep.subr.mxu0 %v189
    %1538 = vmatpush1.msra.mxu0 %v188
    %1539 = vmatprep.subr.mxu0 %v193
    %1540 = vmatpush1.msra.mxu0 %v192
    %1541 = vmatprep.subr.mxu0 %v197
    %1542 = vmatpush1.msra.mxu0 %v196
    %1543 = vmatprep.subr.mxu0 %v201
    %1544 = vmatpush1.msra.mxu0 %v200
    %1545 = vmatprep.subr.mxu0 %v205
    %1546 = vmatpush1.msra.mxu0 %v204
    %1547 = vmatprep.subr.mxu0 %v209
    %1548 = vmatpush1.msra.mxu0 %v208
    %1549 = vmatprep.subr.mxu0 %v213
    %1550 = vmatpush1.msra.mxu0 %v212
    %1551 = vmatprep.subr.mxu0 %v217
    %1552 = vmatpush1.msra.mxu0 %v216
    %1553 = vmatprep.subr.mxu0 %v221
    %1554 = vmatpush1.msra.mxu0 %v220
    %1555 = vmatprep.subr.mxu0 %v225
    %1556 = vmatpush1.msra.mxu0 %v224
    %1557 = vmatprep.subr.mxu0 %v229
    %1558 = vmatpush1.msra.mxu0 %v228
    %1559 = vmatprep.subr.mxu0 %v233
    %1560 = vmatpush1.msra.mxu0 %v232
    %1561 = vmatprep.subr.mxu0 %v237
    %1562 = vmatpush1.msra.mxu0 %v236
    %1563 = vmatprep.subr.mxu0 %v241
    %1564 = vmatpush1.msra.mxu0 %v240
    %1565 = vmatprep.subr.mxu0 %v245
    %1566 = vmatpush1.msra.mxu0 %v244
    %1567 = vmatprep.subr.mxu0 %v249
    %1568 = vmatpush1.msra.mxu0 %v248
    %1569 = vmatprep.subr.mxu0 %v253
    %1570 = vmatpush1.msra.mxu0 %v252
    %1571 = vmatprep.mubr.f32.mxu0 %v1264
    %1572 = vmatmul.mubr.f32.gmra.mrb[0].mxu0 %v1435
    %v1573 = vpop.f32.mrb[0].mxu0
    %v1574 = vadd.f32 %v267, %v1573
    %v1575 = vpop.f32.mrb[0].mxu0
    %v1576 = vadd.f32 %v271, %v1575
    %1577 = vdwg.mxu0
    %v1578 = vmul.f32 %v1503, 0.5
    %v1579 = vtanh.pop %v1578
    %v1580 = vmul.f32 %v1579, 0.5
    %v1581 = vadd.f32 %v1580, 0.5
    %v1582 = vmul.f32 %v1505, 0.5
    %v1583 = vtanh.pop %v1582
    %v1584 = vmul.f32 %v1583, 0.5
    %v1585 = vadd.f32 %v1584, 0.5
    %v1586 = vtanh.pop %v1574
    %v1587 = vmul.f32 %v1576, 0.5
    %v1588 = vtanh.pop %v1587
    %v1589 = vmul.f32 %v1588, 0.5
    %v1590 = vadd.f32 %v1589, 0.5
    %v1591 = vmul.f32 %v1585, %v1262
    %v1592 = vmul.f32 %v1581, %v1586
    %v1593 = vadd.f32 %v1591, %v1592
    %v1594 = vtanh.pop %v1593
    %v1595 = vmul.f32 %v1590, %v1594
    %s1596 = scalar_lea.vmem [#allocation8], 24
    %1597 = vst [vmem:[%s1596] sm:$0xff] %v1595
    %s1598 = scalar_lea.vmem [#allocation2], 128
    %v1599 = vld [vmem:[%s1598] sm:$0xff]
    %v1600 = vld [vmem:[%s1598 + $0x8] sm:$0xff]
    %v1601 = vld [vmem:[%s1598 + $0x10] sm:$0xff]
    %v1602 = vld [vmem:[%s1598 + $0x18] sm:$0xff]
    %1603 = vmatprep.subr.mxu0 %v63
    %1604 = vmatpush1.msra.mxu0 %v62
    %1605 = vmatprep.subr.mxu0 %v67
    %1606 = vmatpush1.msra.mxu0 %v66
    %1607 = vmatprep.subr.mxu0 %v71
    %1608 = vmatpush1.msra.mxu0 %v70
    %1609 = vmatprep.subr.mxu0 %v75
    %1610 = vmatpush1.msra.mxu0 %v74
    %1611 = vmatprep.subr.mxu0 %v79
    %1612 = vmatpush1.msra.mxu0 %v78
    %1613 = vmatprep.subr.mxu0 %v83
    %1614 = vmatpush1.msra.mxu0 %v82
    %1615 = vmatprep.subr.mxu0 %v87
    %1616 = vmatpush1.msra.mxu0 %v86
    %1617 = vmatprep.subr.mxu0 %v91
    %1618 = vmatpush1.msra.mxu0 %v90
    %1619 = vmatprep.subr.mxu0 %v95
    %1620 = vmatpush1.msra.mxu0 %v94
    %1621 = vmatprep.subr.mxu0 %v99
    %1622 = vmatpush1.msra.mxu0 %v98
    %1623 = vmatprep.subr.mxu0 %v103
    %1624 = vmatpush1.msra.mxu0 %v102
    %1625 = vmatprep.subr.mxu0 %v107
    %1626 = vmatpush1.msra.mxu0 %v106
    %1627 = vmatprep.subr.mxu0 %v111
    %1628 = vmatpush1.msra.mxu0 %v110
    %1629 = vmatprep.subr.mxu0 %v115
    %1630 = vmatpush1.msra.mxu0 %v114
    %1631 = vmatprep.subr.mxu0 %v119
    %1632 = vmatpush1.msra.mxu0 %v118
    %1633 = vmatprep.subr.mxu0 %v123
    %1634 = vmatpush1.msra.mxu0 %v122
    %1635 = vmatprep.subr.mxu0 0.0
    %1636 = vmatpush1.msra.mxu0 0.0
    %1637 = vmatprep.subr.mxu0 0.0
    %1638 = vmatpush1.msra.mxu0 0.0
    %1639 = vmatprep.subr.mxu0 0.0
    %1640 = vmatpush1.msra.mxu0 0.0
    %1641 = vmatprep.subr.mxu0 0.0
    %1642 = vmatpush1.msra.mxu0 0.0
    %1643 = vmatprep.subr.mxu0 0.0
    %1644 = vmatpush1.msra.mxu0 0.0
    %1645 = vmatprep.subr.mxu0 0.0
    %1646 = vmatpush1.msra.mxu0 0.0
    %1647 = vmatprep.subr.mxu0 0.0
    %1648 = vmatpush1.msra.mxu0 0.0
    %1649 = vmatprep.subr.mxu0 0.0
    %1650 = vmatpush1.msra.mxu0 0.0
    %1651 = vmatprep.subr.mxu0 0.0
    %1652 = vmatpush1.msra.mxu0 0.0
    %1653 = vmatprep.subr.mxu0 0.0
    %1654 = vmatpush1.msra.mxu0 0.0
    %1655 = vmatprep.subr.mxu0 0.0
    %1656 = vmatpush1.msra.mxu0 0.0
    %1657 = vmatprep.subr.mxu0 0.0
    %1658 = vmatpush1.msra.mxu0 0.0
    %1659 = vmatprep.subr.mxu0 0.0
    %1660 = vmatpush1.msra.mxu0 0.0
    %1661 = vmatprep.subr.mxu0 0.0
    %1662 = vmatpush1.msra.mxu0 0.0
    %1663 = vmatprep.subr.mxu0 0.0
    %1664 = vmatpush1.msra.mxu0 0.0
    %1665 = vmatprep.subr.mxu0 0.0
    %1666 = vmatpush1.msra.mxu0 0.0
    %1667 = vmatprep.mubr.f32.mxu0 0.0
    %1668 = vmatmul.mubr.f32.gmra.mrb[0].mxu0 %v1435
    %v1669 = vpop.f32.mrb[0].mxu0
    %v1670 = vadd.f32 0.0, %v1669
    %v1671 = vpop.f32.mrb[0].mxu0
    %v1672 = vadd.f32 0.0, %v1671
    %1673 = vdwg.mxu0
    %1674 = vmatprep.subr.mxu0 %v65
    %1675 = vmatpush1.msra.mxu0 %v64
    %1676 = vmatprep.subr.mxu0 %v69
    %1677 = vmatpush1.msra.mxu0 %v68
    %1678 = vmatprep.subr.mxu0 %v73
    %1679 = vmatpush1.msra.mxu0 %v72
    %1680 = vmatprep.subr.mxu0 %v77
    %1681 = vmatpush1.msra.mxu0 %v76
    %1682 = vmatprep.subr.mxu0 %v81
    %1683 = vmatpush1.msra.mxu0 %v80
    %1684 = vmatprep.subr.mxu0 %v85
    %1685 = vmatpush1.msra.mxu0 %v84
    %1686 = vmatprep.subr.mxu0 %v89
    %1687 = vmatpush1.msra.mxu0 %v88
    %1688 = vmatprep.subr.mxu0 %v93
    %1689 = vmatpush1.msra.mxu0 %v92
    %1690 = vmatprep.subr.mxu0 %v97
    %1691 = vmatpush1.msra.mxu0 %v96
    %1692 = vmatprep.subr.mxu0 %v101
    %1693 = vmatpush1.msra.mxu0 %v100
    %1694 = vmatprep.subr.mxu0 %v105
    %1695 = vmatpush1.msra.mxu0 %v104
    %1696 = vmatprep.subr.mxu0 %v109
    %1697 = vmatpush1.msra.mxu0 %v108
    %1698 = vmatprep.subr.mxu0 %v113
    %1699 = vmatpush1.msra.mxu0 %v112
    %1700 = vmatprep.subr.mxu0 %v117
    %1701 = vmatpush1.msra.mxu0 %v116
    %1702 = vmatprep.subr.mxu0 %v121
    %1703 = vmatpush1.msra.mxu0 %v120
    %1704 = vmatprep.subr.mxu0 %v125
    %1705 = vmatpush1.msra.mxu0 %v124
    %1706 = vmatprep.subr.mxu0 0.0
    %1707 = vmatpush1.msra.mxu0 0.0
    %1708 = vmatprep.subr.mxu0 0.0
    %1709 = vmatpush1.msra.mxu0 0.0
    %1710 = vmatprep.subr.mxu0 0.0
    %1711 = vmatpush1.msra.mxu0 0.0
    %1712 = vmatprep.subr.mxu0 0.0
    %1713 = vmatpush1.msra.mxu0 0.0
    %1714 = vmatprep.subr.mxu0 0.0
    %1715 = vmatpush1.msra.mxu0 0.0
    %1716 = vmatprep.subr.mxu0 0.0
    %1717 = vmatpush1.msra.mxu0 0.0
    %1718 = vmatprep.subr.mxu0 0.0
    %1719 = vmatpush1.msra.mxu0 0.0
    %1720 = vmatprep.subr.mxu0 0.0
    %1721 = vmatpush1.msra.mxu0 0.0
    %1722 = vmatprep.subr.mxu0 0.0
    %1723 = vmatpush1.msra.mxu0 0.0
    %1724 = vmatprep.subr.mxu0 0.0
    %1725 = vmatpush1.msra.mxu0 0.0
    %1726 = vmatprep.subr.mxu0 0.0
    %1727 = vmatpush1.msra.mxu0 0.0
    %1728 = vmatprep.subr.mxu0 0.0
    %1729 = vmatpush1.msra.mxu0 0.0
    %1730 = vmatprep.subr.mxu0 0.0
    %1731 = vmatpush1.msra.mxu0 0.0
    %1732 = vmatprep.subr.mxu0 0.0
    %1733 = vmatpush1.msra.mxu0 0.0
    %1734 = vmatprep.subr.mxu0 0.0
    %1735 = vmatpush1.msra.mxu0 0.0
    %1736 = vmatprep.subr.mxu0 0.0
    %1737 = vmatpush1.msra.mxu0 0.0
    %1738 = vmatprep.mubr.f32.mxu0 0.0
    %1739 = vmatmul.mubr.f32.gmra.mrb[0].mxu0 %v1435
    %v1740 = vpop.f32.mrb[0].mxu0
    %v1741 = vadd.f32 0.0, %v1740
    %v1742 = vpop.f32.mrb[0].mxu0
    %v1743 = vadd.f32 0.0, %v1742
    %1744 = vdwg.mxu0
    %v1745 = vadd.f32 %v1599, %v1670
    %v1746 = vadd.f32 %v1600, %v1672
    %v1747 = vadd.f32 %v1601, %v1741
    %v1748 = vadd.f32 %v1602, %v1743
    %v1749 = vmul.f32 %v1745, 0.5
    %v1750 = vtanh.pop %v1749
    %v1751 = vmul.f32 %v1750, 0.5
    %v1752 = vadd.f32 %v1751, 0.5
    %v1753 = vmul.f32 %v1746, 0.5
    %v1754 = vtanh.pop %v1753
    %v1755 = vmul.f32 %v1754, 0.5
    %v1756 = vadd.f32 %v1755, 0.5
    %v1757 = vtanh.pop %v1747
    %v1758 = vmul.f32 %v1748, 0.5
    %v1759 = vtanh.pop %v1758
    %v1760 = vmul.f32 %v1759, 0.5
    %v1761 = vadd.f32 %v1760, 0.5
    %v1762 = vmul.f32 %v1756, %v1433
    %v1763 = vmul.f32 %v1752, %v1757
    %v1764 = vadd.f32 %v1762, %v1763
    %v1765 = vtanh.pop %v1764
    %v1766 = vmul.f32 %v1761, %v1765
    %1767 = vmatprep.subr.mxu0 %v127
    %1768 = vmatpush1.msra.mxu0 %v126
    %1769 = vmatprep.subr.mxu0 %v131
    %1770 = vmatpush1.msra.mxu0 %v130
    %1771 = vmatprep.subr.mxu0 %v135
    %1772 = vmatpush1.msra.mxu0 %v134
    %1773 = vmatprep.subr.mxu0 %v139
    %1774 = vmatpush1.msra.mxu0 %v138
    %1775 = vmatprep.subr.mxu0 %v143
    %1776 = vmatpush1.msra.mxu0 %v142
    %1777 = vmatprep.subr.mxu0 %v147
    %1778 = vmatpush1.msra.mxu0 %v146
    %1779 = vmatprep.subr.mxu0 %v151
    %1780 = vmatpush1.msra.mxu0 %v150
    %1781 = vmatprep.subr.mxu0 %v155
    %1782 = vmatpush1.msra.mxu0 %v154
    %1783 = vmatprep.subr.mxu0 %v159
    %1784 = vmatpush1.msra.mxu0 %v158
    %1785 = vmatprep.subr.mxu0 %v163
    %1786 = vmatpush1.msra.mxu0 %v162
    %1787 = vmatprep.subr.mxu0 %v167
    %1788 = vmatpush1.msra.mxu0 %v166
    %1789 = vmatprep.subr.mxu0 %v171
    %1790 = vmatpush1.msra.mxu0 %v170
    %1791 = vmatprep.subr.mxu0 %v175
    %1792 = vmatpush1.msra.mxu0 %v174
    %1793 = vmatprep.subr.mxu0 %v179
    %1794 = vmatpush1.msra.mxu0 %v178
    %1795 = vmatprep.subr.mxu0 %v183
    %1796 = vmatpush1.msra.mxu0 %v182
    %1797 = vmatprep.subr.mxu0 %v187
    %1798 = vmatpush1.msra.mxu0 %v186
    %1799 = vmatprep.subr.mxu0 %v191
    %1800 = vmatpush1.msra.mxu0 %v190
    %1801 = vmatprep.subr.mxu0 %v195
    %1802 = vmatpush1.msra.mxu0 %v194
    %1803 = vmatprep.subr.mxu0 %v199
    %1804 = vmatpush1.msra.mxu0 %v198
    %1805 = vmatprep.subr.mxu0 %v203
    %1806 = vmatpush1.msra.mxu0 %v202
    %1807 = vmatprep.subr.mxu0 %v207
    %1808 = vmatpush1.msra.mxu0 %v206
    %1809 = vmatprep.subr.mxu0 %v211
    %1810 = vmatpush1.msra.mxu0 %v210
    %1811 = vmatprep.subr.mxu0 %v215
    %1812 = vmatpush1.msra.mxu0 %v214
    %1813 = vmatprep.subr.mxu0 %v219
    %1814 = vmatpush1.msra.mxu0 %v218
    %1815 = vmatprep.subr.mxu0 %v223
    %1816 = vmatpush1.msra.mxu0 %v222
    %1817 = vmatprep.subr.mxu0 %v227
    %1818 = vmatpush1.msra.mxu0 %v226
    %1819 = vmatprep.subr.mxu0 %v231
    %1820 = vmatpush1.msra.mxu0 %v230
    %1821 = vmatprep.subr.mxu0 %v235
    %1822 = vmatpush1.msra.mxu0 %v234
    %1823 = vmatprep.subr.mxu0 %v239
    %1824 = vmatpush1.msra.mxu0 %v238
    %1825 = vmatprep.subr.mxu0 %v243
    %1826 = vmatpush1.msra.mxu0 %v242
    %1827 = vmatprep.subr.mxu0 %v247
    %1828 = vmatpush1.msra.mxu0 %v246
    %1829 = vmatprep.subr.mxu0 %v251
    %1830 = vmatpush1.msra.mxu0 %v250
    %1831 = vmatprep.mubr.f32.mxu0 %v1595
    %1832 = vmatmul.mubr.f32.gmra.mrb[0].mxu0 %v1766
    %v1833 = vpop.f32.mrb[0].mxu0
    %v1834 = vadd.f32 %v259, %v1833
    %v1835 = vpop.f32.mrb[0].mxu0
    %v1836 = vadd.f32 %v263, %v1835
    %1837 = vdwg.mxu0
    %1838 = vmatprep.subr.mxu0 %v129
    %1839 = vmatpush1.msra.mxu0 %v128
    %1840 = vmatprep.subr.mxu0 %v133
    %1841 = vmatpush1.msra.mxu0 %v132
    %1842 = vmatprep.subr.mxu0 %v137
    %1843 = vmatpush1.msra.mxu0 %v136
    %1844 = vmatprep.subr.mxu0 %v141
    %1845 = vmatpush1.msra.mxu0 %v140
    %1846 = vmatprep.subr.mxu0 %v145
    %1847 = vmatpush1.msra.mxu0 %v144
    %1848 = vmatprep.subr.mxu0 %v149
    %1849 = vmatpush1.msra.mxu0 %v148
    %1850 = vmatprep.subr.mxu0 %v153
    %1851 = vmatpush1.msra.mxu0 %v152
    %1852 = vmatprep.subr.mxu0 %v157
    %1853 = vmatpush1.msra.mxu0 %v156
    %1854 = vmatprep.subr.mxu0 %v161
    %1855 = vmatpush1.msra.mxu0 %v160
    %1856 = vmatprep.subr.mxu0 %v165
    %1857 = vmatpush1.msra.mxu0 %v164
    %1858 = vmatprep.subr.mxu0 %v169
    %1859 = vmatpush1.msra.mxu0 %v168
    %1860 = vmatprep.subr.mxu0 %v173
    %1861 = vmatpush1.msra.mxu0 %v172
    %1862 = vmatprep.subr.mxu0 %v177
    %1863 = vmatpush1.msra.mxu0 %v176
    %1864 = vmatprep.subr.mxu0 %v181
    %1865 = vmatpush1.msra.mxu0 %v180
    %1866 = vmatprep.subr.mxu0 %v185
    %1867 = vmatpush1.msra.mxu0 %v184
    %1868 = vmatprep.subr.mxu0 %v189
    %1869 = vmatpush1.msra.mxu0 %v188
    %1870 = vmatprep.subr.mxu0 %v193
    %1871 = vmatpush1.msra.mxu0 %v192
    %1872 = vmatprep.subr.mxu0 %v197
    %1873 = vmatpush1.msra.mxu0 %v196
    %1874 = vmatprep.subr.mxu0 %v201
    %1875 = vmatpush1.msra.mxu0 %v200
    %1876 = vmatprep.subr.mxu0 %v205
    %1877 = vmatpush1.msra.mxu0 %v204
    %1878 = vmatprep.subr.mxu0 %v209
    %1879 = vmatpush1.msra.mxu0 %v208
    %1880 = vmatprep.subr.mxu0 %v213
    %1881 = vmatpush1.msra.mxu0 %v212
    %1882 = vmatprep.subr.mxu0 %v217
    %1883 = vmatpush1.msra.mxu0 %v216
    %1884 = vmatprep.subr.mxu0 %v221
    %1885 = vmatpush1.msra.mxu0 %v220
    %1886 = vmatprep.subr.mxu0 %v225
    %1887 = vmatpush1.msra.mxu0 %v224
    %1888 = vmatprep.subr.mxu0 %v229
    %1889 = vmatpush1.msra.mxu0 %v228
    %1890 = vmatprep.subr.mxu0 %v233
    %1891 = vmatpush1.msra.mxu0 %v232
    %1892 = vmatprep.subr.mxu0 %v237
    %1893 = vmatpush1.msra.mxu0 %v236
    %1894 = vmatprep.subr.mxu0 %v241
    %1895 = vmatpush1.msra.mxu0 %v240
    %1896 = vmatprep.subr.mxu0 %v245
    %1897 = vmatpush1.msra.mxu0 %v244
    %1898 = vmatprep.subr.mxu0 %v249
    %1899 = vmatpush1.msra.mxu0 %v248
    %1900 = vmatprep.subr.mxu0 %v253
    %1901 = vmatpush1.msra.mxu0 %v252
    %1902 = vmatprep.mubr.f32.mxu0 %v1595
    %1903 = vmatmul.mubr.f32.gmra.mrb[0].mxu0 %v1766
    %v1904 = vpop.f32.mrb[0].mxu0
    %v1905 = vadd.f32 %v267, %v1904
    %v1906 = vpop.f32.mrb[0].mxu0
    %v1907 = vadd.f32 %v271, %v1906
    %1908 = vdwg.mxu0
    %v1909 = vmul.f32 %v1834, 0.5
    %v1910 = vtanh.pop %v1909
    %v1911 = vmul.f32 %v1910, 0.5
    %v1912 = vadd.f32 %v1911, 0.5
    %v1913 = vmul.f32 %v1836, 0.5
    %v1914 = vtanh.pop %v1913
    %v1915 = vmul.f32 %v1914, 0.5
    %v1916 = vadd.f32 %v1915, 0.5
    %v1917 = vtanh.pop %v1905
    %v1918 = vmul.f32 %v1907, 0.5
    %v1919 = vtanh.pop %v1918
    %v1920 = vmul.f32 %v1919, 0.5
    %v1921 = vadd.f32 %v1920, 0.5
    %v1922 = vmul.f32 %v1916, %v1593
    %v1923 = vmul.f32 %v1912, %v1917
    %v1924 = vadd.f32 %v1922, %v1923
    %v1925 = vtanh.pop %v1924
    %v1926 = vmul.f32 %v1921, %v1925
    %s1927 = scalar_lea.vmem [#allocation8], 32
    %1928 = vst [vmem:[%s1927] sm:$0xff] %v1926
    %s1929 = scalar_lea.vmem [#allocation2], 160
    %v1930 = vld [vmem:[%s1929] sm:$0xff]
    %v1931 = vld [vmem:[%s1929 + $0x8] sm:$0xff]
    %v1932 = vld [vmem:[%s1929 + $0x10] sm:$0xff]
    %v1933 = vld [vmem:[%s1929 + $0x18] sm:$0xff]
    %1934 = vmatprep.subr.mxu0 %v63
    %1935 = vmatpush1.msra.mxu0 %v62
    %1936 = vmatprep.subr.mxu0 %v67
    %1937 = vmatpush1.msra.mxu0 %v66
    %1938 = vmatprep.subr.mxu0 %v71
    %1939 = vmatpush1.msra.mxu0 %v70
    %1940 = vmatprep.subr.mxu0 %v75
    %1941 = vmatpush1.msra.mxu0 %v74
    %1942 = vmatprep.subr.mxu0 %v79
    %1943 = vmatpush1.msra.mxu0 %v78
    %1944 = vmatprep.subr.mxu0 %v83
    %1945 = vmatpush1.msra.mxu0 %v82
    %1946 = vmatprep.subr.mxu0 %v87
    %1947 = vmatpush1.msra.mxu0 %v86
    %1948 = vmatprep.subr.mxu0 %v91
    %1949 = vmatpush1.msra.mxu0 %v90
    %1950 = vmatprep.subr.mxu0 %v95
    %1951 = vmatpush1.msra.mxu0 %v94
    %1952 = vmatprep.subr.mxu0 %v99
    %1953 = vmatpush1.msra.mxu0 %v98
    %1954 = vmatprep.subr.mxu0 %v103
    %1955 = vmatpush1.msra.mxu0 %v102
    %1956 = vmatprep.subr.mxu0 %v107
    %1957 = vmatpush1.msra.mxu0 %v106
    %1958 = vmatprep.subr.mxu0 %v111
    %1959 = vmatpush1.msra.mxu0 %v110
    %1960 = vmatprep.subr.mxu0 %v115
    %1961 = vmatpush1.msra.mxu0 %v114
    %1962 = vmatprep.subr.mxu0 %v119
    %1963 = vmatpush1.msra.mxu0 %v118
    %1964 = vmatprep.subr.mxu0 %v123
    %1965 = vmatpush1.msra.mxu0 %v122
    %1966 = vmatprep.subr.mxu0 0.0
    %1967 = vmatpush1.msra.mxu0 0.0
    %1968 = vmatprep.subr.mxu0 0.0
    %1969 = vmatpush1.msra.mxu0 0.0
    %1970 = vmatprep.subr.mxu0 0.0
    %1971 = vmatpush1.msra.mxu0 0.0
    %1972 = vmatprep.subr.mxu0 0.0
    %1973 = vmatpush1.msra.mxu0 0.0
    %1974 = vmatprep.subr.mxu0 0.0
    %1975 = vmatpush1.msra.mxu0 0.0
    %1976 = vmatprep.subr.mxu0 0.0
    %1977 = vmatpush1.msra.mxu0 0.0
    %1978 = vmatprep.subr.mxu0 0.0
    %1979 = vmatpush1.msra.mxu0 0.0
    %1980 = vmatprep.subr.mxu0 0.0
    %1981 = vmatpush1.msra.mxu0 0.0
    %1982 = vmatprep.subr.mxu0 0.0
    %1983 = vmatpush1.msra.mxu0 0.0
    %1984 = vmatprep.subr.mxu0 0.0
    %1985 = vmatpush1.msra.mxu0 0.0
    %1986 = vmatprep.subr.mxu0 0.0
    %1987 = vmatpush1.msra.mxu0 0.0
    %1988 = vmatprep.subr.mxu0 0.0
    %1989 = vmatpush1.msra.mxu0 0.0
    %1990 = vmatprep.subr.mxu0 0.0
    %1991 = vmatpush1.msra.mxu0 0.0
    %1992 = vmatprep.subr.mxu0 0.0
    %1993 = vmatpush1.msra.mxu0 0.0
    %1994 = vmatprep.subr.mxu0 0.0
    %1995 = vmatpush1.msra.mxu0 0.0
    %1996 = vmatprep.subr.mxu0 0.0
    %1997 = vmatpush1.msra.mxu0 0.0
    %1998 = vmatprep.mubr.f32.mxu0 0.0
    %1999 = vmatmul.mubr.f32.gmra.mrb[0].mxu0 %v1766
    %v2000 = vpop.f32.mrb[0].mxu0
    %v2001 = vadd.f32 0.0, %v2000
    %v2002 = vpop.f32.mrb[0].mxu0
    %v2003 = vadd.f32 0.0, %v2002
    %2004 = vdwg.mxu0
    %2005 = vmatprep.subr.mxu0 %v65
    %2006 = vmatpush1.msra.mxu0 %v64
    %2007 = vmatprep.subr.mxu0 %v69
    %2008 = vmatpush1.msra.mxu0 %v68
    %2009 = vmatprep.subr.mxu0 %v73
    %2010 = vmatpush1.msra.mxu0 %v72
    %2011 = vmatprep.subr.mxu0 %v77
    %2012 = vmatpush1.msra.mxu0 %v76
    %2013 = vmatprep.subr.mxu0 %v81
    %2014 = vmatpush1.msra.mxu0 %v80
    %2015 = vmatprep.subr.mxu0 %v85
    %2016 = vmatpush1.msra.mxu0 %v84
    %2017 = vmatprep.subr.mxu0 %v89
    %2018 = vmatpush1.msra.mxu0 %v88
    %2019 = vmatprep.subr.mxu0 %v93
    %2020 = vmatpush1.msra.mxu0 %v92
    %2021 = vmatprep.subr.mxu0 %v97
    %2022 = vmatpush1.msra.mxu0 %v96
    %2023 = vmatprep.subr.mxu0 %v101
    %2024 = vmatpush1.msra.mxu0 %v100
    %2025 = vmatprep.subr.mxu0 %v105
    %2026 = vmatpush1.msra.mxu0 %v104
    %2027 = vmatprep.subr.mxu0 %v109
    %2028 = vmatpush1.msra.mxu0 %v108
    %2029 = vmatprep.subr.mxu0 %v113
    %2030 = vmatpush1.msra.mxu0 %v112
    %2031 = vmatprep.subr.mxu0 %v117
    %2032 = vmatpush1.msra.mxu0 %v116
    %2033 = vmatprep.subr.mxu0 %v121
    %2034 = vmatpush1.msra.mxu0 %v120
    %2035 = vmatprep.subr.mxu0 %v125
    %2036 = vmatpush1.msra.mxu0 %v124
    %2037 = vmatprep.subr.mxu0 0.0
    %2038 = vmatpush1.msra.mxu0 0.0
    %2039 = vmatprep.subr.mxu0 0.0
    %2040 = vmatpush1.msra.mxu0 0.0
    %2041 = vmatprep.subr.mxu0 0.0
    %2042 = vmatpush1.msra.mxu0 0.0
    %2043 = vmatprep.subr.mxu0 0.0
    %2044 = vmatpush1.msra.mxu0 0.0
    %2045 = vmatprep.subr.mxu0 0.0
    %2046 = vmatpush1.msra.mxu0 0.0
    %2047 = vmatprep.subr.mxu0 0.0
    %2048 = vmatpush1.msra.mxu0 0.0
    %2049 = vmatprep.subr.mxu0 0.0
    %2050 = vmatpush1.msra.mxu0 0.0
    %2051 = vmatprep.subr.mxu0 0.0
    %2052 = vmatpush1.msra.mxu0 0.0
    %2053 = vmatprep.subr.mxu0 0.0
    %2054 = vmatpush1.msra.mxu0 0.0
    %2055 = vmatprep.subr.mxu0 0.0
    %2056 = vmatpush1.msra.mxu0 0.0
    %2057 = vmatprep.subr.mxu0 0.0
    %2058 = vmatpush1.msra.mxu0 0.0
    %2059 = vmatprep.subr.mxu0 0.0
    %2060 = vmatpush1.msra.mxu0 0.0
    %2061 = vmatprep.subr.mxu0 0.0
    %2062 = vmatpush1.msra.mxu0 0.0
    %2063 = vmatprep.subr.mxu0 0.0
    %2064 = vmatpush1.msra.mxu0 0.0
    %2065 = vmatprep.subr.mxu0 0.0
    %2066 = vmatpush1.msra.mxu0 0.0
    %2067 = vmatprep.subr.mxu0 0.0
    %2068 = vmatpush1.msra.mxu0 0.0
    %2069 = vmatprep.mubr.f32.mxu0 0.0
    %2070 = vmatmul.mubr.f32.gmra.mrb[0].mxu0 %v1766
    %v2071 = vpop.f32.mrb[0].mxu0
    %v2072 = vadd.f32 0.0, %v2071
    %v2073 = vpop.f32.mrb[0].mxu0
    %v2074 = vadd.f32 0.0, %v2073
    %2075 = vdwg.mxu0
    %v2076 = vadd.f32 %v1930, %v2001
    %v2077 = vadd.f32 %v1931, %v2003
    %v2078 = vadd.f32 %v1932, %v2072
    %v2079 = vadd.f32 %v1933, %v2074
    %v2080 = vmul.f32 %v2076, 0.5
    %v2081 = vtanh.pop %v2080
    %v2082 = vmul.f32 %v2081, 0.5
    %v2083 = vadd.f32 %v2082, 0.5
    %v2084 = vmul.f32 %v2077, 0.5
    %v2085 = vtanh.pop %v2084
    %v2086 = vmul.f32 %v2085, 0.5
    %v2087 = vadd.f32 %v2086, 0.5
    %v2088 = vtanh.pop %v2078
    %v2089 = vmul.f32 %v2079, 0.5
    %v2090 = vtanh.pop %v2089
    %v2091 = vmul.f32 %v2090, 0.5
    %v2092 = vadd.f32 %v2091, 0.5
    %v2093 = vmul.f32 %v2087, %v1764
    %v2094 = vmul.f32 %v2083, %v2088
    %v2095 = vadd.f32 %v2093, %v2094
    %v2096 = vtanh.pop %v2095
    %v2097 = vmul.f32 %v2092, %v2096
    %2098 = vmatprep.subr.mxu0 %v127
    %2099 = vmatpush1.msra.mxu0 %v126
    %2100 = vmatprep.subr.mxu0 %v131
    %2101 = vmatpush1.msra.mxu0 %v130
    %2102 = vmatprep.subr.mxu0 %v135
    %2103 = vmatpush1.msra.mxu0 %v134
    %2104 = vmatprep.subr.mxu0 %v139
    %2105 = vmatpush1.msra.mxu0 %v138
    %2106 = vmatprep.subr.mxu0 %v143
    %2107 = vmatpush1.msra.mxu0 %v142
    %2108 = vmatprep.subr.mxu0 %v147
    %2109 = vmatpush1.msra.mxu0 %v146
    %2110 = vmatprep.subr.mxu0 %v151
    %2111 = vmatpush1.msra.mxu0 %v150
    %2112 = vmatprep.subr.mxu0 %v155
    %2113 = vmatpush1.msra.mxu0 %v154
    %2114 = vmatprep.subr.mxu0 %v159
    %2115 = vmatpush1.msra.mxu0 %v158
    %2116 = vmatprep.subr.mxu0 %v163
    %2117 = vmatpush1.msra.mxu0 %v162
    %2118 = vmatprep.subr.mxu0 %v167
    %2119 = vmatpush1.msra.mxu0 %v166
    %2120 = vmatprep.subr.mxu0 %v171
    %2121 = vmatpush1.msra.mxu0 %v170
    %2122 = vmatprep.subr.mxu0 %v175
    %2123 = vmatpush1.msra.mxu0 %v174
    %2124 = vmatprep.subr.mxu0 %v179
    %2125 = vmatpush1.msra.mxu0 %v178
    %2126 = vmatprep.subr.mxu0 %v183
    %2127 = vmatpush1.msra.mxu0 %v182
    %2128 = vmatprep.subr.mxu0 %v187
    %2129 = vmatpush1.msra.mxu0 %v186
    %2130 = vmatprep.subr.mxu0 %v191
    %2131 = vmatpush1.msra.mxu0 %v190
    %2132 = vmatprep.subr.mxu0 %v195
    %2133 = vmatpush1.msra.mxu0 %v194
    %2134 = vmatprep.subr.mxu0 %v199
    %2135 = vmatpush1.msra.mxu0 %v198
    %2136 = vmatprep.subr.mxu0 %v203
    %2137 = vmatpush1.msra.mxu0 %v202
    %2138 = vmatprep.subr.mxu0 %v207
    %2139 = vmatpush1.msra.mxu0 %v206
    %2140 = vmatprep.subr.mxu0 %v211
    %2141 = vmatpush1.msra.mxu0 %v210
    %2142 = vmatprep.subr.mxu0 %v215
    %2143 = vmatpush1.msra.mxu0 %v214
    %2144 = vmatprep.subr.mxu0 %v219
    %2145 = vmatpush1.msra.mxu0 %v218
    %2146 = vmatprep.subr.mxu0 %v223
    %2147 = vmatpush1.msra.mxu0 %v222
    %2148 = vmatprep.subr.mxu0 %v227
    %2149 = vmatpush1.msra.mxu0 %v226
    %2150 = vmatprep.subr.mxu0 %v231
    %2151 = vmatpush1.msra.mxu0 %v230
    %2152 = vmatprep.subr.mxu0 %v235
    %2153 = vmatpush1.msra.mxu0 %v234
    %2154 = vmatprep.subr.mxu0 %v239
    %2155 = vmatpush1.msra.mxu0 %v238
    %2156 = vmatprep.subr.mxu0 %v243
    %2157 = vmatpush1.msra.mxu0 %v242
    %2158 = vmatprep.subr.mxu0 %v247
    %2159 = vmatpush1.msra.mxu0 %v246
    %2160 = vmatprep.subr.mxu0 %v251
    %2161 = vmatpush1.msra.mxu0 %v250
    %2162 = vmatprep.mubr.f32.mxu0 %v1926
    %2163 = vmatmul.mubr.f32.gmra.mrb[0].mxu0 %v2097
    %v2164 = vpop.f32.mrb[0].mxu0
    %v2165 = vadd.f32 %v259, %v2164
    %v2166 = vpop.f32.mrb[0].mxu0
    %v2167 = vadd.f32 %v263, %v2166
    %2168 = vdwg.mxu0
    %2169 = vmatprep.subr.mxu0 %v129
    %2170 = vmatpush1.msra.mxu0 %v128
    %2171 = vmatprep.subr.mxu0 %v133
    %2172 = vmatpush1.msra.mxu0 %v132
    %2173 = vmatprep.subr.mxu0 %v137
    %2174 = vmatpush1.msra.mxu0 %v136
    %2175 = vmatprep.subr.mxu0 %v141
    %2176 = vmatpush1.msra.mxu0 %v140
    %2177 = vmatprep.subr.mxu0 %v145
    %2178 = vmatpush1.msra.mxu0 %v144
    %2179 = vmatprep.subr.mxu0 %v149
    %2180 = vmatpush1.msra.mxu0 %v148
    %2181 = vmatprep.subr.mxu0 %v153
    %2182 = vmatpush1.msra.mxu0 %v152
    %2183 = vmatprep.subr.mxu0 %v157
    %2184 = vmatpush1.msra.mxu0 %v156
    %2185 = vmatprep.subr.mxu0 %v161
    %2186 = vmatpush1.msra.mxu0 %v160
    %2187 = vmatprep.subr.mxu0 %v165
    %2188 = vmatpush1.msra.mxu0 %v164
    %2189 = vmatprep.subr.mxu0 %v169
    %2190 = vmatpush1.msra.mxu0 %v168
    %2191 = vmatprep.subr.mxu0 %v173
    %2192 = vmatpush1.msra.mxu0 %v172
    %2193 = vmatprep.subr.mxu0 %v177
    %2194 = vmatpush1.msra.mxu0 %v176
    %2195 = vmatprep.subr.mxu0 %v181
    %2196 = vmatpush1.msra.mxu0 %v180
    %2197 = vmatprep.subr.mxu0 %v185
    %2198 = vmatpush1.msra.mxu0 %v184
    %2199 = vmatprep.subr.mxu0 %v189
    %2200 = vmatpush1.msra.mxu0 %v188
    %2201 = vmatprep.subr.mxu0 %v193
    %2202 = vmatpush1.msra.mxu0 %v192
    %2203 = vmatprep.subr.mxu0 %v197
    %2204 = vmatpush1.msra.mxu0 %v196
    %2205 = vmatprep.subr.mxu0 %v201
    %2206 = vmatpush1.msra.mxu0 %v200
    %2207 = vmatprep.subr.mxu0 %v205
    %2208 = vmatpush1.msra.mxu0 %v204
    %2209 = vmatprep.subr.mxu0 %v209
    %2210 = vmatpush1.msra.mxu0 %v208
    %2211 = vmatprep.subr.mxu0 %v213
    %2212 = vmatpush1.msra.mxu0 %v212
    %2213 = vmatprep.subr.mxu0 %v217
    %2214 = vmatpush1.msra.mxu0 %v216
    %2215 = vmatprep.subr.mxu0 %v221
    %2216 = vmatpush1.msra.mxu0 %v220
    %2217 = vmatprep.subr.mxu0 %v225
    %2218 = vmatpush1.msra.mxu0 %v224
    %2219 = vmatprep.subr.mxu0 %v229
    %2220 = vmatpush1.msra.mxu0 %v228
    %2221 = vmatprep.subr.mxu0 %v233
    %2222 = vmatpush1.msra.mxu0 %v232
    %2223 = vmatprep.subr.mxu0 %v237
    %2224 = vmatpush1.msra.mxu0 %v236
    %2225 = vmatprep.subr.mxu0 %v241
    %2226 = vmatpush1.msra.mxu0 %v240
    %2227 = vmatprep.subr.mxu0 %v245
    %2228 = vmatpush1.msra.mxu0 %v244
    %2229 = vmatprep.subr.mxu0 %v249
    %2230 = vmatpush1.msra.mxu0 %v248
    %2231 = vmatprep.subr.mxu0 %v253
    %2232 = vmatpush1.msra.mxu0 %v252
    %2233 = vmatprep.mubr.f32.mxu0 %v1926
    %2234 = vmatmul.mubr.f32.gmra.mrb[0].mxu0 %v2097
    %v2235 = vpop.f32.mrb[0].mxu0
    %v2236 = vadd.f32 %v267, %v2235
    %v2237 = vpop.f32.mrb[0].mxu0
    %v2238 = vadd.f32 %v271, %v2237
    %2239 = vdwg.mxu0
    %v2240 = vmul.f32 %v2165, 0.5
    %v2241 = vtanh.pop %v2240
    %v2242 = vmul.f32 %v2241, 0.5
    %v2243 = vadd.f32 %v2242, 0.5
    %v2244 = vmul.f32 %v2167, 0.5
    %v2245 = vtanh.pop %v2244
    %v2246 = vmul.f32 %v2245, 0.5
    %v2247 = vadd.f32 %v2246, 0.5
    %v2248 = vtanh.pop %v2236
    %v2249 = vmul.f32 %v2238, 0.5
    %v2250 = vtanh.pop %v2249
    %v2251 = vmul.f32 %v2250, 0.5
    %v2252 = vadd.f32 %v2251, 0.5
    %v2253 = vmul.f32 %v2247, %v1924
    %v2254 = vmul.f32 %v2243, %v2248
    %v2255 = vadd.f32 %v2253, %v2254
    %v2256 = vtanh.pop %v2255
    %v2257 = vmul.f32 %v2252, %v2256
    %s2258 = scalar_lea.vmem [#allocation8], 40
    %2259 = vst [vmem:[%s2258] sm:$0xff] %v2257
    %s2260 = scalar_lea.vmem [#allocation2], 192
    %v2261 = vld [vmem:[%s2260] sm:$0xff]
    %v2262 = vld [vmem:[%s2260 + $0x8] sm:$0xff]
    %v2263 = vld [vmem:[%s2260 + $0x10] sm:$0xff]
    %v2264 = vld [vmem:[%s2260 + $0x18] sm:$0xff]
    %2265 = vmatprep.subr.mxu0 %v63
    %2266 = vmatpush1.msra.mxu0 %v62
    %2267 = vmatprep.subr.mxu0 %v67
    %2268 = vmatpush1.msra.mxu0 %v66
    %2269 = vmatprep.subr.mxu0 %v71
    %2270 = vmatpush1.msra.mxu0 %v70
    %2271 = vmatprep.subr.mxu0 %v75
    %2272 = vmatpush1.msra.mxu0 %v74
    %2273 = vmatprep.subr.mxu0 %v79
    %2274 = vmatpush1.msra.mxu0 %v78
    %2275 = vmatprep.subr.mxu0 %v83
    %2276 = vmatpush1.msra.mxu0 %v82
    %2277 = vmatprep.subr.mxu0 %v87
    %2278 = vmatpush1.msra.mxu0 %v86
    %2279 = vmatprep.subr.mxu0 %v91
    %2280 = vmatpush1.msra.mxu0 %v90
    %2281 = vmatprep.subr.mxu0 %v95
    %2282 = vmatpush1.msra.mxu0 %v94
    %2283 = vmatprep.subr.mxu0 %v99
    %2284 = vmatpush1.msra.mxu0 %v98
    %2285 = vmatprep.subr.mxu0 %v103
    %2286 = vmatpush1.msra.mxu0 %v102
    %2287 = vmatprep.subr.mxu0 %v107
    %2288 = vmatpush1.msra.mxu0 %v106
    %2289 = vmatprep.subr.mxu0 %v111
    %2290 = vmatpush1.msra.mxu0 %v110
    %2291 = vmatprep.subr.mxu0 %v115
    %2292 = vmatpush1.msra.mxu0 %v114
    %2293 = vmatprep.subr.mxu0 %v119
    %2294 = vmatpush1.msra.mxu0 %v118
    %2295 = vmatprep.subr.mxu0 %v123
    %2296 = vmatpush1.msra.mxu0 %v122
    %2297 = vmatprep.subr.mxu0 0.0
    %2298 = vmatpush1.msra.mxu0 0.0
    %2299 = vmatprep.subr.mxu0 0.0
    %2300 = vmatpush1.msra.mxu0 0.0
    %2301 = vmatprep.subr.mxu0 0.0
    %2302 = vmatpush1.msra.mxu0 0.0
    %2303 = vmatprep.subr.mxu0 0.0
    %2304 = vmatpush1.msra.mxu0 0.0
    %2305 = vmatprep.subr.mxu0 0.0
    %2306 = vmatpush1.msra.mxu0 0.0
    %2307 = vmatprep.subr.mxu0 0.0
    %2308 = vmatpush1.msra.mxu0 0.0
    %2309 = vmatprep.subr.mxu0 0.0
    %2310 = vmatpush1.msra.mxu0 0.0
    %2311 = vmatprep.subr.mxu0 0.0
    %2312 = vmatpush1.msra.mxu0 0.0
    %2313 = vmatprep.subr.mxu0 0.0
    %2314 = vmatpush1.msra.mxu0 0.0
    %2315 = vmatprep.subr.mxu0 0.0
    %2316 = vmatpush1.msra.mxu0 0.0
    %2317 = vmatprep.subr.mxu0 0.0
    %2318 = vmatpush1.msra.mxu0 0.0
    %2319 = vmatprep.subr.mxu0 0.0
    %2320 = vmatpush1.msra.mxu0 0.0
    %2321 = vmatprep.subr.mxu0 0.0
    %2322 = vmatpush1.msra.mxu0 0.0
    %2323 = vmatprep.subr.mxu0 0.0
    %2324 = vmatpush1.msra.mxu0 0.0
    %2325 = vmatprep.subr.mxu0 0.0
    %2326 = vmatpush1.msra.mxu0 0.0
    %2327 = vmatprep.subr.mxu0 0.0
    %2328 = vmatpush1.msra.mxu0 0.0
    %2329 = vmatprep.mubr.f32.mxu0 0.0
    %2330 = vmatmul.mubr.f32.gmra.mrb[0].mxu0 %v2097
    %v2331 = vpop.f32.mrb[0].mxu0
    %v2332 = vadd.f32 0.0, %v2331
    %v2333 = vpop.f32.mrb[0].mxu0
    %v2334 = vadd.f32 0.0, %v2333
    %2335 = vdwg.mxu0
    %2336 = vmatprep.subr.mxu0 %v65
    %2337 = vmatpush1.msra.mxu0 %v64
    %2338 = vmatprep.subr.mxu0 %v69
    %2339 = vmatpush1.msra.mxu0 %v68
    %2340 = vmatprep.subr.mxu0 %v73
    %2341 = vmatpush1.msra.mxu0 %v72
    %2342 = vmatprep.subr.mxu0 %v77
    %2343 = vmatpush1.msra.mxu0 %v76
    %2344 = vmatprep.subr.mxu0 %v81
    %2345 = vmatpush1.msra.mxu0 %v80
    %2346 = vmatprep.subr.mxu0 %v85
    %2347 = vmatpush1.msra.mxu0 %v84
    %2348 = vmatprep.subr.mxu0 %v89
    %2349 = vmatpush1.msra.mxu0 %v88
    %2350 = vmatprep.subr.mxu0 %v93
    %2351 = vmatpush1.msra.mxu0 %v92
    %2352 = vmatprep.subr.mxu0 %v97
    %2353 = vmatpush1.msra.mxu0 %v96
    %2354 = vmatprep.subr.mxu0 %v101
    %2355 = vmatpush1.msra.mxu0 %v100
    %2356 = vmatprep.subr.mxu0 %v105
    %2357 = vmatpush1.msra.mxu0 %v104
    %2358 = vmatprep.subr.mxu0 %v109
    %2359 = vmatpush1.msra.mxu0 %v108
    %2360 = vmatprep.subr.mxu0 %v113
    %2361 = vmatpush1.msra.mxu0 %v112
    %2362 = vmatprep.subr.mxu0 %v117
    %2363 = vmatpush1.msra.mxu0 %v116
    %2364 = vmatprep.subr.mxu0 %v121
    %2365 = vmatpush1.msra.mxu0 %v120
    %2366 = vmatprep.subr.mxu0 %v125
    %2367 = vmatpush1.msra.mxu0 %v124
    %2368 = vmatprep.subr.mxu0 0.0
    %2369 = vmatpush1.msra.mxu0 0.0
    %2370 = vmatprep.subr.mxu0 0.0
    %2371 = vmatpush1.msra.mxu0 0.0
    %2372 = vmatprep.subr.mxu0 0.0
    %2373 = vmatpush1.msra.mxu0 0.0
    %2374 = vmatprep.subr.mxu0 0.0
    %2375 = vmatpush1.msra.mxu0 0.0
    %2376 = vmatprep.subr.mxu0 0.0
    %2377 = vmatpush1.msra.mxu0 0.0
    %2378 = vmatprep.subr.mxu0 0.0
    %2379 = vmatpush1.msra.mxu0 0.0
    %2380 = vmatprep.subr.mxu0 0.0
    %2381 = vmatpush1.msra.mxu0 0.0
    %2382 = vmatprep.subr.mxu0 0.0
    %2383 = vmatpush1.msra.mxu0 0.0
    %2384 = vmatprep.subr.mxu0 0.0
    %2385 = vmatpush1.msra.mxu0 0.0
    %2386 = vmatprep.subr.mxu0 0.0
    %2387 = vmatpush1.msra.mxu0 0.0
    %2388 = vmatprep.subr.mxu0 0.0
    %2389 = vmatpush1.msra.mxu0 0.0
    %2390 = vmatprep.subr.mxu0 0.0
    %2391 = vmatpush1.msra.mxu0 0.0
    %2392 = vmatprep.subr.mxu0 0.0
    %2393 = vmatpush1.msra.mxu0 0.0
    %2394 = vmatprep.subr.mxu0 0.0
    %2395 = vmatpush1.msra.mxu0 0.0
    %2396 = vmatprep.subr.mxu0 0.0
    %2397 = vmatpush1.msra.mxu0 0.0
    %2398 = vmatprep.subr.mxu0 0.0
    %2399 = vmatpush1.msra.mxu0 0.0
    %2400 = vmatprep.mubr.f32.mxu0 0.0
    %2401 = vmatmul.mubr.f32.gmra.mrb[0].mxu0 %v2097
    %v2402 = vpop.f32.mrb[0].mxu0
    %v2403 = vadd.f32 0.0, %v2402
    %v2404 = vpop.f32.mrb[0].mxu0
    %v2405 = vadd.f32 0.0, %v2404
    %2406 = vdwg.mxu0
    %v2407 = vadd.f32 %v2261, %v2332
    %v2408 = vadd.f32 %v2262, %v2334
    %v2409 = vadd.f32 %v2263, %v2403
    %v2410 = vadd.f32 %v2264, %v2405
    %v2411 = vmul.f32 %v2407, 0.5
    %v2412 = vtanh.pop %v2411
    %v2413 = vmul.f32 %v2412, 0.5
    %v2414 = vadd.f32 %v2413, 0.5
    %v2415 = vmul.f32 %v2408, 0.5
    %v2416 = vtanh.pop %v2415
    %v2417 = vmul.f32 %v2416, 0.5
    %v2418 = vadd.f32 %v2417, 0.5
    %v2419 = vtanh.pop %v2409
    %v2420 = vmul.f32 %v2410, 0.5
    %v2421 = vtanh.pop %v2420
    %v2422 = vmul.f32 %v2421, 0.5
    %v2423 = vadd.f32 %v2422, 0.5
    %v2424 = vmul.f32 %v2418, %v2095
    %v2425 = vmul.f32 %v2414, %v2419
    %v2426 = vadd.f32 %v2424, %v2425
    %v2427 = vtanh.pop %v2426
    %v2428 = vmul.f32 %v2423, %v2427
    %2429 = vmatprep.subr.mxu0 %v127
    %2430 = vmatpush1.msra.mxu0 %v126
    %2431 = vmatprep.subr.mxu0 %v131
    %2432 = vmatpush1.msra.mxu0 %v130
    %2433 = vmatprep.subr.mxu0 %v135
    %2434 = vmatpush1.msra.mxu0 %v134
    %2435 = vmatprep.subr.mxu0 %v139
    %2436 = vmatpush1.msra.mxu0 %v138
    %2437 = vmatprep.subr.mxu0 %v143
    %2438 = vmatpush1.msra.mxu0 %v142
    %2439 = vmatprep.subr.mxu0 %v147
    %2440 = vmatpush1.msra.mxu0 %v146
    %2441 = vmatprep.subr.mxu0 %v151
    %2442 = vmatpush1.msra.mxu0 %v150
    %2443 = vmatprep.subr.mxu0 %v155
    %2444 = vmatpush1.msra.mxu0 %v154
    %2445 = vmatprep.subr.mxu0 %v159
    %2446 = vmatpush1.msra.mxu0 %v158
    %2447 = vmatprep.subr.mxu0 %v163
    %2448 = vmatpush1.msra.mxu0 %v162
    %2449 = vmatprep.subr.mxu0 %v167
    %2450 = vmatpush1.msra.mxu0 %v166
    %2451 = vmatprep.subr.mxu0 %v171
    %2452 = vmatpush1.msra.mxu0 %v170
    %2453 = vmatprep.subr.mxu0 %v175
    %2454 = vmatpush1.msra.mxu0 %v174
    %2455 = vmatprep.subr.mxu0 %v179
    %2456 = vmatpush1.msra.mxu0 %v178
    %2457 = vmatprep.subr.mxu0 %v183
    %2458 = vmatpush1.msra.mxu0 %v182
    %2459 = vmatprep.subr.mxu0 %v187
    %2460 = vmatpush1.msra.mxu0 %v186
    %2461 = vmatprep.subr.mxu0 %v191
    %2462 = vmatpush1.msra.mxu0 %v190
    %2463 = vmatprep.subr.mxu0 %v195
    %2464 = vmatpush1.msra.mxu0 %v194
    %2465 = vmatprep.subr.mxu0 %v199
    %2466 = vmatpush1.msra.mxu0 %v198
    %2467 = vmatprep.subr.mxu0 %v203
    %2468 = vmatpush1.msra.mxu0 %v202
    %2469 = vmatprep.subr.mxu0 %v207
    %2470 = vmatpush1.msra.mxu0 %v206
    %2471 = vmatprep.subr.mxu0 %v211
    %2472 = vmatpush1.msra.mxu0 %v210
    %2473 = vmatprep.subr.mxu0 %v215
    %2474 = vmatpush1.msra.mxu0 %v214
    %2475 = vmatprep.subr.mxu0 %v219
    %2476 = vmatpush1.msra.mxu0 %v218
    %2477 = vmatprep.subr.mxu0 %v223
    %2478 = vmatpush1.msra.mxu0 %v222
    %2479 = vmatprep.subr.mxu0 %v227
    %2480 = vmatpush1.msra.mxu0 %v226
    %2481 = vmatprep.subr.mxu0 %v231
    %2482 = vmatpush1.msra.mxu0 %v230
    %2483 = vmatprep.subr.mxu0 %v235
    %2484 = vmatpush1.msra.mxu0 %v234
    %2485 = vmatprep.subr.mxu0 %v239
    %2486 = vmatpush1.msra.mxu0 %v238
    %2487 = vmatprep.subr.mxu0 %v243
    %2488 = vmatpush1.msra.mxu0 %v242
    %2489 = vmatprep.subr.mxu0 %v247
    %2490 = vmatpush1.msra.mxu0 %v246
    %2491 = vmatprep.subr.mxu0 %v251
    %2492 = vmatpush1.msra.mxu0 %v250
    %2493 = vmatprep.mubr.f32.mxu0 %v2257
    %2494 = vmatmul.mubr.f32.gmra.mrb[0].mxu0 %v2428
    %v2495 = vpop.f32.mrb[0].mxu0
    %v2496 = vadd.f32 %v259, %v2495
    %v2497 = vpop.f32.mrb[0].mxu0
    %v2498 = vadd.f32 %v263, %v2497
    %2499 = vdwg.mxu0
    %2500 = vmatprep.subr.mxu0 %v129
    %2501 = vmatpush1.msra.mxu0 %v128
    %2502 = vmatprep.subr.mxu0 %v133
    %2503 = vmatpush1.msra.mxu0 %v132
    %2504 = vmatprep.subr.mxu0 %v137
    %2505 = vmatpush1.msra.mxu0 %v136
    %2506 = vmatprep.subr.mxu0 %v141
    %2507 = vmatpush1.msra.mxu0 %v140
    %2508 = vmatprep.subr.mxu0 %v145
    %2509 = vmatpush1.msra.mxu0 %v144
    %2510 = vmatprep.subr.mxu0 %v149
    %2511 = vmatpush1.msra.mxu0 %v148
    %2512 = vmatprep.subr.mxu0 %v153
    %2513 = vmatpush1.msra.mxu0 %v152
    %2514 = vmatprep.subr.mxu0 %v157
    %2515 = vmatpush1.msra.mxu0 %v156
    %2516 = vmatprep.subr.mxu0 %v161
    %2517 = vmatpush1.msra.mxu0 %v160
    %2518 = vmatprep.subr.mxu0 %v165
    %2519 = vmatpush1.msra.mxu0 %v164
    %2520 = vmatprep.subr.mxu0 %v169
    %2521 = vmatpush1.msra.mxu0 %v168
    %2522 = vmatprep.subr.mxu0 %v173
    %2523 = vmatpush1.msra.mxu0 %v172
    %2524 = vmatprep.subr.mxu0 %v177
    %2525 = vmatpush1.msra.mxu0 %v176
    %2526 = vmatprep.subr.mxu0 %v181
    %2527 = vmatpush1.msra.mxu0 %v180
    %2528 = vmatprep.subr.mxu0 %v185
    %2529 = vmatpush1.msra.mxu0 %v184
    %2530 = vmatprep.subr.mxu0 %v189
    %2531 = vmatpush1.msra.mxu0 %v188
    %2532 = vmatprep.subr.mxu0 %v193
    %2533 = vmatpush1.msra.mxu0 %v192
    %2534 = vmatprep.subr.mxu0 %v197
    %2535 = vmatpush1.msra.mxu0 %v196
    %2536 = vmatprep.subr.mxu0 %v201
    %2537 = vmatpush1.msra.mxu0 %v200
    %2538 = vmatprep.subr.mxu0 %v205
    %2539 = vmatpush1.msra.mxu0 %v204
    %2540 = vmatprep.subr.mxu0 %v209
    %2541 = vmatpush1.msra.mxu0 %v208
    %2542 = vmatprep.subr.mxu0 %v213
    %2543 = vmatpush1.msra.mxu0 %v212
    %2544 = vmatprep.subr.mxu0 %v217
    %2545 = vmatpush1.msra.mxu0 %v216
    %2546 = vmatprep.subr.mxu0 %v221
    %2547 = vmatpush1.msra.mxu0 %v220
    %2548 = vmatprep.subr.mxu0 %v225
    %2549 = vmatpush1.msra.mxu0 %v224
    %2550 = vmatprep.subr.mxu0 %v229
    %2551 = vmatpush1.msra.mxu0 %v228
    %2552 = vmatprep.subr.mxu0 %v233
    %2553 = vmatpush1.msra.mxu0 %v232
    %2554 = vmatprep.subr.mxu0 %v237
    %2555 = vmatpush1.msra.mxu0 %v236
    %2556 = vmatprep.subr.mxu0 %v241
    %2557 = vmatpush1.msra.mxu0 %v240
    %2558 = vmatprep.subr.mxu0 %v245
    %2559 = vmatpush1.msra.mxu0 %v244
    %2560 = vmatprep.subr.mxu0 %v249
    %2561 = vmatpush1.msra.mxu0 %v248
    %2562 = vmatprep.subr.mxu0 %v253
    %2563 = vmatpush1.msra.mxu0 %v252
    %2564 = vmatprep.mubr.f32.mxu0 %v2257
    %2565 = vmatmul.mubr.f32.gmra.mrb[0].mxu0 %v2428
    %v2566 = vpop.f32.mrb[0].mxu0
    %v2567 = vadd.f32 %v267, %v2566
    %v2568 = vpop.f32.mrb[0].mxu0
    %v2569 = vadd.f32 %v271, %v2568
    %2570 = vdwg.mxu0
    %v2571 = vmul.f32 %v2496, 0.5
    %v2572 = vtanh.pop %v2571
    %v2573 = vmul.f32 %v2572, 0.5
    %v2574 = vadd.f32 %v2573, 0.5
    %v2575 = vmul.f32 %v2498, 0.5
    %v2576 = vtanh.pop %v2575
    %v2577 = vmul.f32 %v2576, 0.5
    %v2578 = vadd.f32 %v2577, 0.5
    %v2579 = vtanh.pop %v2567
    %v2580 = vmul.f32 %v2569, 0.5
    %v2581 = vtanh.pop %v2580
    %v2582 = vmul.f32 %v2581, 0.5
    %v2583 = vadd.f32 %v2582, 0.5
    %v2584 = vmul.f32 %v2578, %v2255
    %v2585 = vmul.f32 %v2574, %v2579
    %v2586 = vadd.f32 %v2584, %v2585
    %v2587 = vtanh.pop %v2586
    %v2588 = vmul.f32 %v2583, %v2587
    %s2589 = scalar_lea.vmem [#allocation8], 48
    %2590 = vst [vmem:[%s2589] sm:$0xff] %v2588
    %s2591 = scalar_lea.vmem [#allocation2], 224
    %v2592 = vld [vmem:[%s2591] sm:$0xff]
    %v2593 = vld [vmem:[%s2591 + $0x8] sm:$0xff]
    %v2594 = vld [vmem:[%s2591 + $0x10] sm:$0xff]
    %v2595 = vld [vmem:[%s2591 + $0x18] sm:$0xff]
    %2596 = vmatprep.subr.mxu0 %v63
    %2597 = vmatpush1.msra.mxu0 %v62
    %2598 = vmatprep.subr.mxu0 %v67
    %2599 = vmatpush1.msra.mxu0 %v66
    %2600 = vmatprep.subr.mxu0 %v71
    %2601 = vmatpush1.msra.mxu0 %v70
    %2602 = vmatprep.subr.mxu0 %v75
    %2603 = vmatpush1.msra.mxu0 %v74
    %2604 = vmatprep.subr.mxu0 %v79
    %2605 = vmatpush1.msra.mxu0 %v78
    %2606 = vmatprep.subr.mxu0 %v83
    %2607 = vmatpush1.msra.mxu0 %v82
    %2608 = vmatprep.subr.mxu0 %v87
    %2609 = vmatpush1.msra.mxu0 %v86
    %2610 = vmatprep.subr.mxu0 %v91
    %2611 = vmatpush1.msra.mxu0 %v90
    %2612 = vmatprep.subr.mxu0 %v95
    %2613 = vmatpush1.msra.mxu0 %v94
    %2614 = vmatprep.subr.mxu0 %v99
    %2615 = vmatpush1.msra.mxu0 %v98
    %2616 = vmatprep.subr.mxu0 %v103
    %2617 = vmatpush1.msra.mxu0 %v102
    %2618 = vmatprep.subr.mxu0 %v107
    %2619 = vmatpush1.msra.mxu0 %v106
    %2620 = vmatprep.subr.mxu0 %v111
    %2621 = vmatpush1.msra.mxu0 %v110
    %2622 = vmatprep.subr.mxu0 %v115
    %2623 = vmatpush1.msra.mxu0 %v114
    %2624 = vmatprep.subr.mxu0 %v119
    %2625 = vmatpush1.msra.mxu0 %v118
    %2626 = vmatprep.subr.mxu0 %v123
    %2627 = vmatpush1.msra.mxu0 %v122
    %2628 = vmatprep.subr.mxu0 0.0
    %2629 = vmatpush1.msra.mxu0 0.0
    %2630 = vmatprep.subr.mxu0 0.0
    %2631 = vmatpush1.msra.mxu0 0.0
    %2632 = vmatprep.subr.mxu0 0.0
    %2633 = vmatpush1.msra.mxu0 0.0
    %2634 = vmatprep.subr.mxu0 0.0
    %2635 = vmatpush1.msra.mxu0 0.0
    %2636 = vmatprep.subr.mxu0 0.0
    %2637 = vmatpush1.msra.mxu0 0.0
    %2638 = vmatprep.subr.mxu0 0.0
    %2639 = vmatpush1.msra.mxu0 0.0
    %2640 = vmatprep.subr.mxu0 0.0
    %2641 = vmatpush1.msra.mxu0 0.0
    %2642 = vmatprep.subr.mxu0 0.0
    %2643 = vmatpush1.msra.mxu0 0.0
    %2644 = vmatprep.subr.mxu0 0.0
    %2645 = vmatpush1.msra.mxu0 0.0
    %2646 = vmatprep.subr.mxu0 0.0
    %2647 = vmatpush1.msra.mxu0 0.0
    %2648 = vmatprep.subr.mxu0 0.0
    %2649 = vmatpush1.msra.mxu0 0.0
    %2650 = vmatprep.subr.mxu0 0.0
    %2651 = vmatpush1.msra.mxu0 0.0
    %2652 = vmatprep.subr.mxu0 0.0
    %2653 = vmatpush1.msra.mxu0 0.0
    %2654 = vmatprep.subr.mxu0 0.0
    %2655 = vmatpush1.msra.mxu0 0.0
    %2656 = vmatprep.subr.mxu0 0.0
    %2657 = vmatpush1.msra.mxu0 0.0
    %2658 = vmatprep.subr.mxu0 0.0
    %2659 = vmatpush1.msra.mxu0 0.0
    %2660 = vmatprep.mubr.f32.mxu0 0.0
    %2661 = vmatmul.mubr.f32.gmra.mrb[0].mxu0 %v2428
    %v2662 = vpop.f32.mrb[0].mxu0
    %v2663 = vadd.f32 0.0, %v2662
    %v2664 = vpop.f32.mrb[0].mxu0
    %v2665 = vadd.f32 0.0, %v2664
    %2666 = vdwg.mxu0
    %2667 = vmatprep.subr.mxu0 %v65
    %2668 = vmatpush1.msra.mxu0 %v64
    %2669 = vmatprep.subr.mxu0 %v69
    %2670 = vmatpush1.msra.mxu0 %v68
    %2671 = vmatprep.subr.mxu0 %v73
    %2672 = vmatpush1.msra.mxu0 %v72
    %2673 = vmatprep.subr.mxu0 %v77
    %2674 = vmatpush1.msra.mxu0 %v76
    %2675 = vmatprep.subr.mxu0 %v81
    %2676 = vmatpush1.msra.mxu0 %v80
    %2677 = vmatprep.subr.mxu0 %v85
    %2678 = vmatpush1.msra.mxu0 %v84
    %2679 = vmatprep.subr.mxu0 %v89
    %2680 = vmatpush1.msra.mxu0 %v88
    %2681 = vmatprep.subr.mxu0 %v93
    %2682 = vmatpush1.msra.mxu0 %v92
    %2683 = vmatprep.subr.mxu0 %v97
    %2684 = vmatpush1.msra.mxu0 %v96
    %2685 = vmatprep.subr.mxu0 %v101
    %2686 = vmatpush1.msra.mxu0 %v100
    %2687 = vmatprep.subr.mxu0 %v105
    %2688 = vmatpush1.msra.mxu0 %v104
    %2689 = vmatprep.subr.mxu0 %v109
    %2690 = vmatpush1.msra.mxu0 %v108
    %2691 = vmatprep.subr.mxu0 %v113
    %2692 = vmatpush1.msra.mxu0 %v112
    %2693 = vmatprep.subr.mxu0 %v117
    %2694 = vmatpush1.msra.mxu0 %v116
    %2695 = vmatprep.subr.mxu0 %v121
    %2696 = vmatpush1.msra.mxu0 %v120
    %2697 = vmatprep.subr.mxu0 %v125
    %2698 = vmatpush1.msra.mxu0 %v124
    %2699 = vmatprep.subr.mxu0 0.0
    %2700 = vmatpush1.msra.mxu0 0.0
    %2701 = vmatprep.subr.mxu0 0.0
    %2702 = vmatpush1.msra.mxu0 0.0
    %2703 = vmatprep.subr.mxu0 0.0
    %2704 = vmatpush1.msra.mxu0 0.0
    %2705 = vmatprep.subr.mxu0 0.0
    %2706 = vmatpush1.msra.mxu0 0.0
    %2707 = vmatprep.subr.mxu0 0.0
    %2708 = vmatpush1.msra.mxu0 0.0
    %2709 = vmatprep.subr.mxu0 0.0
    %2710 = vmatpush1.msra.mxu0 0.0
    %2711 = vmatprep.subr.mxu0 0.0
    %2712 = vmatpush1.msra.mxu0 0.0
    %2713 = vmatprep.subr.mxu0 0.0
    %2714 = vmatpush1.msra.mxu0 0.0
    %2715 = vmatprep.subr.mxu0 0.0
    %2716 = vmatpush1.msra.mxu0 0.0
    %2717 = vmatprep.subr.mxu0 0.0
    %2718 = vmatpush1.msra.mxu0 0.0
    %2719 = vmatprep.subr.mxu0 0.0
    %2720 = vmatpush1.msra.mxu0 0.0
    %2721 = vmatprep.subr.mxu0 0.0
    %2722 = vmatpush1.msra.mxu0 0.0
    %2723 = vmatprep.subr.mxu0 0.0
    %2724 = vmatpush1.msra.mxu0 0.0
    %2725 = vmatprep.subr.mxu0 0.0
    %2726 = vmatpush1.msra.mxu0 0.0
    %2727 = vmatprep.subr.mxu0 0.0
    %2728 = vmatpush1.msra.mxu0 0.0
    %2729 = vmatprep.subr.mxu0 0.0
    %2730 = vmatpush1.msra.mxu0 0.0
    %2731 = vmatprep.mubr.f32.mxu0 0.0
    %2732 = vmatmul.mubr.f32.gmra.mrb[0].mxu0 %v2428
    %v2733 = vpop.f32.mrb[0].mxu0
    %v2734 = vadd.f32 0.0, %v2733
    %v2735 = vpop.f32.mrb[0].mxu0
    %v2736 = vadd.f32 0.0, %v2735
    %2737 = vdwg.mxu0
    %v2738 = vadd.f32 %v2592, %v2663
    %v2739 = vadd.f32 %v2593, %v2665
    %v2740 = vadd.f32 %v2594, %v2734
    %v2741 = vadd.f32 %v2595, %v2736
    %v2742 = vmul.f32 %v2738, 0.5
    %v2743 = vtanh.pop %v2742
    %v2744 = vmul.f32 %v2743, 0.5
    %v2745 = vadd.f32 %v2744, 0.5
    %v2746 = vmul.f32 %v2739, 0.5
    %v2747 = vtanh.pop %v2746
    %v2748 = vmul.f32 %v2747, 0.5
    %v2749 = vadd.f32 %v2748, 0.5
    %v2750 = vtanh.pop %v2740
    %v2751 = vmul.f32 %v2741, 0.5
    %v2752 = vtanh.pop %v2751
    %v2753 = vmul.f32 %v2752, 0.5
    %v2754 = vadd.f32 %v2753, 0.5
    %v2755 = vmul.f32 %v2749, %v2426
    %v2756 = vmul.f32 %v2745, %v2750
    %v2757 = vadd.f32 %v2755, %v2756
    %v2758 = vtanh.pop %v2757
    %v2759 = vmul.f32 %v2754, %v2758
    %2760 = vmatprep.subr.mxu0 %v127
    %2761 = vmatpush1.msra.mxu0 %v126
    %2762 = vmatprep.subr.mxu0 %v131
    %2763 = vmatpush1.msra.mxu0 %v130
    %2764 = vmatprep.subr.mxu0 %v135
    %2765 = vmatpush1.msra.mxu0 %v134
    %2766 = vmatprep.subr.mxu0 %v139
    %2767 = vmatpush1.msra.mxu0 %v138
    %2768 = vmatprep.subr.mxu0 %v143
    %2769 = vmatpush1.msra.mxu0 %v142
    %2770 = vmatprep.subr.mxu0 %v147
    %2771 = vmatpush1.msra.mxu0 %v146
    %2772 = vmatprep.subr.mxu0 %v151
    %2773 = vmatpush1.msra.mxu0 %v150
    %2774 = vmatprep.subr.mxu0 %v155
    %2775 = vmatpush1.msra.mxu0 %v154
    %2776 = vmatprep.subr.mxu0 %v159
    %2777 = vmatpush1.msra.mxu0 %v158
    %2778 = vmatprep.subr.mxu0 %v163
    %2779 = vmatpush1.msra.mxu0 %v162
    %2780 = vmatprep.subr.mxu0 %v167
    %2781 = vmatpush1.msra.mxu0 %v166
    %2782 = vmatprep.subr.mxu0 %v171
    %2783 = vmatpush1.msra.mxu0 %v170
    %2784 = vmatprep.subr.mxu0 %v175
    %2785 = vmatpush1.msra.mxu0 %v174
    %2786 = vmatprep.subr.mxu0 %v179
    %2787 = vmatpush1.msra.mxu0 %v178
    %2788 = vmatprep.subr.mxu0 %v183
    %2789 = vmatpush1.msra.mxu0 %v182
    %2790 = vmatprep.subr.mxu0 %v187
    %2791 = vmatpush1.msra.mxu0 %v186
    %2792 = vmatprep.subr.mxu0 %v191
    %2793 = vmatpush1.msra.mxu0 %v190
    %2794 = vmatprep.subr.mxu0 %v195
    %2795 = vmatpush1.msra.mxu0 %v194
    %2796 = vmatprep.subr.mxu0 %v199
    %2797 = vmatpush1.msra.mxu0 %v198
    %2798 = vmatprep.subr.mxu0 %v203
    %2799 = vmatpush1.msra.mxu0 %v202
    %2800 = vmatprep.subr.mxu0 %v207
    %2801 = vmatpush1.msra.mxu0 %v206
    %2802 = vmatprep.subr.mxu0 %v211
    %2803 = vmatpush1.msra.mxu0 %v210
    %2804 = vmatprep.subr.mxu0 %v215
    %2805 = vmatpush1.msra.mxu0 %v214
    %2806 = vmatprep.subr.mxu0 %v219
    %2807 = vmatpush1.msra.mxu0 %v218
    %2808 = vmatprep.subr.mxu0 %v223
    %2809 = vmatpush1.msra.mxu0 %v222
    %2810 = vmatprep.subr.mxu0 %v227
    %2811 = vmatpush1.msra.mxu0 %v226
    %2812 = vmatprep.subr.mxu0 %v231
    %2813 = vmatpush1.msra.mxu0 %v230
    %2814 = vmatprep.subr.mxu0 %v235
    %2815 = vmatpush1.msra.mxu0 %v234
    %2816 = vmatprep.subr.mxu0 %v239
    %2817 = vmatpush1.msra.mxu0 %v238
    %2818 = vmatprep.subr.mxu0 %v243
    %2819 = vmatpush1.msra.mxu0 %v242
    %2820 = vmatprep.subr.mxu0 %v247
    %2821 = vmatpush1.msra.mxu0 %v246
    %2822 = vmatprep.subr.mxu0 %v251
    %2823 = vmatpush1.msra.mxu0 %v250
    %2824 = vmatprep.mubr.f32.mxu0 %v2588
    %2825 = vmatmul.mubr.f32.gmra.mrb[0].mxu0 %v2759
    %v2826 = vpop.f32.mrb[0].mxu0
    %v2827 = vadd.f32 %v259, %v2826
    %v2828 = vpop.f32.mrb[0].mxu0
    %v2829 = vadd.f32 %v263, %v2828
    %2830 = vdwg.mxu0
    %2831 = vmatprep.subr.mxu0 %v129
    %2832 = vmatpush1.msra.mxu0 %v128
    %2833 = vmatprep.subr.mxu0 %v133
    %2834 = vmatpush1.msra.mxu0 %v132
    %2835 = vmatprep.subr.mxu0 %v137
    %2836 = vmatpush1.msra.mxu0 %v136
    %2837 = vmatprep.subr.mxu0 %v141
    %2838 = vmatpush1.msra.mxu0 %v140
    %2839 = vmatprep.subr.mxu0 %v145
    %2840 = vmatpush1.msra.mxu0 %v144
    %2841 = vmatprep.subr.mxu0 %v149
    %2842 = vmatpush1.msra.mxu0 %v148
    %2843 = vmatprep.subr.mxu0 %v153
    %2844 = vmatpush1.msra.mxu0 %v152
    %2845 = vmatprep.subr.mxu0 %v157
    %2846 = vmatpush1.msra.mxu0 %v156
    %2847 = vmatprep.subr.mxu0 %v161
    %2848 = vmatpush1.msra.mxu0 %v160
    %2849 = vmatprep.subr.mxu0 %v165
    %2850 = vmatpush1.msra.mxu0 %v164
    %2851 = vmatprep.subr.mxu0 %v169
    %2852 = vmatpush1.msra.mxu0 %v168
    %2853 = vmatprep.subr.mxu0 %v173
    %2854 = vmatpush1.msra.mxu0 %v172
    %2855 = vmatprep.subr.mxu0 %v177
    %2856 = vmatpush1.msra.mxu0 %v176
    %2857 = vmatprep.subr.mxu0 %v181
    %2858 = vmatpush1.msra.mxu0 %v180
    %2859 = vmatprep.subr.mxu0 %v185
    %2860 = vmatpush1.msra.mxu0 %v184
    %2861 = vmatprep.subr.mxu0 %v189
    %2862 = vmatpush1.msra.mxu0 %v188
    %2863 = vmatprep.subr.mxu0 %v193
    %2864 = vmatpush1.msra.mxu0 %v192
    %2865 = vmatprep.subr.mxu0 %v197
    %2866 = vmatpush1.msra.mxu0 %v196
    %2867 = vmatprep.subr.mxu0 %v201
    %2868 = vmatpush1.msra.mxu0 %v200
    %2869 = vmatprep.subr.mxu0 %v205
    %2870 = vmatpush1.msra.mxu0 %v204
    %2871 = vmatprep.subr.mxu0 %v209
    %2872 = vmatpush1.msra.mxu0 %v208
    %2873 = vmatprep.subr.mxu0 %v213
    %2874 = vmatpush1.msra.mxu0 %v212
    %2875 = vmatprep.subr.mxu0 %v217
    %2876 = vmatpush1.msra.mxu0 %v216
    %2877 = vmatprep.subr.mxu0 %v221
    %2878 = vmatpush1.msra.mxu0 %v220
    %2879 = vmatprep.subr.mxu0 %v225
    %2880 = vmatpush1.msra.mxu0 %v224
    %2881 = vmatprep.subr.mxu0 %v229
    %2882 = vmatpush1.msra.mxu0 %v228
    %2883 = vmatprep.subr.mxu0 %v233
    %2884 = vmatpush1.msra.mxu0 %v232
    %2885 = vmatprep.subr.mxu0 %v237
    %2886 = vmatpush1.msra.mxu0 %v236
    %2887 = vmatprep.subr.mxu0 %v241
    %2888 = vmatpush1.msra.mxu0 %v240
    %2889 = vmatprep.subr.mxu0 %v245
    %2890 = vmatpush1.msra.mxu0 %v244
    %2891 = vmatprep.subr.mxu0 %v249
    %2892 = vmatpush1.msra.mxu0 %v248
    %2893 = vmatprep.subr.mxu0 %v253
    %2894 = vmatpush1.msra.mxu0 %v252
    %2895 = vmatprep.mubr.f32.mxu0 %v2588
    %2896 = vmatmul.mubr.f32.gmra.mrb[0].mxu0 %v2759
    %v2897 = vpop.f32.mrb[0].mxu0
    %v2898 = vadd.f32 %v267, %v2897
    %v2899 = vpop.f32.mrb[0].mxu0
    %v2900 = vadd.f32 %v271, %v2899
    %2901 = vdwg.mxu0
    %v2902 = vmul.f32 %v2827, 0.5
    %v2903 = vtanh.pop %v2902
    %v2904 = vmul.f32 %v2903, 0.5
    %v2905 = vadd.f32 %v2904, 0.5
    %v2906 = vmul.f32 %v2829, 0.5
    %v2907 = vtanh.pop %v2906
    %v2908 = vmul.f32 %v2907, 0.5
    %v2909 = vadd.f32 %v2908, 0.5
    %v2910 = vtanh.pop %v2898
    %v2911 = vmul.f32 %v2900, 0.5
    %v2912 = vtanh.pop %v2911
    %v2913 = vmul.f32 %v2912, 0.5
    %v2914 = vadd.f32 %v2913, 0.5
    %v2915 = vmul.f32 %v2909, %v2586
    %v2916 = vmul.f32 %v2905, %v2910
    %v2917 = vadd.f32 %v2915, %v2916
    %v2918 = vtanh.pop %v2917
    %v2919 = vmul.f32 %v2914, %v2918
    %s2920 = scalar_lea.vmem [#allocation8], 56
    %2921 = vst [vmem:[%s2920] sm:$0xff] %v2919
    %2922 = vst [vmem:[#allocation9] sm:$0xff] %v2919
    // Predicated region
    $region30: #{tpu_custom_call.1} parent=1 // pred_check
      _
    $region31: #{tpu_custom_call.1} parent=1 // pred_check_branch
      %2924 = sbr.rel (0) target = $region33
    $region32: #{tpu_custom_call.1} parent=1 // pred_region
      %s2926 = ssub.s32 1024, 1024
      %2927 = vsyncadd [#allocation4], %s2926
      %s2928 = sshll.u32 [#allocation8], 4
      %s2929 = int_to_ptr.vmem [resolvable:$true] %s2928
      %2934 = dma.vmem_to_hbm [thread:$0]  %s2929, 1024, %s4, [#allocation4], 128, 128, 8
    $region33: #{tpu_custom_call.1} parent=1 // pred_fallthru
      _
    // Predicated region
    $region34: #{tpu_custom_call.1} parent=1 // pred_check
      _
    $region35: #{tpu_custom_call.1} parent=1 // pred_check_branch
      %2936 = sbr.rel (0) target = $region37
    $region36: #{tpu_custom_call.1} parent=1 // pred_region
      %s2938 = ssub.s32 128, 128
      %2939 = vsyncadd [#allocation10], %s2938
      %s2941 = sshll.u32 [#allocation9], 4
      %s2942 = int_to_ptr.vmem [resolvable:$true] %s2941
      %2944 = dma.vmem_to_hbm [thread:$0]  %s2942, 128, %s5, [#allocation10]
    $region37: #{tpu_custom_call.1} parent=1 // pred_fallthru
      _
    // Predicated region
    $region38: #{tpu_custom_call.1} parent=1 // pred_check
      _
    $region39: #{tpu_custom_call.1} parent=1 // pred_check_branch
      %2946 = sbr.rel (0) target = $region41
    $region40: #{tpu_custom_call.1} parent=1 // pred_region
      %2947 = dma.done [#allocation4], 1024
    $region41: #{tpu_custom_call.1} parent=1 // pred_fallthru
      _
    // Predicated region
    $region42: #{tpu_custom_call.1} parent=1 // pred_check
      _
    $region43: #{tpu_custom_call.1} parent=1 // pred_check_branch
      %2949 = sbr.rel (0) target = $region45
    $region44: #{tpu_custom_call.1} parent=1 // pred_region
      %2950 = dma.done [#allocation10], 128
    $region45: #{tpu_custom_call.1} parent=1 // pred_fallthru
      _
    %2951 = vsyncpa [#allocation3], 1
    %2952 = vsyncpa [#allocation6], 1
    %2953 = vsyncpa [#allocation4], 1
    %2954 = vsyncpa [#allocation10], 1

</llo_original>
